<compile_context>
chip_gen: v5e
topology: v5e:2x2
jax: 0.10.0
libtpu: 0.0.40
codegen_flags: <defaults>
</compile_context>

<pallas_src>
import functools

import jax
import jax.numpy as jnp
from jax.experimental import pallas as pl
from jax.experimental.pallas import tpu as pltpu

EPS = 1e-5

# Per-tile VMEM working-set budget used by the tile chooser. 40 MiB is v7x-safe
# (64 MiB physical); v5e/v6e (128 MiB) could use ~2x larger tiles.
_TILE_VMEM_BUDGET = 40 * 1024 * 1024
# Below this Cin, keep the concatenated K=9*Cin matmul (fills the MXU K dim)
# and keep MXU operands in f32 (mem-bound regime, exact numerics).
_WIDE_CIN = 32


# --------------------------------------------------------------------------
# Tile / VMEM sizing helpers
# --------------------------------------------------------------------------
def _conv_tile_vmem_bytes(th, w, cin, cout, use_concat, mxu_dtype):
    f32 = 4
    mxu_b = jnp.dtype(mxu_dtype).itemsize
    inp = 2 * (th * w * cin + 2 * w * cin) * f32          # dbl-buffered tile + halo rows
    out = 2 * (th * w * cout + 2 * cout) * f32            # dbl-buffered y + stats
    wgt = 2 * 9 * cin * cout * (f32 if use_concat else mxu_b)
    pad = (th + 2) * (w + 2) * cin * f32                  # halo scratch
    work = th * w * (9 * cin if use_concat else cin) * mxu_b + th * w * cout * f32
    return inp + out + wgt + pad + work


def _pick_tile_rows(h, w, cin, cout, use_concat, mxu_dtype, max_rows=None,
                    budget=_TILE_VMEM_BUDGET):
    """Largest TH dividing H with TH == H or (TH % 8 == 0 and TH*W % 128 == 0)."""
    cands = {h}
    for t in range(8, h + 1, 8):
        if h % t == 0 and (t * w) % 128 == 0:
            cands.add(t)
    cands = sorted(cands, reverse=True)
    if max_rows is not None:
        capped = [t for t in cands if t <= max_rows]
        cands = capped or [cands[-1]]
    for t in cands:
        if _conv_tile_vmem_bytes(t, w, cin, cout, use_concat, mxu_dtype) <= budget:
            return t
    return cands[-1]


def _vmem_limit_bytes(est_bytes):
    # 32 MiB floor (v5e's scoped default is only 16 MiB); 64 MiB cap so the
    # request never exceeds v7x physical VMEM.
    return int(min(max(32 * 1024 * 1024, 2 * est_bytes), 64 * 1024 * 1024))


# --------------------------------------------------------------------------
# Kernels
# --------------------------------------------------------------------------
def _conv_block_kernel(*refs, TH, W, Cin, Cout, prologue, use_concat, mxu_dtype):
    """[BN+ReLU prologue] -> 3x3 conv -> bias -> fused BN partial stats.

    refs (prologue=False): x_cur, x_top, x_bot, w, b, y, psum, psq, xp_scratch
    refs (prologue=True) : ss, x_cur, x_top, x_bot, w, b, y, psum, psq, xp_scratch
    """
    if prologue:
        (ss_ref, xc_ref, xt_ref, xb_ref, w_ref, b_ref,
         y_ref, sum_ref, sq_ref, xp_ref) = refs
    else:
        (xc_ref, xt_ref, xb_ref, w_ref, b_ref,
         y_ref, sum_ref, sq_ref, xp_ref) = refs

    h = pl.program_id(1)
    nh = pl.num_programs(1)

    cur = xc_ref[0]          # (TH, W, Cin)
    top = xt_ref[0, 0]       # (W, Cin)   row h*TH-1 (clamped)
    bot = xb_ref[0, 0]       # (W, Cin)   row (h+1)*TH (clamped)

    if prologue:
        # Previous block's BatchNorm+ReLU folded to scale/shift, applied (in f32)
        # to the freshly DMA'd tile AND its halo rows: saves a full HBM round
        # trip of the intermediate activation.
        scale = ss_ref[0:1, :]
        shift = ss_ref[1:2, :]
        cur = jnp.maximum(cur * scale + shift, 0.0)
        top = jnp.maximum(top * scale + shift, 0.0)
        bot = jnp.maximum(bot * scale + shift, 0.0)

    # Zero-pad halo rows that fall outside the image.
    top = jnp.where(h > 0, top, 0.0)
    bot = jnp.where(h < nh - 1, bot, 0.0)

    # Build the padded tile.  Only the 1-pixel border strips are zeroed (the
    # interior is fully overwritten), and they are written every grid step so
    # this stays correct when the grid axes are megacore-parallel.
    zcol = jnp.zeros((TH + 2, 1, Cin), jnp.float32)
    xp_ref[:, 0:1, :] = zcol
    xp_ref[:, W + 1:W + 2, :] = zcol
    xp_ref[0:1, 1:W + 1, :] = top.reshape(1, W, Cin)
    xp_ref[TH + 1:TH + 2, 1:W + 1, :] = bot.reshape(1, W, Cin)
    xp_ref[1:TH + 1, 1:W + 1, :] = cur

    if use_concat:
        # Tiny-Cin path: one big-K matmul (K = 9*Cin) fills the MXU contraction dim.
        taps = [xp_ref[dy:dy + TH, dx:dx + W, :]
                for dy in range(3) for dx in range(3)]
        patch = jnp.concatenate(taps, axis=-1).reshape(TH * W, 9 * Cin)
        acc = jnp.dot(patch.astype(mxu_dtype), w_ref[...].astype(mxu_dtype),
                      preferred_element_type=jnp.float32)        # (TH*W, Cout)
    else:
        # Wide-Cin path: nine accumulating K=Cin matmuls (no lane-axis concat,
        # no 9x materialized patch).  f32 accumulation, bf16 MXU operands.
        acc = jnp.zeros((TH * W, Cout), jnp.float32)
        t = 0
        for dy in range(3):
            for dx in range(3):
                tap = xp_ref[dy:dy + TH, dx:dx + W, :].reshape(TH * W, Cin)
                acc = acc + jnp.dot(tap.astype(mxu_dtype), w_ref[t],
                                    preferred_element_type=jnp.float32)
                t += 1

    acc = acc + b_ref[...]                                       # (1, Cout) bias, f32
    y_ref[0] = acc.reshape(TH, W, Cout)

    # Fused BN statistics as per-grid-step partial sums (reduced in the wrapper),
    # so there is no shared accumulator and both grid axes stay parallel-safe.
    sum_ref[0] = jnp.sum(acc, axis=0, keepdims=True)             # (1, Cout)
    sq_ref[0] = jnp.sum(acc * acc, axis=0, keepdims=True)        # (1, Cout)


def _bn_relu_nchw_kernel(y_ref, ss_ref, o_ref, *, TH, W, C):
    # y_ref: (1, TH, W, C); ss_ref: (2, C); o_ref: (1, C, TH*W)  (NCHW, lane-dense)
    y = y_ref[0]
    z = jnp.maximum(y * ss_ref[0:1, :] + ss_ref[1:2, :], 0.0)    # (TH, W, C)
    # Collapse (TH, W) (cheap) then a 2-D transpose: the store is (C, TH*W),
    # i.e. lane-dense (TH*W multiple of 128) NCHW output -- no wrapper transpose.
    o_ref[0] = z.reshape(TH * W, C).T


# --------------------------------------------------------------------------
# Pallas wrappers
# --------------------------------------------------------------------------
def conv_block(x_nhwc, w_oihw, bias, ss_prev=None, *, max_tile_rows=None):
    """Conv3x3(+bias) with optional fused BN+ReLU prologue and fused BN stats.

    Returns (y, mean, var) with y of shape (N, H, W, Cout) f32.
    """
    N, H, W, Cin = x_nhwc.shape
    Cout = w_oihw.shape[0]

    use_concat = Cin < _WIDE_CIN
    mxu_dtype = jnp.float32 if Cin < _WIDE_CIN else jnp.bfloat16
    TH = _pick_tile_rows(H, W, Cin, Cout, use_concat, mxu_dtype, max_tile_rows)
    nH = H // TH

    # (Cout, Cin, 3, 3) -> (3, 3, Cin, Cout) (HWIO, im2col tap order)
    w_hwio = jnp.transpose(w_oihw, (2, 3, 1, 0))
    if use_concat:
        w_op = w_hwio.reshape(9 * Cin, Cout).astype(jnp.float32)
        w_spec = pl.BlockSpec((9 * Cin, Cout), lambda n, h: (0, 0))
    else:
        w_op = w_hwio.reshape(9, Cin, Cout).astype(mxu_dtype)   # bf16 weights in HBM
        w_spec = pl.BlockSpec((9, Cin, Cout), lambda n, h: (0, 0, 0))
    b2 = bias.reshape(1, Cout).astype(jnp.float32)

    cur_spec = pl.BlockSpec((1, TH, W, Cin), lambda n, h: (n, h, 0, 0))
    # Halo rows: block of 1 along H -> index map returns the row index directly.
    top_spec = pl.BlockSpec((1, 1, W, Cin),
                            lambda n, h: (n, jnp.maximum(h * TH - 1, 0), 0, 0))
    bot_spec = pl.BlockSpec((1, 1, W, Cin),
                            lambda n, h: (n, jnp.minimum((h + 1) * TH, H - 1), 0, 0))

    in_specs = [cur_spec, top_spec, bot_spec, w_spec,
                pl.BlockSpec((1, Cout), lambda n, h: (0, 0))]
    operands = [x_nhwc, x_nhwc, x_nhwc, w_op, b2]
    prologue = ss_prev is not None
    if prologue:
        in_specs = [pl.BlockSpec((2, Cin), lambda n, h: (0, 0))] + in_specs
        operands = [ss_prev] + operands

    kernel = functools.partial(
        _conv_block_kernel, TH=TH, W=W, Cin=Cin, Cout=Cout,
        prologue=prologue, use_concat=use_concat, mxu_dtype=mxu_dtype)

    flops = 2 * N * H * W * 9 * Cin * Cout
    bytes_accessed = 4 * (N * H * W * (Cin + Cout)
                          + 9 * Cin * Cout + Cout + 2 * N * nH * Cout)
    est = _conv_tile_vmem_bytes(TH, W, Cin, Cout, use_concat, mxu_dtype)

    y, psum, psq = pl.pallas_call(
        kernel,
        out_shape=(jax.ShapeDtypeStruct((N, H, W, Cout), jnp.float32),
                   jax.ShapeDtypeStruct((N * nH, 1, Cout), jnp.float32),
                   jax.ShapeDtypeStruct((N * nH, 1, Cout), jnp.float32)),
        grid=(N, nH),
        in_specs=in_specs,
        out_specs=(pl.BlockSpec((1, TH, W, Cout), lambda n, h: (n, h, 0, 0)),
                   pl.BlockSpec((1, 1, Cout), lambda n, h: (n * nH + h, 0, 0)),
                   pl.BlockSpec((1, 1, Cout), lambda n, h: (n * nH + h, 0, 0))),
        scratch_shapes=[pltpu.VMEM((TH + 2, W + 2, Cin), jnp.float32)],
        compiler_params=pltpu.CompilerParams(
            dimension_semantics=("parallel", "parallel"),
            vmem_limit_bytes=_vmem_limit_bytes(est)),
        cost_estimate=pl.CostEstimate(flops=flops, transcendentals=0,
                                      bytes_accessed=bytes_accessed),
    )(*operands)

    cnt = float(N * H * W)
    mean = jnp.sum(psum, axis=(0, 1)) / cnt
    # Biased variance (what PyTorch BN uses to normalize). Single-pass
    # E[y^2]-E[y]^2 with the partial sums kept strictly in f32.
    var = jnp.sum(psq, axis=(0, 1)) / cnt - mean * mean
    return y, mean, var


def bn_relu_to_nchw(y_nhwc, ss, *, max_tile_rows=None):
    """Final-block BN+ReLU; writes NCHW directly (lane-dense (C, TH*W) stores)."""
    N, H, W, C = y_nhwc.shape
    TH = _pick_tile_rows(H, W, C, C, False, jnp.float32, max_tile_rows)
    nH = H // TH

    out = pl.pallas_call(
        functools.partial(_bn_relu_nchw_kernel, TH=TH, W=W, C=C),
        out_shape=jax.ShapeDtypeStruct((N, C, H * W), jnp.float32),
        grid=(N, nH),
        in_specs=[pl.BlockSpec((1, TH, W, C), lambda n, h: (n, h, 0, 0)),
                  pl.BlockSpec((2, C), lambda n, h: (0, 0))],
        out_specs=pl.BlockSpec((1, C, TH * W), lambda n, h: (n, 0, h)),
        compiler_params=pltpu.CompilerParams(
            dimension_semantics=("parallel", "parallel"),
            vmem_limit_bytes=32 * 1024 * 1024),
        cost_estimate=pl.CostEstimate(flops=3 * N * H * W * C, transcendentals=0,
                                      bytes_accessed=8 * N * H * W * C),
    )(y_nhwc, ss)
    return out.reshape(N, C, H, W)      # free metadata reshape (already NCHW order)


def _scale_shift(mean, var, gamma, beta):
    # Fold BN into y*scale + shift: scale = g/sqrt(var+eps), shift = b - mean*scale
    scale = gamma * jax.lax.rsqrt(jnp.maximum(var, 0.0) + EPS)
    shift = beta - mean * scale
    return jnp.stack([scale, shift], axis=0)    # (2, C)


@functools.partial(jax.jit, static_argnames=("max_tile_rows",))
def double_conv(x_nchw, params, max_tile_rows=None):
    # params: ((w1, b1, gamma1, beta1), (w2, b2, gamma2, beta2))
    (w1, b1, g1, t1), (w2, b2, g2, t2) = params

    # TODO(synk): fold this read-side NCHW->NHWC transpose into block 1's kernel.
    x = jnp.transpose(x_nchw, (0, 2, 3, 1))                       # NCHW -> NHWC

    # block 1: conv + fused batch stats
    y1, mean1, var1 = conv_block(x, w1, b1, max_tile_rows=max_tile_rows)
    ss1 = _scale_shift(mean1, var1, g1, t1)

    # block 2: block-1 BN+ReLU fused as the conv input prologue (incl. halo rows)
    y2, mean2, var2 = conv_block(y1, w2, b2, ss_prev=ss1,
                                 max_tile_rows=max_tile_rows)
    ss2 = _scale_shift(mean2, var2, g2, t2)

    # final BN+ReLU, written straight to NCHW (no trailing jnp.transpose)
    return bn_relu_to_nchw(y2, ss2, max_tile_rows=max_tile_rows)


# --------------------------------------------------------------------------
# Plain-JAX reference (for correctness check)
# --------------------------------------------------------------------------
def ref_double_conv(x_nchw, params):
    x = jnp.transpose(x_nchw, (0, 2, 3, 1))
    for (w, b, g, bt) in params:
        w_hwio = jnp.transpose(w, (2, 3, 1, 0))
        y = jax.lax.conv_general_dilated(
            x, w_hwio, window_strides=(1, 1), padding="SAME",
            dimension_numbers=("NHWC", "HWIO", "NHWC")) + b
        mean = jnp.mean(y, axis=(0, 1, 2))
        var = jnp.mean((y - mean) ** 2, axis=(0, 1, 2))
        yhat = (y - mean) * jax.lax.rsqrt(var + EPS)
        x = jnp.maximum(yhat * g + bt, 0.0)
    return jnp.transpose(x, (0, 3, 1, 2))


# --------------------------------------------------------------------------
# Main
# --------------------------------------------------------------------------
if __name__ == "__main__":
    def make_params(key, cin, cout):
        ks = jax.random.split(key, 8)

        def conv_bn(kw, kb, kg, kt, ci, co):
            return (0.2 * jax.random.normal(kw, (co, ci, 3, 3), jnp.float32),
                    0.1 * jax.random.normal(kb, (co,), jnp.float32),
                    1.0 + 0.1 * jax.random.normal(kg, (co,), jnp.float32),
                    0.1 * jax.random.normal(kt, (co,), jnp.float32))

        return (conv_bn(ks[0], ks[1], ks[2], ks[3], cin, cout),
                conv_bn(ks[4], ks[5], ks[6], ks[7], cout, cout))

    key = jax.random.PRNGKey(0)
    k1, k2, k3, k4 = jax.random.split(key, 4)

    # Config A (spec-sized): tiny channels -> f32 MXU + big-K im2col path.
    # max_tile_rows=8 forces two H-tiles so the halo exchange is exercised.
    N, Cin, Cout, H, W = 2, 4, 8, 16, 16
    x = jax.random.normal(k1, (N, Cin, H, W), jnp.float32)
    params = make_params(k2, Cin, Cout)
    out = jax.block_until_ready(double_conv(x, params, max_tile_rows=8))
    ref = jax.block_until_ready(ref_double_conv(x, params))
    assert out.shape == (N, Cout, H, W), out.shape
    assert jnp.allclose(out, ref, rtol=1e-3, atol=1e-3), float(
        jnp.max(jnp.abs(out - ref)))

    # Config B: wide channels -> per-tap accumulating matmuls with bf16 MXU
    # operands (f32 accumulation / stats); looser tolerance for the bf16 cast.
    Nb, Cb, Hb, Wb = 2, 64, 16, 16
    xb = jax.random.normal(k3, (Nb, Cb, Hb, Wb), jnp.float32)
    params_b = make_params(k4, Cb, Cb)
    out_b = jax.block_until_ready(double_conv(xb, params_b, max_tile_rows=8))
    ref_b = jax.block_until_ready(ref_double_conv(xb, params_b))
    assert out_b.shape == (Nb, Cb, Hb, Wb), out_b.shape
    assert jnp.allclose(out_b, ref_b, rtol=5e-2, atol=5e-2), float(
        jnp.max(jnp.abs(out_b - ref_b)))

    print("KERNEL_OK")
</pallas_src>

<mosaic_0001>
module attributes {stable_mosaic.version = 11 : i64} {
  func.func @_conv_block_kernel(%arg0: i32, %arg1: i32, %arg2: memref<1x8x16x4xf32, #tpu.memory_space<vmem>>, %arg3: memref<1x1x16x4xf32, #tpu.memory_space<vmem>>, %arg4: memref<1x1x16x4xf32, #tpu.memory_space<vmem>>, %arg5: memref<36x8xf32, #tpu.memory_space<vmem>>, %arg6: memref<1x8xf32, #tpu.memory_space<vmem>>, %arg7: memref<1x8x16x8xf32, #tpu.memory_space<vmem>>, %arg8: memref<1x1x8xf32, #tpu.memory_space<vmem>>, %arg9: memref<1x1x8xf32, #tpu.memory_space<vmem>>, %arg10: memref<10x18x4xf32, #tpu.memory_space<vmem>>) attributes {dimension_semantics = [#tpu.dimension_semantics<parallel>, #tpu.dimension_semantics<parallel>], iteration_bounds = array<i64: 2, 2>, scalar_prefetch = 0 : i64, scratch_operands = 1 : i64, tpu.core_type = #tpu.core_type<tc>, window_params = [{transform_indices = @transform_0, window_bounds = array<i64: 1, 8, 16, 4>}, {transform_indices = @transform_1, window_bounds = array<i64: 1, 1, 16, 4>}, {transform_indices = @transform_2, window_bounds = array<i64: 1, 1, 16, 4>}, {pipeline_mode = #tpu.pipeline_mode<synchronous>, transform_indices = @transform_3, window_bounds = array<i64: 36, 8>}, {pipeline_mode = #tpu.pipeline_mode<synchronous>, transform_indices = @transform_4, window_bounds = array<i64: 1, 8>}, {transform_indices = @transform_5, window_bounds = array<i64: 1, 8, 16, 8>}, {transform_indices = @transform_6, window_bounds = array<i64: 1, 1, 8>}, {transform_indices = @transform_7, window_bounds = array<i64: 1, 1, 8>}]} {
    %c0 = arith.constant 0 : index
    %c0_0 = arith.constant 0 : index
    %c0_1 = arith.constant 0 : index
    %c0_2 = arith.constant 0 : index
    %0 = vector.load %arg2[%c0, %c0_0, %c0_1, %c0_2] : memref<1x8x16x4xf32, #tpu.memory_space<vmem>>, vector<1x8x16x4xf32>
    %1 = vector.shape_cast %0 : vector<1x8x16x4xf32> to vector<8x16x4xf32>
    %c0_3 = arith.constant 0 : index
    %c0_4 = arith.constant 0 : index
    %c0_5 = arith.constant 0 : index
    %c0_6 = arith.constant 0 : index
    %2 = vector.load %arg3[%c0_3, %c0_4, %c0_5, %c0_6] : memref<1x1x16x4xf32, #tpu.memory_space<vmem>>, vector<1x1x16x4xf32>
    %3 = vector.shape_cast %2 : vector<1x1x16x4xf32> to vector<16x4xf32>
    %c0_7 = arith.constant 0 : index
    %c0_8 = arith.constant 0 : index
    %c0_9 = arith.constant 0 : index
    %c0_10 = arith.constant 0 : index
    %4 = vector.load %arg4[%c0_7, %c0_8, %c0_9, %c0_10] : memref<1x1x16x4xf32, #tpu.memory_space<vmem>>, vector<1x1x16x4xf32>
    %5 = vector.shape_cast %4 : vector<1x1x16x4xf32> to vector<16x4xf32>
    %c0_i32 = arith.constant 0 : i32
    %6 = arith.cmpi sgt, %arg1, %c0_i32 : i32
    %cst = arith.constant 0.000000e+00 : f32
    %7 = vector.broadcast %cst : f32 to vector<16x4xf32>
    %8 = arith.select %6, %3, %7 : vector<16x4xf32>
    %c1_i32 = arith.constant 1 : i32
    %9 = arith.cmpi slt, %arg1, %c1_i32 : i32
    %cst_11 = arith.constant 0.000000e+00 : f32
    %10 = vector.broadcast %cst_11 : f32 to vector<16x4xf32>
    %11 = arith.select %9, %5, %10 : vector<16x4xf32>
    %cst_12 = arith.constant 0.000000e+00 : f32
    %12 = vector.broadcast %cst_12 : f32 to vector<10x1x4xf32>
    %c0_13 = arith.constant 0 : index
    %c0_14 = arith.constant 0 : index
    %c0_15 = arith.constant 0 : index
    %13 = vector.load %arg10[%c0_13, %c0_14, %c0_15] : memref<10x18x4xf32, #tpu.memory_space<vmem>>, vector<10x1x4xf32>
    tpu.vector_store %arg10[%c0_13, %c0_14, %c0_15], %12 {strides = array<i32>} : memref<10x18x4xf32, #tpu.memory_space<vmem>>, vector<10x1x4xf32>,
    %c0_16 = arith.constant 0 : index
    %c17 = arith.constant 17 : index
    %c0_17 = arith.constant 0 : index
    %14 = vector.load %arg10[%c0_16, %c17, %c0_17] : memref<10x18x4xf32, #tpu.memory_space<vmem>>, vector<10x1x4xf32>
    tpu.vector_store %arg10[%c0_16, %c17, %c0_17], %12 {strides = array<i32>} : memref<10x18x4xf32, #tpu.memory_space<vmem>>, vector<10x1x4xf32>,
    %15 = vector.shape_cast %8 : vector<16x4xf32> to vector<1x16x4xf32>
    %c0_18 = arith.constant 0 : index
    %c1 = arith.constant 1 : index
    %c0_19 = arith.constant 0 : index
    %16 = vector.load %arg10[%c0_18, %c1, %c0_19] : memref<10x18x4xf32, #tpu.memory_space<vmem>>, vector<1x16x4xf32>
    tpu.vector_store %arg10[%c0_18, %c1, %c0_19], %15 {strides = array<i32>} : memref<10x18x4xf32, #tpu.memory_space<vmem>>, vector<1x16x4xf32>,
    %17 = vector.shape_cast %11 : vector<16x4xf32> to vector<1x16x4xf32>
    %c9 = arith.constant 9 : index
    %c1_20 = arith.constant 1 : index
    %c0_21 = arith.constant 0 : index
    %18 = vector.load %arg10[%c9, %c1_20, %c0_21] : memref<10x18x4xf32, #tpu.memory_space<vmem>>, vector<1x16x4xf32>
    tpu.vector_store %arg10[%c9, %c1_20, %c0_21], %17 {strides = array<i32>} : memref<10x18x4xf32, #tpu.memory_space<vmem>>, vector<1x16x4xf32>,
    %c1_22 = arith.constant 1 : index
    %c1_23 = arith.constant 1 : index
    %c0_24 = arith.constant 0 : index
    %19 = vector.load %arg10[%c1_22, %c1_23, %c0_24] : memref<10x18x4xf32, #tpu.memory_space<vmem>>, vector<8x16x4xf32>
    tpu.vector_store %arg10[%c1_22, %c1_23, %c0_24], %1 {strides = array<i32>} : memref<10x18x4xf32, #tpu.memory_space<vmem>>, vector<8x16x4xf32>,
    %c0_25 = arith.constant 0 : index
    %c0_26 = arith.constant 0 : index
    %c0_27 = arith.constant 0 : index
    %20 = vector.load %arg10[%c0_25, %c0_26, %c0_27] : memref<10x18x4xf32, #tpu.memory_space<vmem>>, vector<8x16x4xf32>
    %c0_28 = arith.constant 0 : index
    %c1_29 = arith.constant 1 : index
    %c0_30 = arith.constant 0 : index
    %21 = vector.load %arg10[%c0_28, %c1_29, %c0_30] : memref<10x18x4xf32, #tpu.memory_space<vmem>>, vector<8x16x4xf32>
    %c0_31 = arith.constant 0 : index
    %c2 = arith.constant 2 : index
    %c0_32 = arith.constant 0 : index
    %22 = vector.load %arg10[%c0_31, %c2, %c0_32] : memref<10x18x4xf32, #tpu.memory_space<vmem>>, vector<8x16x4xf32>
    %c1_33 = arith.constant 1 : index
    %c0_34 = arith.constant 0 : index
    %c0_35 = arith.constant 0 : index
    %23 = vector.load %arg10[%c1_33, %c0_34, %c0_35] : memref<10x18x4xf32, #tpu.memory_space<vmem>>, vector<8x16x4xf32>
    %c1_36 = arith.constant 1 : index
    %c1_37 = arith.constant 1 : index
    %c0_38 = arith.constant 0 : index
    %24 = vector.load %arg10[%c1_36, %c1_37, %c0_38] : memref<10x18x4xf32, #tpu.memory_space<vmem>>, vector<8x16x4xf32>
    %c1_39 = arith.constant 1 : index
    %c2_40 = arith.constant 2 : index
    %c0_41 = arith.constant 0 : index
    %25 = vector.load %arg10[%c1_39, %c2_40, %c0_41] : memref<10x18x4xf32, #tpu.memory_space<vmem>>, vector<8x16x4xf32>
    %c2_42 = arith.constant 2 : index
    %c0_43 = arith.constant 0 : index
    %c0_44 = arith.constant 0 : index
    %26 = vector.load %arg10[%c2_42, %c0_43, %c0_44] : memref<10x18x4xf32, #tpu.memory_space<vmem>>, vector<8x16x4xf32>
    %c2_45 = arith.constant 2 : index
    %c1_46 = arith.constant 1 : index
    %c0_47 = arith.constant 0 : index
    %27 = vector.load %arg10[%c2_45, %c1_46, %c0_47] : memref<10x18x4xf32, #tpu.memory_space<vmem>>, vector<8x16x4xf32>
    %c2_48 = arith.constant 2 : index
    %c2_49 = arith.constant 2 : index
    %c0_50 = arith.constant 0 : index
    %28 = vector.load %arg10[%c2_48, %c2_49, %c0_50] : memref<10x18x4xf32, #tpu.memory_space<vmem>>, vector<8x16x4xf32>
    %29 = tpu.concatenate %20, %21, %22, %23, %24, %25, %26, %27, %28 in 2 : vector<8x16x4xf32>, vector<8x16x4xf32>, vector<8x16x4xf32>, vector<8x16x4xf32>, vector<8x16x4xf32>, vector<8x16x4xf32>, vector<8x16x4xf32>, vector<8x16x4xf32>, vector<8x16x4xf32> -> vector<8x16x36xf32>
    %30 = vector.shape_cast %29 : vector<8x16x36xf32> to vector<128x36xf32>
    %c0_51 = arith.constant 0 : index
    %c0_52 = arith.constant 0 : index
    %31 = vector.load %arg5[%c0_51, %c0_52] : memref<36x8xf32, #tpu.memory_space<vmem>>, vector<36x8xf32>
    %cst_53 = arith.constant dense<0.000000e+00> : vector<128x8xf32>
    %32 = tpu.matmul %30, %31, %cst_53 {dimension_numbers = #tpu.dot_dimension_numbers<[1], [0], [0], [1], [0, 0, 1, 1], [], []>} : vector<128x36xf32>, vector<36x8xf32>, vector<128x8xf32> -> vector<128x8xf32>
    %c0_54 = arith.constant 0 : index
    %c0_55 = arith.constant 0 : index
    %33 = vector.load %arg6[%c0_54, %c0_55] : memref<1x8xf32, #tpu.memory_space<vmem>>, vector<1x8xf32>
    %34 = vector.broadcast %33 : vector<1x8xf32> to vector<128x8xf32>
    %35 = arith.addf %32, %34 : vector<128x8xf32>
    %36 = vector.shape_cast %35 : vector<128x8xf32> to vector<8x16x8xf32>
    %c0_56 = arith.constant 0 : index
    %c0_57 = arith.constant 0 : index
    %c0_58 = arith.constant 0 : index
    %c0_59 = arith.constant 0 : index
    %37 = vector.load %arg7[%c0_56, %c0_57, %c0_58, %c0_59] : memref<1x8x16x8xf32, #tpu.memory_space<vmem>>, vector<1x8x16x8xf32>
    %38 = vector.shape_cast %37 : vector<1x8x16x8xf32> to vector<8x16x8xf32>
    %39 = vector.shape_cast %36 : vector<8x16x8xf32> to vector<1x8x16x8xf32>
    tpu.vector_store %arg7[%c0_56, %c0_57, %c0_58, %c0_59], %39 {strides = array<i32>} : memref<1x8x16x8xf32, #tpu.memory_space<vmem>>, vector<1x8x16x8xf32>,
    %cst_60 = arith.constant dense<0.000000e+00> : vector<8xf32>
    %40 = vector.multi_reduction <add>, %35, %cst_60 [0] : vector<128x8xf32> to vector<8xf32>
    %41 = vector.shape_cast %40 : vector<8xf32> to vector<1x8xf32>
    %c0_61 = arith.constant 0 : index
    %c0_62 = arith.constant 0 : index
    %c0_63 = arith.constant 0 : index
    %42 = vector.load %arg8[%c0_61, %c0_62, %c0_63] : memref<1x1x8xf32, #tpu.memory_space<vmem>>, vector<1x1x8xf32>
    %43 = vector.shape_cast %42 : vector<1x1x8xf32> to vector<1x8xf32>
    %44 = vector.shape_cast %41 : vector<1x8xf32> to vector<1x1x8xf32>
    tpu.vector_store %arg8[%c0_61, %c0_62, %c0_63], %44 {strides = array<i32>} : memref<1x1x8xf32, #tpu.memory_space<vmem>>, vector<1x1x8xf32>,
    %45 = arith.mulf %35, %35 : vector<128x8xf32>
    %cst_64 = arith.constant dense<0.000000e+00> : vector<8xf32>
    %46 = vector.multi_reduction <add>, %45, %cst_64 [0] : vector<128x8xf32> to vector<8xf32>
    %47 = vector.shape_cast %46 : vector<8xf32> to vector<1x8xf32>
    %c0_65 = arith.constant 0 : index
    %c0_66 = arith.constant 0 : index
    %c0_67 = arith.constant 0 : index
    %48 = vector.load %arg9[%c0_65, %c0_66, %c0_67] : memref<1x1x8xf32, #tpu.memory_space<vmem>>, vector<1x1x8xf32>
    %49 = vector.shape_cast %48 : vector<1x1x8xf32> to vector<1x8xf32>
    %50 = vector.shape_cast %47 : vector<1x8xf32> to vector<1x1x8xf32>
    tpu.vector_store %arg9[%c0_65, %c0_66, %c0_67], %50 {strides = array<i32>} : memref<1x1x8xf32, #tpu.memory_space<vmem>>, vector<1x1x8xf32>,
    return
  }
  func.func @transform_0(%arg0: i32, %arg1: i32) -> (i32, i32, i32, i32) {
    %c0_i32 = arith.constant 0 : i32
    %c0_i32_0 = arith.constant 0 : i32
    %c0_i32_1 = arith.constant 0 : i32
    return %arg0, %arg1, %c0_i32, %c0_i32_0 : i32, i32, i32, i32
  }
  func.func @transform_1(%arg0: i32, %arg1: i32) -> (i32, i32, i32, i32) {
    %c8_i32 = arith.constant 8 : i32
    %0 = arith.muli %arg1, %c8_i32 : i32
    %c1_i32 = arith.constant 1 : i32
    %1 = arith.subi %0, %c1_i32 : i32
    %c0_i32 = arith.constant 0 : i32
    %2 = arith.maxsi %1, %c0_i32 : i32
    %c0_i32_0 = arith.constant 0 : i32
    %c0_i32_1 = arith.constant 0 : i32
    %c0_i32_2 = arith.constant 0 : i32
    return %arg0, %2, %c0_i32_0, %c0_i32_1 : i32, i32, i32, i32
  }
  func.func @transform_2(%arg0: i32, %arg1: i32) -> (i32, i32, i32, i32) {
    %c1_i32 = arith.constant 1 : i32
    %0 = arith.addi %arg1, %c1_i32 : i32
    %c8_i32 = arith.constant 8 : i32
    %1 = arith.muli %0, %c8_i32 : i32
    %c15_i32 = arith.constant 15 : i32
    %2 = arith.minsi %1, %c15_i32 : i32
    %c0_i32 = arith.constant 0 : i32
    %c0_i32_0 = arith.constant 0 : i32
    %c0_i32_1 = arith.constant 0 : i32
    return %arg0, %2, %c0_i32, %c0_i32_0 : i32, i32, i32, i32
  }
  func.func @transform_3(%arg0: i32, %arg1: i32) -> (i32, i32) {
    %c0_i32 = arith.constant 0 : i32
    %c0_i32_0 = arith.constant 0 : i32
    %c0_i32_1 = arith.constant 0 : i32
    return %c0_i32, %c0_i32_0 : i32, i32
  }
  func.func @transform_4(%arg0: i32, %arg1: i32) -> (i32, i32) {
    %c0_i32 = arith.constant 0 : i32
    %c0_i32_0 = arith.constant 0 : i32
    %c0_i32_1 = arith.constant 0 : i32
    return %c0_i32, %c0_i32_0 : i32, i32
  }
  func.func @transform_5(%arg0: i32, %arg1: i32) -> (i32, i32, i32, i32) {
    %c0_i32 = arith.constant 0 : i32
    %c0_i32_0 = arith.constant 0 : i32
    %c0_i32_1 = arith.constant 0 : i32
    return %arg0, %arg1, %c0_i32, %c0_i32_0 : i32, i32, i32, i32
  }
  func.func @transform_6(%arg0: i32, %arg1: i32) -> (i32, i32, i32) {
    %c2_i32 = arith.constant 2 : i32
    %0 = arith.muli %arg0, %c2_i32 : i32
    %1 = arith.addi %0, %arg1 : i32
    %c0_i32 = arith.constant 0 : i32
    %c0_i32_0 = arith.constant 0 : i32
    %c0_i32_1 = arith.constant 0 : i32
    return %1, %c0_i32, %c0_i32_0 : i32, i32, i32
  }
  func.func @transform_7(%arg0: i32, %arg1: i32) -> (i32, i32, i32) {
    %c2_i32 = arith.constant 2 : i32
    %0 = arith.muli %arg0, %c2_i32 : i32
    %1 = arith.addi %0, %arg1 : i32
    %c0_i32 = arith.constant 0 : i32
    %c0_i32_0 = arith.constant 0 : i32
    %c0_i32_1 = arith.constant 0 : i32
    return %1, %c0_i32, %c0_i32_0 : i32, i32, i32
  }
}

module attributes {stable_mosaic.version = 11 : i64} {
  func.func @_bn_relu_nchw_kernel(%arg0: i32, %arg1: i32, %arg2: memref<1x8x16x8xf32, #tpu.memory_space<vmem>>, %arg3: memref<2x8xf32, #tpu.memory_space<vmem>>, %arg4: memref<1x8x128xf32, #tpu.memory_space<vmem>>) attributes {dimension_semantics = [#tpu.dimension_semantics<parallel>, #tpu.dimension_semantics<parallel>], iteration_bounds = array<i64: 2, 2>, scalar_prefetch = 0 : i64, scratch_operands = 0 : i64, tpu.core_type = #tpu.core_type<tc>, window_params = [{transform_indices = @transform_0, window_bounds = array<i64: 1, 8, 16, 8>}, {pipeline_mode = #tpu.pipeline_mode<synchronous>, transform_indices = @transform_1, window_bounds = array<i64: 2, 8>}, {transform_indices = @transform_2, window_bounds = array<i64: 1, 8, 128>}]} {
    %c0 = arith.constant 0 : index
    %c0_0 = arith.constant 0 : index
    %c0_1 = arith.constant 0 : index
    %c0_2 = arith.constant 0 : index
    %0 = vector.load %arg2[%c0, %c0_0, %c0_1, %c0_2] : memref<1x8x16x8xf32, #tpu.memory_space<vmem>>, vector<1x8x16x8xf32>
    %1 = vector.shape_cast %0 : vector<1x8x16x8xf32> to vector<8x16x8xf32>
    %c0_3 = arith.constant 0 : index
    %c0_4 = arith.constant 0 : index
    %2 = vector.load %arg3[%c0_3, %c0_4] : memref<2x8xf32, #tpu.memory_space<vmem>>, vector<1x8xf32>
    %3 = vector.shape_cast %2 : vector<1x8xf32> to vector<1x1x8xf32>
    %4 = vector.broadcast %3 : vector<1x1x8xf32> to vector<8x16x8xf32>
    %5 = arith.mulf %1, %4 : vector<8x16x8xf32>
    %c1 = arith.constant 1 : index
    %c0_5 = arith.constant 0 : index
    %6 = vector.load %arg3[%c1, %c0_5] : memref<2x8xf32, #tpu.memory_space<vmem>>, vector<1x8xf32>
    %7 = vector.shape_cast %6 : vector<1x8xf32> to vector<1x1x8xf32>
    %8 = vector.broadcast %7 : vector<1x1x8xf32> to vector<8x16x8xf32>
    %9 = arith.addf %5, %8 : vector<8x16x8xf32>
    %cst = arith.constant 0.000000e+00 : f32
    %10 = vector.broadcast %cst : f32 to vector<8x16x8xf32>
    %11 = arith.maximumf %9, %10 : vector<8x16x8xf32>
    %12 = vector.shape_cast %11 : vector<8x16x8xf32> to vector<128x8xf32>
    %13 = tpu.transpose %12, [1, 0] : vector<128x8xf32> -> vector<8x128xf32>
    %c0_6 = arith.constant 0 : index
    %c0_7 = arith.constant 0 : index
    %c0_8 = arith.constant 0 : index
    %14 = vector.load %arg4[%c0_6, %c0_7, %c0_8] : memref<1x8x128xf32, #tpu.memory_space<vmem>>, vector<1x8x128xf32>
    %15 = vector.shape_cast %14 : vector<1x8x128xf32> to vector<8x128xf32>
    %16 = vector.shape_cast %13 : vector<8x128xf32> to vector<1x8x128xf32>
    tpu.vector_store %arg4[%c0_6, %c0_7, %c0_8], %16 {strides = array<i32>} : memref<1x8x128xf32, #tpu.memory_space<vmem>>, vector<1x8x128xf32>,
    return
  }
  func.func @transform_0(%arg0: i32, %arg1: i32) -> (i32, i32, i32, i32) {
    %c0_i32 = arith.constant 0 : i32
    %c0_i32_0 = arith.constant 0 : i32
    %c0_i32_1 = arith.constant 0 : i32
    return %arg0, %arg1, %c0_i32, %c0_i32_0 : i32, i32, i32, i32
  }
  func.func @transform_1(%arg0: i32, %arg1: i32) -> (i32, i32) {
    %c0_i32 = arith.constant 0 : i32
    %c0_i32_0 = arith.constant 0 : i32
    %c0_i32_1 = arith.constant 0 : i32
    return %c0_i32, %c0_i32_0 : i32, i32
  }
  func.func @transform_2(%arg0: i32, %arg1: i32) -> (i32, i32, i32) {
    %c0_i32 = arith.constant 0 : i32
    %c0_i32_0 = arith.constant 0 : i32
    return %arg0, %c0_i32, %arg1 : i32, i32, i32
  }
}

module attributes {stable_mosaic.version = 11 : i64} {
  func.func @_conv_block_kernel(%arg0: i32, %arg1: i32, %arg2: memref<2x8xf32, #tpu.memory_space<vmem>>, %arg3: memref<1x8x16x8xf32, #tpu.memory_space<vmem>>, %arg4: memref<1x1x16x8xf32, #tpu.memory_space<vmem>>, %arg5: memref<1x1x16x8xf32, #tpu.memory_space<vmem>>, %arg6: memref<72x8xf32, #tpu.memory_space<vmem>>, %arg7: memref<1x8xf32, #tpu.memory_space<vmem>>, %arg8: memref<1x8x16x8xf32, #tpu.memory_space<vmem>>, %arg9: memref<1x1x8xf32, #tpu.memory_space<vmem>>, %arg10: memref<1x1x8xf32, #tpu.memory_space<vmem>>, %arg11: memref<10x18x8xf32, #tpu.memory_space<vmem>>) attributes {dimension_semantics = [#tpu.dimension_semantics<parallel>, #tpu.dimension_semantics<parallel>], iteration_bounds = array<i64: 2, 2>, scalar_prefetch = 0 : i64, scratch_operands = 1 : i64, tpu.core_type = #tpu.core_type<tc>, window_params = [{pipeline_mode = #tpu.pipeline_mode<synchronous>, transform_indices = @transform_0, window_bounds = array<i64: 2, 8>}, {transform_indices = @transform_1, window_bounds = array<i64: 1, 8, 16, 8>}, {transform_indices = @transform_2, window_bounds = array<i64: 1, 1, 16, 8>}, {transform_indices = @transform_3, window_bounds = array<i64: 1, 1, 16, 8>}, {pipeline_mode = #tpu.pipeline_mode<synchronous>, transform_indices = @transform_4, window_bounds = array<i64: 72, 8>}, {pipeline_mode = #tpu.pipeline_mode<synchronous>, transform_indices = @transform_5, window_bounds = array<i64: 1, 8>}, {transform_indices = @transform_6, window_bounds = array<i64: 1, 8, 16, 8>}, {transform_indices = @transform_7, window_bounds = array<i64: 1, 1, 8>}, {transform_indices = @transform_8, window_bounds = array<i64: 1, 1, 8>}]} {
    %c0 = arith.constant 0 : index
    %c0_0 = arith.constant 0 : index
    %c0_1 = arith.constant 0 : index
    %c0_2 = arith.constant 0 : index
    %0 = vector.load %arg3[%c0, %c0_0, %c0_1, %c0_2] : memref<1x8x16x8xf32, #tpu.memory_space<vmem>>, vector<1x8x16x8xf32>
    %1 = vector.shape_cast %0 : vector<1x8x16x8xf32> to vector<8x16x8xf32>
    %c0_3 = arith.constant 0 : index
    %c0_4 = arith.constant 0 : index
    %c0_5 = arith.constant 0 : index
    %c0_6 = arith.constant 0 : index
    %2 = vector.load %arg4[%c0_3, %c0_4, %c0_5, %c0_6] : memref<1x1x16x8xf32, #tpu.memory_space<vmem>>, vector<1x1x16x8xf32>
    %3 = vector.shape_cast %2 : vector<1x1x16x8xf32> to vector<16x8xf32>
    %c0_7 = arith.constant 0 : index
    %c0_8 = arith.constant 0 : index
    %c0_9 = arith.constant 0 : index
    %c0_10 = arith.constant 0 : index
    %4 = vector.load %arg5[%c0_7, %c0_8, %c0_9, %c0_10] : memref<1x1x16x8xf32, #tpu.memory_space<vmem>>, vector<1x1x16x8xf32>
    %5 = vector.shape_cast %4 : vector<1x1x16x8xf32> to vector<16x8xf32>
    %c0_11 = arith.constant 0 : index
    %c0_12 = arith.constant 0 : index
    %6 = vector.load %arg2[%c0_11, %c0_12] : memref<2x8xf32, #tpu.memory_space<vmem>>, vector<1x8xf32>
    %c1 = arith.constant 1 : index
    %c0_13 = arith.constant 0 : index
    %7 = vector.load %arg2[%c1, %c0_13] : memref<2x8xf32, #tpu.memory_space<vmem>>, vector<1x8xf32>
    %8 = vector.shape_cast %6 : vector<1x8xf32> to vector<1x1x8xf32>
    %9 = vector.broadcast %8 : vector<1x1x8xf32> to vector<8x16x8xf32>
    %10 = arith.mulf %1, %9 : vector<8x16x8xf32>
    %11 = vector.shape_cast %7 : vector<1x8xf32> to vector<1x1x8xf32>
    %12 = vector.broadcast %11 : vector<1x1x8xf32> to vector<8x16x8xf32>
    %13 = arith.addf %10, %12 : vector<8x16x8xf32>
    %cst = arith.constant 0.000000e+00 : f32
    %14 = vector.broadcast %cst : f32 to vector<8x16x8xf32>
    %15 = arith.maximumf %13, %14 : vector<8x16x8xf32>
    %16 = vector.broadcast %6 : vector<1x8xf32> to vector<16x8xf32>
    %17 = arith.mulf %3, %16 : vector<16x8xf32>
    %18 = vector.broadcast %7 : vector<1x8xf32> to vector<16x8xf32>
    %19 = arith.addf %17, %18 : vector<16x8xf32>
    %cst_14 = arith.constant 0.000000e+00 : f32
    %20 = vector.broadcast %cst_14 : f32 to vector<16x8xf32>
    %21 = arith.maximumf %19, %20 : vector<16x8xf32>
    %22 = vector.broadcast %6 : vector<1x8xf32> to vector<16x8xf32>
    %23 = arith.mulf %5, %22 : vector<16x8xf32>
    %24 = vector.broadcast %7 : vector<1x8xf32> to vector<16x8xf32>
    %25 = arith.addf %23, %24 : vector<16x8xf32>
    %cst_15 = arith.constant 0.000000e+00 : f32
    %26 = vector.broadcast %cst_15 : f32 to vector<16x8xf32>
    %27 = arith.maximumf %25, %26 : vector<16x8xf32>
    %c0_i32 = arith.constant 0 : i32
    %28 = arith.cmpi sgt, %arg1, %c0_i32 : i32
    %cst_16 = arith.constant 0.000000e+00 : f32
    %29 = vector.broadcast %cst_16 : f32 to vector<16x8xf32>
    %30 = arith.select %28, %21, %29 : vector<16x8xf32>
    %c1_i32 = arith.constant 1 : i32
    %31 = arith.cmpi slt, %arg1, %c1_i32 : i32
    %cst_17 = arith.constant 0.000000e+00 : f32
    %32 = vector.broadcast %cst_17 : f32 to vector<16x8xf32>
    %33 = arith.select %31, %27, %32 : vector<16x8xf32>
    %cst_18 = arith.constant 0.000000e+00 : f32
    %34 = vector.broadcast %cst_18 : f32 to vector<10x1x8xf32>
    %c0_19 = arith.constant 0 : index
    %c0_20 = arith.constant 0 : index
    %c0_21 = arith.constant 0 : index
    %35 = vector.load %arg11[%c0_19, %c0_20, %c0_21] : memref<10x18x8xf32, #tpu.memory_space<vmem>>, vector<10x1x8xf32>
    tpu.vector_store %arg11[%c0_19, %c0_20, %c0_21], %34 {strides = array<i32>} : memref<10x18x8xf32, #tpu.memory_space<vmem>>, vector<10x1x8xf32>,
    %c0_22 = arith.constant 0 : index
    %c17 = arith.constant 17 : index
    %c0_23 = arith.constant 0 : index
    %36 = vector.load %arg11[%c0_22, %c17, %c0_23] : memref<10x18x8xf32, #tpu.memory_space<vmem>>, vector<10x1x8xf32>
    tpu.vector_store %arg11[%c0_22, %c17, %c0_23], %34 {strides = array<i32>} : memref<10x18x8xf32, #tpu.memory_space<vmem>>, vector<10x1x8xf32>,
    %37 = vector.shape_cast %30 : vector<16x8xf32> to vector<1x16x8xf32>
    %c0_24 = arith.constant 0 : index
    %c1_25 = arith.constant 1 : index
    %c0_26 = arith.constant 0 : index
    %38 = vector.load %arg11[%c0_24, %c1_25, %c0_26] : memref<10x18x8xf32, #tpu.memory_space<vmem>>, vector<1x16x8xf32>
    tpu.vector_store %arg11[%c0_24, %c1_25, %c0_26], %37 {strides = array<i32>} : memref<10x18x8xf32, #tpu.memory_space<vmem>>, vector<1x16x8xf32>,
    %39 = vector.shape_cast %33 : vector<16x8xf32> to vector<1x16x8xf32>
    %c9 = arith.constant 9 : index
    %c1_27 = arith.constant 1 : index
    %c0_28 = arith.constant 0 : index
    %40 = vector.load %arg11[%c9, %c1_27, %c0_28] : memref<10x18x8xf32, #tpu.memory_space<vmem>>, vector<1x16x8xf32>
    tpu.vector_store %arg11[%c9, %c1_27, %c0_28], %39 {strides = array<i32>} : memref<10x18x8xf32, #tpu.memory_space<vmem>>, vector<1x16x8xf32>,
    %c1_29 = arith.constant 1 : index
    %c1_30 = arith.constant 1 : index
    %c0_31 = arith.constant 0 : index
    %41 = vector.load %arg11[%c1_29, %c1_30, %c0_31] : memref<10x18x8xf32, #tpu.memory_space<vmem>>, vector<8x16x8xf32>
    tpu.vector_store %arg11[%c1_29, %c1_30, %c0_31], %15 {strides = array<i32>} : memref<10x18x8xf32, #tpu.memory_space<vmem>>, vector<8x16x8xf32>,
    %c0_32 = arith.constant 0 : index
    %c0_33 = arith.constant 0 : index
    %c0_34 = arith.constant 0 : index
    %42 = vector.load %arg11[%c0_32, %c0_33, %c0_34] : memref<10x18x8xf32, #tpu.memory_space<vmem>>, vector<8x16x8xf32>
    %c0_35 = arith.constant 0 : index
    %c1_36 = arith.constant 1 : index
    %c0_37 = arith.constant 0 : index
    %43 = vector.load %arg11[%c0_35, %c1_36, %c0_37] : memref<10x18x8xf32, #tpu.memory_space<vmem>>, vector<8x16x8xf32>
    %c0_38 = arith.constant 0 : index
    %c2 = arith.constant 2 : index
    %c0_39 = arith.constant 0 : index
    %44 = vector.load %arg11[%c0_38, %c2, %c0_39] : memref<10x18x8xf32, #tpu.memory_space<vmem>>, vector<8x16x8xf32>
    %c1_40 = arith.constant 1 : index
    %c0_41 = arith.constant 0 : index
    %c0_42 = arith.constant 0 : index
    %45 = vector.load %arg11[%c1_40, %c0_41, %c0_42] : memref<10x18x8xf32, #tpu.memory_space<vmem>>, vector<8x16x8xf32>
    %c1_43 = arith.constant 1 : index
    %c1_44 = arith.constant 1 : index
    %c0_45 = arith.constant 0 : index
    %46 = vector.load %arg11[%c1_43, %c1_44, %c0_45] : memref<10x18x8xf32, #tpu.memory_space<vmem>>, vector<8x16x8xf32>
    %c1_46 = arith.constant 1 : index
    %c2_47 = arith.constant 2 : index
    %c0_48 = arith.constant 0 : index
    %47 = vector.load %arg11[%c1_46, %c2_47, %c0_48] : memref<10x18x8xf32, #tpu.memory_space<vmem>>, vector<8x16x8xf32>
    %c2_49 = arith.constant 2 : index
    %c0_50 = arith.constant 0 : index
    %c0_51 = arith.constant 0 : index
    %48 = vector.load %arg11[%c2_49, %c0_50, %c0_51] : memref<10x18x8xf32, #tpu.memory_space<vmem>>, vector<8x16x8xf32>
    %c2_52 = arith.constant 2 : index
    %c1_53 = arith.constant 1 : index
    %c0_54 = arith.constant 0 : index
    %49 = vector.load %arg11[%c2_52, %c1_53, %c0_54] : memref<10x18x8xf32, #tpu.memory_space<vmem>>, vector<8x16x8xf32>
    %c2_55 = arith.constant 2 : index
    %c2_56 = arith.constant 2 : index
    %c0_57 = arith.constant 0 : index
    %50 = vector.load %arg11[%c2_55, %c2_56, %c0_57] : memref<10x18x8xf32, #tpu.memory_space<vmem>>, vector<8x16x8xf32>
    %51 = tpu.concatenate %42, %43, %44, %45, %46, %47, %48, %49, %50 in 2 : vector<8x16x8xf32>, vector<8x16x8xf32>, vector<8x16x8xf32>, vector<8x16x8xf32>, vector<8x16x8xf32>, vector<8x16x8xf32>, vector<8x16x8xf32>, vector<8x16x8xf32>, vector<8x16x8xf32> -> vector<8x16x72xf32>
    %52 = vector.shape_cast %51 : vector<8x16x72xf32> to vector<128x72xf32>
    %c0_58 = arith.constant 0 : index
    %c0_59 = arith.constant 0 : index
    %53 = vector.load %arg6[%c0_58, %c0_59] : memref<72x8xf32, #tpu.memory_space<vmem>>, vector<72x8xf32>
    %cst_60 = arith.constant dense<0.000000e+00> : vector<128x8xf32>
    %54 = tpu.matmul %52, %53, %cst_60 {dimension_numbers = #tpu.dot_dimension_numbers<[1], [0], [0], [1], [0, 0, 1, 1], [], []>} : vector<128x72xf32>, vector<72x8xf32>, vector<128x8xf32> -> vector<128x8xf32>
    %c0_61 = arith.constant 0 : index
    %c0_62 = arith.constant 0 : index
    %55 = vector.load %arg7[%c0_61, %c0_62] : memref<1x8xf32, #tpu.memory_space<vmem>>, vector<1x8xf32>
    %56 = vector.broadcast %55 : vector<1x8xf32> to vector<128x8xf32>
    %57 = arith.addf %54, %56 : vector<128x8xf32>
    %58 = vector.shape_cast %57 : vector<128x8xf32> to vector<8x16x8xf32>
    %c0_63 = arith.constant 0 : index
    %c0_64 = arith.constant 0 : index
    %c0_65 = arith.constant 0 : index
    %c0_66 = arith.constant 0 : index
    %59 = vector.load %arg8[%c0_63, %c0_64, %c0_65, %c0_66] : memref<1x8x16x8xf32, #tpu.memory_space<vmem>>, vector<1x8x16x8xf32>
    %60 = vector.shape_cast %59 : vector<1x8x16x8xf32> to vector<8x16x8xf32>
    %61 = vector.shape_cast %58 : vector<8x16x8xf32> to vector<1x8x16x8xf32>
    tpu.vector_store %arg8[%c0_63, %c0_64, %c0_65, %c0_66], %61 {strides = array<i32>} : memref<1x8x16x8xf32, #tpu.memory_space<vmem>>, vector<1x8x16x8xf32>,
    %cst_67 = arith.constant dense<0.000000e+00> : vector<8xf32>
    %62 = vector.multi_reduction <add>, %57, %cst_67 [0] : vector<128x8xf32> to vector<8xf32>
    %63 = vector.shape_cast %62 : vector<8xf32> to vector<1x8xf32>
    %c0_68 = arith.constant 0 : index
    %c0_69 = arith.constant 0 : index
    %c0_70 = arith.constant 0 : index
    %64 = vector.load %arg9[%c0_68, %c0_69, %c0_70] : memref<1x1x8xf32, #tpu.memory_space<vmem>>, vector<1x1x8xf32>
    %65 = vector.shape_cast %64 : vector<1x1x8xf32> to vector<1x8xf32>
    %66 = vector.shape_cast %63 : vector<1x8xf32> to vector<1x1x8xf32>
    tpu.vector_store %arg9[%c0_68, %c0_69, %c0_70], %66 {strides = array<i32>} : memref<1x1x8xf32, #tpu.memory_space<vmem>>, vector<1x1x8xf32>,
    %67 = arith.mulf %57, %57 : vector<128x8xf32>
    %cst_71 = arith.constant dense<0.000000e+00> : vector<8xf32>
    %68 = vector.multi_reduction <add>, %67, %cst_71 [0] : vector<128x8xf32> to vector<8xf32>
    %69 = vector.shape_cast %68 : vector<8xf32> to vector<1x8xf32>
    %c0_72 = arith.constant 0 : index
    %c0_73 = arith.constant 0 : index
    %c0_74 = arith.constant 0 : index
    %70 = vector.load %arg10[%c0_72, %c0_73, %c0_74] : memref<1x1x8xf32, #tpu.memory_space<vmem>>, vector<1x1x8xf32>
    %71 = vector.shape_cast %70 : vector<1x1x8xf32> to vector<1x8xf32>
    %72 = vector.shape_cast %69 : vector<1x8xf32> to vector<1x1x8xf32>
    tpu.vector_store %arg10[%c0_72, %c0_73, %c0_74], %72 {strides = array<i32>} : memref<1x1x8xf32, #tpu.memory_space<vmem>>, vector<1x1x8xf32>,
    return
  }
  func.func @transform_0(%arg0: i32, %arg1: i32) -> (i32, i32) {
    %c0_i32 = arith.constant 0 : i32
    %c0_i32_0 = arith.constant 0 : i32
    %c0_i32_1 = arith.constant 0 : i32
    return %c0_i32, %c0_i32_0 : i32, i32
  }
  func.func @transform_1(%arg0: i32, %arg1: i32) -> (i32, i32, i32, i32) {
    %c0_i32 = arith.constant 0 : i32
    %c0_i32_0 = arith.constant 0 : i32
    %c0_i32_1 = arith.constant 0 : i32
    return %arg0, %arg1, %c0_i32, %c0_i32_0 : i32, i32, i32, i32
  }
  func.func @transform_2(%arg0: i32, %arg1: i32) -> (i32, i32, i32, i32) {
    %c8_i32 = arith.constant 8 : i32
    %0 = arith.muli %arg1, %c8_i32 : i32
    %c1_i32 = arith.constant 1 : i32
    %1 = arith.subi %0, %c1_i32 : i32
    %c0_i32 = arith.constant 0 : i32
    %2 = arith.maxsi %1, %c0_i32 : i32
    %c0_i32_0 = arith.constant 0 : i32
    %c0_i32_1 = arith.constant 0 : i32
    %c0_i32_2 = arith.constant 0 : i32
    return %arg0, %2, %c0_i32_0, %c0_i32_1 : i32, i32, i32, i32
  }
  func.func @transform_3(%arg0: i32, %arg1: i32) -> (i32, i32, i32, i32) {
    %c1_i32 = arith.constant 1 : i32
    %0 = arith.addi %arg1, %c1_i32 : i32
    %c8_i32 = arith.constant 8 : i32
    %1 = arith.muli %0, %c8_i32 : i32
    %c15_i32 = arith.constant 15 : i32
    %2 = arith.minsi %1, %c15_i32 : i32
    %c0_i32 = arith.constant 0 : i32
    %c0_i32_0 = arith.constant 0 : i32
    %c0_i32_1 = arith.constant 0 : i32
    return %arg0, %2, %c0_i32, %c0_i32_0 : i32, i32, i32, i32
  }
  func.func @transform_4(%arg0: i32, %arg1: i32) -> (i32, i32) {
    %c0_i32 = arith.constant 0 : i32
    %c0_i32_0 = arith.constant 0 : i32
    %c0_i32_1 = arith.constant 0 : i32
    return %c0_i32, %c0_i32_0 : i32, i32
  }
  func.func @transform_5(%arg0: i32, %arg1: i32) -> (i32, i32) {
    %c0_i32 = arith.constant 0 : i32
    %c0_i32_0 = arith.constant 0 : i32
    %c0_i32_1 = arith.constant 0 : i32
    return %c0_i32, %c0_i32_0 : i32, i32
  }
  func.func @transform_6(%arg0: i32, %arg1: i32) -> (i32, i32, i32, i32) {
    %c0_i32 = arith.constant 0 : i32
    %c0_i32_0 = arith.constant 0 : i32
    %c0_i32_1 = arith.constant 0 : i32
    return %arg0, %arg1, %c0_i32, %c0_i32_0 : i32, i32, i32, i32
  }
  func.func @transform_7(%arg0: i32, %arg1: i32) -> (i32, i32, i32) {
    %c2_i32 = arith.constant 2 : i32
    %0 = arith.muli %arg0, %c2_i32 : i32
    %1 = arith.addi %0, %arg1 : i32
    %c0_i32 = arith.constant 0 : i32
    %c0_i32_0 = arith.constant 0 : i32
    %c0_i32_1 = arith.constant 0 : i32
    return %1, %c0_i32, %c0_i32_0 : i32, i32, i32
  }
  func.func @transform_8(%arg0: i32, %arg1: i32) -> (i32, i32, i32) {
    %c2_i32 = arith.constant 2 : i32
    %0 = arith.muli %arg0, %c2_i32 : i32
    %1 = arith.addi %0, %arg1 : i32
    %c0_i32 = arith.constant 0 : i32
    %c0_i32_0 = arith.constant 0 : i32
    %c0_i32_1 = arith.constant 0 : i32
    return %1, %c0_i32, %c0_i32_0 : i32, i32, i32
  }
}

</mosaic_0001>

<llo_original>
// kernel: double_conv.5
$region0: #{double_conv.5}
  #allocation0 [shape = 'u32[]', space=smem, size = 0x4, offset = 0x4, fixed_abs, tag = 'smem constant byte address 0x4 - core index']
  #allocation1 [shape = 'u32[72,128]{1,0:T(1,128)}', space=vmem, size = 0x9000, scoped, tag = 'internal scratch']
  %s0 = inlined_call_operand.vmem [shape: f32[2,16,16,8], index: 0, kind: input, shape index: {}]
  %s1 = inlined_call_operand.vmem [shape: f32[2,8], index: 1, kind: input, shape index: {}]
  %s2 = inlined_call_operand.vmem [shape: f32[2,8,256], index: 2, kind: output, shape index: {}]
  %s3 = sld [smem:[#allocation0]]
  $region41: #{double_conv.5} parent=0
    _
  %s5 = ssub.s32 1, %s3
  %s6 = scalar_select 0, %s5, %s3
  loop: start=0, step=1, limit=6
  $region2: #{double_conv.5} parent=0 // loop_pre_header
    _
  $region3: #{double_conv.5} parent=0 // loop_header
    %s8 = sphi 0, %s12
    %p9 = scmp.ge.s32.totalorder %s8, 6
    %s15 = sphi 0, %s27
    %s16 = sphi 0, %s23
    %s17 = sphi 0, %s15
    %s18 = sphi 0, %s16
    %s19 = sphi 0, %s17
    %s20 = sphi 0, %s18
    %s32 = sphi 0, %s34
    %s35 = sphi 0, %s32
    %s36 = sphi 0, %s35
    %s52 = sphi 0, %s36
    %s56 = sphi 0, %s56
    %s58 = sphi 0, %s56
    %s59 = sphi 0, %s58
    %s73 = sphi 0, %s59
    %s81 = sphi 0, %s83
    %s84 = sphi 0, %s81
    %s85 = sphi 0, %s84
    %s101 = sphi 0, %s85
  $region4: #{double_conv.5} parent=0 // loop_header_branch
    %11 = sbr.rel (%p9) target = $region8
  $region5: #{double_conv.5} parent=0 // loop_body
    %s13 = ssub.s32 %s8, 1
    %s14 = ssub.s32 %s8, 2
    %s21 = sadd.s32 1, %s16
    %p22 = scmp.ge.s32.totalorder %s21, 2
    %s23 = scalar_select %p22, 0, %s21
    %s24 = sadd.s32 1, %s15
    %s25 = scalar_select %p22, %s24, %s15
    %p26 = scmp.ge.s32.totalorder %s25, 2
    %s27 = scalar_select %p26, 0, %s25
    %s28 = ssub.s32 %s15, %s27
    %s29 = ssub.s32 %s16, %s23
    %s30 = sor.u32 %s28, %s29
    %p31 = scmp.eq.s32.totalorder %s30, 0
    %s33 = sadd.s32 %s32, 1
    %s34 = scalar_select %p31, %s32, %s33
    %p37 = pneg %p31
    %p38 = scmp.eq.s32.totalorder %s8, 3
    %p39 = por %p37, %p38
    %p40 = scmp.ne.s32.totalorder %s32, %s35
    %p41 = scmp.eq.s32.totalorder %s8, 0
    %p42 = por %p40, %p41
    %p43 = scmp.ne.s32.totalorder %s32, %s35
    %p44 = scmp.eq.s32.totalorder %s13, 3
    %p45 = por %p43, %p44
    %p46 = scmp.ne.s32.totalorder %s35, %s36
    %p47 = scmp.eq.s32.totalorder %s13, 0
    %p48 = por %p46, %p47
    %p49 = scmp.ne.s32.totalorder %s35, %s36
    %p50 = scmp.eq.s32.totalorder %s14, 3
    %p51 = por %p49, %p50
    %p53 = scmp.ne.s32.totalorder %s36, %s52
    %p54 = scmp.eq.s32.totalorder %s14, 0
    %p55 = por %p53, %p54
    %s57 = sadd.s32 %s56, 1
    %p60 = scmp.eq.s32.totalorder %s8, 3
    %p61 = scmp.ne.s32.totalorder %s56, %s58
    %p62 = scmp.eq.s32.totalorder %s8, 0
    %p63 = por %p61, %p62
    %p64 = scmp.ne.s32.totalorder %s56, %s58
    %p65 = scmp.eq.s32.totalorder %s13, 3
    %p66 = por %p64, %p65
    %p67 = scmp.ne.s32.totalorder %s58, %s59
    %p68 = scmp.eq.s32.totalorder %s13, 0
    %p69 = por %p67, %p68
    %p70 = scmp.ne.s32.totalorder %s58, %s59
    %p71 = scmp.eq.s32.totalorder %s14, 3
    %p72 = por %p70, %p71
    %p74 = scmp.ne.s32.totalorder %s59, %s73
    %p75 = scmp.eq.s32.totalorder %s14, 0
    %p76 = por %p74, %p75
    %s77 = ssub.s32 %s15, %s27
    %s78 = ssub.s32 %s16, %s23
    %s79 = sor.u32 %s77, %s78
    %p80 = scmp.eq.s32.totalorder %s79, 0
    %s82 = sadd.s32 %s81, 1
    %s83 = scalar_select %p80, %s81, %s82
    %p86 = pneg %p80
    %p87 = scmp.eq.s32.totalorder %s8, 3
    %p88 = por %p86, %p87
    %p89 = scmp.ne.s32.totalorder %s81, %s84
    %p90 = scmp.eq.s32.totalorder %s8, 0
    %p91 = por %p89, %p90
    %p92 = scmp.ne.s32.totalorder %s81, %s84
    %p93 = scmp.eq.s32.totalorder %s13, 3
    %p94 = por %p92, %p93
    %p95 = scmp.ne.s32.totalorder %s84, %s85
    %p96 = scmp.eq.s32.totalorder %s13, 0
    %p97 = por %p95, %p96
    %p98 = scmp.ne.s32.totalorder %s84, %s85
    %p99 = scmp.eq.s32.totalorder %s14, 3
    %p100 = por %p98, %p99
    %p102 = scmp.ne.s32.totalorder %s85, %s101
    %p103 = scmp.eq.s32.totalorder %s14, 0
    %p104 = por %p102, %p103
    %p105 = scmp.le.s32.totalorder 1, %s8
    %p106 = scmp.lt.s32.totalorder %s8, 5
    %p107 = pnand %p105, %p106
    %p108 = pneg %p107
    // Predicated region
    $region9: #{double_conv.5} parent=5 // pred_check
      _
    $region10: #{double_conv.5} parent=5 // pred_check_branch
      %110 = sbr.rel (%p107) target = $region12
    $region11: #{double_conv.5} parent=5 // pred_region
      %s111 = ssub.s32 %s8, 1
      // Predicated region
      $region13: #{double_conv.5} parent=11 // pred_check
        %p112 = pneg %p69
      $region14: #{double_conv.5} parent=11 // pred_check_branch
        %114 = sbr.rel (%p112) target = $region16
      $region15: #{double_conv.5} parent=11 // pred_region
        _
      $region16: #{double_conv.5} parent=11 // pred_fallthru
        _
    $region12: #{double_conv.5} parent=5 // pred_fallthru
      _
    %p115 = scmp.lt.s32.totalorder %s8, 4
    // Predicated region
    $region17: #{double_conv.5} parent=5 // pred_check
      %p116 = pneg %p115
    $region18: #{double_conv.5} parent=5 // pred_check_branch
      %118 = sbr.rel (%p116) target = $region20
    $region19: #{double_conv.5} parent=5 // pred_region
      // Predicated region
      $region21: #{double_conv.5} parent=19 // pred_check
        %p119 = pneg %p42
      $region22: #{double_conv.5} parent=19 // pred_check_branch
        %121 = sbr.rel (%p119) target = $region24
      $region23: #{double_conv.5} parent=19 // pred_region
        %s122 = smul.u32 8, %s16
        %p123 = scmp.lt.s32.totalorder %s15, 1
        %s124 = scalar_select %p123, %s15, 1
        %p125 = scmp.lt.s32.totalorder %s122, 15
        %s126 = scalar_select %p125, %s122, 15
        %s127 = smul.addr %s126, 2
        %s128 = smul.addr %s124, 32
        %s129 = sadd.s32 %s127, %s128
        %s130 = smul.addr %s129, 8
        %s131 = scalar_lea.vmem %s0, %s130
        %s132 = smul.u32 8, %s16
      $region24: #{double_conv.5} parent=19 // pred_fallthru
        _
    $region20: #{double_conv.5} parent=5 // pred_fallthru
      _
    %p133 = scmp.le.s32.totalorder 1, %s8
    %p134 = scmp.lt.s32.totalorder %s8, 5
    %p135 = pnand %p133, %p134
    %p136 = pneg %p135
    // Predicated region
    $region25: #{double_conv.5} parent=5 // pred_check
      _
    $region26: #{double_conv.5} parent=5 // pred_check_branch
      %138 = sbr.rel (%p135) target = $region28
    $region27: #{double_conv.5} parent=5 // pred_region
      %s139 = ssub.s32 %s8, 1
      %s140 = smul.u32 8, %s18
      %p141 = scmp.lt.s32.totalorder %s17, 1
      %s142 = scalar_select %p141, %s17, 1
      %p143 = scmp.lt.s32.totalorder %s140, 15
      %s144 = scalar_select %p143, %s140, 15
      %s145 = smul.addr %s144, 2
      %s146 = smul.addr %s142, 32
      %s147 = sadd.s32 %s145, %s146
      %s148 = smul.addr %s147, 8
      %s149 = scalar_lea.vmem %s0, %s148
      %p150 = pneg %p48
      %p151 = pneg %p45
      %p152 = pneg %p69
      %p153 = pneg %p66
      %p154 = pneg %p97
      %p155 = pneg %p94
      %p156 = scmp.lt.s32.totalorder %s17, 1
      %s157 = scalar_select %p156, %s17, 1
      %p158 = scmp.lt.s32.totalorder %s18, 1
      %s159 = scalar_select %p158, %s18, 1
      %s160 = smul.addr %s157, 2
      %s161 = sadd.s32 %s159, %s160
      %s162 = smul.addr %s161, 8
      %s163 = scalar_lea.vmem %s2, %s162
      %s164 = smul.u32 8, %s18
      %p165 = scmp.lt.s32.totalorder %s17, 1
      %s166 = scalar_select %p165, %s17, 1
      %p167 = scmp.lt.s32.totalorder %s164, 15
      %s168 = scalar_select %p167, %s164, 15
      %s169 = smul.addr %s168, 2
      %s170 = smul.addr %s166, 32
      %s171 = sadd.s32 %s169, %s170
      %s172 = smul.addr %s171, 8
      %s173 = scalar_lea.vmem %s0, %s172
      %s174 = smul.u32 8, %s18
      %p175 = scmp.lt.s32.totalorder %s17, 1
      %s176 = scalar_select %p175, %s17, 1
      %p177 = scmp.lt.s32.totalorder %s18, 1
      %s178 = scalar_select %p177, %s18, 1
      %s179 = smul.addr %s176, 2
      %s180 = sadd.s32 %s178, %s179
      %s181 = smul.addr %s180, 8
      %s182 = scalar_lea.vmem %s2, %s181
      %v183 = vld [vmem:[%s173] sm:$0xff]
      %v184 = vld [vmem:[%s173 + $0x8] sm:$0xff]
      %v185 = vld [vmem:[%s173 + $0x10] sm:$0xff]
      %v186 = vld [vmem:[%s173 + $0x18] sm:$0xff]
      %v187 = vld [vmem:[%s173 + $0x20] sm:$0xff]
      %v188 = vld [vmem:[%s173 + $0x28] sm:$0xff]
      %v189 = vld [vmem:[%s173 + $0x30] sm:$0xff]
      %v190 = vld [vmem:[%s173 + $0x38] sm:$0xff]
      %v191 = vld [vmem:[%s173 + $0x40] sm:$0xff]
      %v192 = vld [vmem:[%s173 + $0x48] sm:$0xff]
      %v193 = vld [vmem:[%s173 + $0x50] sm:$0xff]
      %v194 = vld [vmem:[%s173 + $0x58] sm:$0xff]
      %v195 = vld [vmem:[%s173 + $0x60] sm:$0xff]
      %v196 = vld [vmem:[%s173 + $0x68] sm:$0xff]
      %v197 = vld [vmem:[%s173 + $0x70] sm:$0xff]
      %v198 = vld [vmem:[%s173 + $0x78] sm:$0xff]
      %v199 = vld [vmem:[%s1] sm:$0x1]
      %v200 = vperm.slane %v199, 0
      %v201 = vmul.f32 %v183, %v200
      %v202 = vmul.f32 %v184, %v200
      %v203 = vmul.f32 %v185, %v200
      %v204 = vmul.f32 %v186, %v200
      %v205 = vmul.f32 %v187, %v200
      %v206 = vmul.f32 %v188, %v200
      %v207 = vmul.f32 %v189, %v200
      %v208 = vmul.f32 %v190, %v200
      %v209 = vmul.f32 %v191, %v200
      %v210 = vmul.f32 %v192, %v200
      %v211 = vmul.f32 %v193, %v200
      %v212 = vmul.f32 %v194, %v200
      %v213 = vmul.f32 %v195, %v200
      %v214 = vmul.f32 %v196, %v200
      %v215 = vmul.f32 %v197, %v200
      %v216 = vmul.f32 %v198, %v200
      %v217 = vld [vmem:[%s1 + $0x1] sm:$0x1]
      %v218 = vperm.slane %v217, 0
      %v219 = vadd.f32 %v201, %v218
      %v220 = vadd.f32 %v202, %v218
      %v221 = vadd.f32 %v203, %v218
      %v222 = vadd.f32 %v204, %v218
      %v223 = vadd.f32 %v205, %v218
      %v224 = vadd.f32 %v206, %v218
      %v225 = vadd.f32 %v207, %v218
      %v226 = vadd.f32 %v208, %v218
      %v227 = vadd.f32 %v209, %v218
      %v228 = vadd.f32 %v210, %v218
      %v229 = vadd.f32 %v211, %v218
      %v230 = vadd.f32 %v212, %v218
      %v231 = vadd.f32 %v213, %v218
      %v232 = vadd.f32 %v214, %v218
      %v233 = vadd.f32 %v215, %v218
      %v234 = vadd.f32 %v216, %v218
      %v235 = vmax.f32 %v219, 0.0
      %v236 = vmax.f32 %v220, 0.0
      %v237 = vmax.f32 %v221, 0.0
      %v238 = vmax.f32 %v222, 0.0
      %v239 = vmax.f32 %v223, 0.0
      %v240 = vmax.f32 %v224, 0.0
      %v241 = vmax.f32 %v225, 0.0
      %v242 = vmax.f32 %v226, 0.0
      %v243 = vmax.f32 %v227, 0.0
      %v244 = vmax.f32 %v228, 0.0
      %v245 = vmax.f32 %v229, 0.0
      %v246 = vmax.f32 %v230, 0.0
      %v247 = vmax.f32 %v231, 0.0
      %v248 = vmax.f32 %v232, 0.0
      %v249 = vmax.f32 %v233, 0.0
      %v250 = vmax.f32 %v234, 0.0
      %251 = vxpose.xlu0.b32.start [1/16] %v235, 128
      %252 = vxpose.xlu0.b32.cont [2/16] %v236, 128
      %253 = vxpose.xlu0.b32.cont [3/16] %v237, 128
      %254 = vxpose.xlu0.b32.cont [4/16] %v238, 128
      %255 = vxpose.xlu0.b32.cont [5/16] %v239, 128
      %256 = vxpose.xlu0.b32.cont [6/16] %v240, 128
      %257 = vxpose.xlu0.b32.cont [7/16] %v241, 128
      %258 = vxpose.xlu0.b32.cont [8/16] %v242, 128
      %259 = vxpose.xlu0.b32.cont [9/16] %v243, 128
      %260 = vxpose.xlu0.b32.cont [10/16] %v244, 128
      %261 = vxpose.xlu0.b32.cont [11/16] %v245, 128
      %262 = vxpose.xlu0.b32.cont [12/16] %v246, 128
      %263 = vxpose.xlu0.b32.cont [13/16] %v247, 128
      %264 = vxpose.xlu0.b32.cont [14/16] %v248, 128
      %265 = vxpose.xlu0.b32.cont [15/16] %v249, 128
      %266 = vxpose.xlu0.b32.end [16/16] %v250, 128
      %v267 = vpop.trf.xlu0
      %v268 = vpop.trf.xlu0
      %v269 = vpop.trf.xlu0
      %v270 = vpop.trf.xlu0
      %v271 = vpop.trf.xlu0
      %v272 = vpop.trf.xlu0
      %v273 = vpop.trf.xlu0
      %v274 = vpop.trf.xlu0
      %v275 = vpop.trf.xlu0
      %v276 = vpop.trf.xlu0
      %v277 = vpop.trf.xlu0
      %v278 = vpop.trf.xlu0
      %v279 = vpop.trf.xlu0
      %v280 = vpop.trf.xlu0
      %v281 = vpop.trf.xlu0
      %v282 = vpop.trf.xlu0
      %283 = vst [vmem:[%s182] sm:$0xff] %v267
      %p284 = scmp.lt.s32.totalorder %s17, 1
      %s285 = scalar_select %p284, %s17, 1
      %p286 = scmp.lt.s32.totalorder %s18, 1
      %s287 = scalar_select %p286, %s18, 1
      %s288 = smul.addr %s285, 2
      %s289 = sadd.s32 %s287, %s288
      %s290 = smul.addr %s289, 8
      %s291 = scalar_lea.vmem %s2, %s290
      // Predicated region
      $region29: #{double_conv.5} parent=27 // pred_check
        %p292 = pneg %p94
      $region30: #{double_conv.5} parent=27 // pred_check_branch
        %294 = sbr.rel (%p292) target = $region32
      $region31: #{double_conv.5} parent=27 // pred_region
        _
      $region32: #{double_conv.5} parent=27 // pred_fallthru
        _
    $region28: #{double_conv.5} parent=5 // pred_fallthru
      _
    %p295 = scmp.le.s32.totalorder 2, %s8
    // Predicated region
    $region33: #{double_conv.5} parent=5 // pred_check
      %p296 = pneg %p295
    $region34: #{double_conv.5} parent=5 // pred_check_branch
      %298 = sbr.rel (%p296) target = $region36
    $region35: #{double_conv.5} parent=5 // pred_region
      %s299 = ssub.s32 %s8, 2
      // Predicated region
      $region37: #{double_conv.5} parent=35 // pred_check
        %p300 = pneg %p100
      $region38: #{double_conv.5} parent=35 // pred_check_branch
        %302 = sbr.rel (%p300) target = $region40
      $region39: #{double_conv.5} parent=35 // pred_region
        %p303 = scmp.lt.s32.totalorder %s19, 1
        %s304 = scalar_select %p303, %s19, 1
        %p305 = scmp.lt.s32.totalorder %s20, 1
        %s306 = scalar_select %p305, %s20, 1
        %s307 = smul.addr %s304, 2
        %s308 = sadd.s32 %s306, %s307
        %s309 = smul.addr %s308, 8
        %s310 = scalar_lea.vmem %s2, %s309
      $region40: #{double_conv.5} parent=35 // pred_fallthru
        _
    $region36: #{double_conv.5} parent=5 // pred_fallthru
      _
  $region6: #{double_conv.5} parent=0 // loop_footer
    %s12 = sadd.s32 1, %s8
  $region7: #{double_conv.5} parent=0 // loop_footer_branch
    %7 = sbr.rel target = $region3
  $region8: #{double_conv.5} parent=0 // loop_exit
    _

// kernel: double_conv.3
$region0: #{double_conv.3}
  #allocation0 [shape = 'u32[]', space=smem, size = 0x4, offset = 0x4, fixed_abs, tag = 'smem constant byte address 0x4 - core index']
  #allocation1 [shape = 'u32[72,128]{1,0:T(1,128)}', space=vmem, size = 0x9000, scoped, tag = 'internal scratch']
  #allocation2 [shape = 'f32[10,18,4]{2,1,0:T(8,128)}', space=vmem, size = 0x1e000, scoped, tag = 'scratch operand']
  %s0 = inlined_call_operand.vmem [shape: f32[2,16,16,4], index: 0, kind: input, shape index: {}, may-alias: {0,1,2}]
  %s1 = inlined_call_operand.vmem [shape: f32[2,16,16,4], index: 1, kind: input, shape index: {}, may-alias: {0,1,2}]
  %s2 = inlined_call_operand.vmem [shape: f32[2,16,16,4], index: 2, kind: input, shape index: {}, may-alias: {0,1,2}]
  %s3 = inlined_call_operand.vmem [shape: f32[36,8], index: 3, kind: input, shape index: {}]
  %s4 = inlined_call_operand.vmem [shape: f32[1,8], index: 4, kind: input, shape index: {}]
  %s5 = inlined_call_operand.vmem [shape: f32[2,16,16,8], index: 5, kind: output, shape index: {0}]
  %s6 = inlined_call_operand.vmem [shape: f32[4,1,8], index: 6, kind: output, shape index: {1}]
  %s7 = inlined_call_operand.vmem [shape: f32[4,1,8], index: 7, kind: output, shape index: {2}]
  %8 = xla_tuple %s5, %s6, %s7
  %s9 = sld [smem:[#allocation0]]
  $region69: #{double_conv.3} parent=0
    _
  %s11 = ssub.s32 1, %s9
  %s12 = scalar_select 0, %s11, %s9
  loop: start=0, step=1, limit=6
  $region2: #{double_conv.3} parent=0 // loop_pre_header
    _
  $region3: #{double_conv.3} parent=0 // loop_header
    %s14 = sphi 0, %s18
    %p15 = scmp.ge.s32.totalorder %s14, 6
    %s21 = sphi 0, %s33
    %s22 = sphi 0, %s29
    %s23 = sphi 0, %s21
    %s24 = sphi 0, %s22
    %s25 = sphi 0, %s23
    %s26 = sphi 0, %s24
    %s38 = sphi 0, %s40
    %s41 = sphi 0, %s38
    %s42 = sphi 0, %s41
    %s58 = sphi 0, %s42
    %s74 = sphi 0, %s76
    %s77 = sphi 0, %s74
    %s78 = sphi 0, %s77
    %s94 = sphi 0, %s78
    %s110 = sphi 0, %s112
    %s113 = sphi 0, %s110
    %s114 = sphi 0, %s113
    %s130 = sphi 0, %s114
    %s134 = sphi 0, %s134
    %s136 = sphi 0, %s134
    %s137 = sphi 0, %s136
    %s151 = sphi 0, %s137
    %s155 = sphi 0, %s155
    %s157 = sphi 0, %s155
    %s158 = sphi 0, %s157
    %s172 = sphi 0, %s158
    %s180 = sphi 0, %s182
    %s183 = sphi 0, %s180
    %s184 = sphi 0, %s183
    %s200 = sphi 0, %s184
    %s210 = sphi 0, %s212
    %s213 = sphi 0, %s210
    %s214 = sphi 0, %s213
    %s230 = sphi 0, %s214
    %s240 = sphi 0, %s242
    %s243 = sphi 0, %s240
    %s244 = sphi 0, %s243
    %s260 = sphi 0, %s244
  $region4: #{double_conv.3} parent=0 // loop_header_branch
    %17 = sbr.rel (%p15) target = $region8
  $region5: #{double_conv.3} parent=0 // loop_body
    %s19 = ssub.s32 %s14, 1
    %s20 = ssub.s32 %s14, 2
    %s27 = sadd.s32 1, %s22
    %p28 = scmp.ge.s32.totalorder %s27, 2
    %s29 = scalar_select %p28, 0, %s27
    %s30 = sadd.s32 1, %s21
    %s31 = scalar_select %p28, %s30, %s21
    %p32 = scmp.ge.s32.totalorder %s31, 2
    %s33 = scalar_select %p32, 0, %s31
    %s34 = ssub.s32 %s21, %s33
    %s35 = ssub.s32 %s22, %s29
    %s36 = sor.u32 %s34, %s35
    %p37 = scmp.eq.s32.totalorder %s36, 0
    %s39 = sadd.s32 %s38, 1
    %s40 = scalar_select %p37, %s38, %s39
    %p43 = pneg %p37
    %p44 = scmp.eq.s32.totalorder %s14, 3
    %p45 = por %p43, %p44
    %p46 = scmp.ne.s32.totalorder %s38, %s41
    %p47 = scmp.eq.s32.totalorder %s14, 0
    %p48 = por %p46, %p47
    %p49 = scmp.ne.s32.totalorder %s38, %s41
    %p50 = scmp.eq.s32.totalorder %s19, 3
    %p51 = por %p49, %p50
    %p52 = scmp.ne.s32.totalorder %s41, %s42
    %p53 = scmp.eq.s32.totalorder %s19, 0
    %p54 = por %p52, %p53
    %p55 = scmp.ne.s32.totalorder %s41, %s42
    %p56 = scmp.eq.s32.totalorder %s20, 3
    %p57 = por %p55, %p56
    %p59 = scmp.ne.s32.totalorder %s42, %s58
    %p60 = scmp.eq.s32.totalorder %s20, 0
    %p61 = por %p59, %p60
    %s62 = smul.u32 %s22, 8
    %s63 = ssub.s32 %s62, 1
    %p64 = scmp.gt.s32.totalorder %s63, 0
    %s65 = scalar_select %p64, %s63, 0
    %s66 = smul.u32 %s29, 8
    %s67 = ssub.s32 %s66, 1
    %p68 = scmp.gt.s32.totalorder %s67, 0
    %s69 = scalar_select %p68, %s67, 0
    %s70 = ssub.s32 %s21, %s33
    %s71 = ssub.s32 %s65, %s69
    %s72 = sor.u32 %s70, %s71
    %p73 = scmp.eq.s32.totalorder %s72, 0
    %s75 = sadd.s32 %s74, 1
    %s76 = scalar_select %p73, %s74, %s75
    %p79 = pneg %p73
    %p80 = scmp.eq.s32.totalorder %s14, 3
    %p81 = por %p79, %p80
    %p82 = scmp.ne.s32.totalorder %s74, %s77
    %p83 = scmp.eq.s32.totalorder %s14, 0
    %p84 = por %p82, %p83
    %p85 = scmp.ne.s32.totalorder %s74, %s77
    %p86 = scmp.eq.s32.totalorder %s19, 3
    %p87 = por %p85, %p86
    %p88 = scmp.ne.s32.totalorder %s77, %s78
    %p89 = scmp.eq.s32.totalorder %s19, 0
    %p90 = por %p88, %p89
    %p91 = scmp.ne.s32.totalorder %s77, %s78
    %p92 = scmp.eq.s32.totalorder %s20, 3
    %p93 = por %p91, %p92
    %p95 = scmp.ne.s32.totalorder %s78, %s94
    %p96 = scmp.eq.s32.totalorder %s20, 0
    %p97 = por %p95, %p96
    %s98 = sadd.s32 %s22, 1
    %s99 = smul.u32 %s98, 8
    %p100 = scmp.lt.s32.totalorder %s99, 15
    %s101 = scalar_select %p100, %s99, 15
    %s102 = sadd.s32 %s29, 1
    %s103 = smul.u32 %s102, 8
    %p104 = scmp.lt.s32.totalorder %s103, 15
    %s105 = scalar_select %p104, %s103, 15
    %s106 = ssub.s32 %s21, %s33
    %s107 = ssub.s32 %s101, %s105
    %s108 = sor.u32 %s106, %s107
    %p109 = scmp.eq.s32.totalorder %s108, 0
    %s111 = sadd.s32 %s110, 1
    %s112 = scalar_select %p109, %s110, %s111
    %p115 = pneg %p109
    %p116 = scmp.eq.s32.totalorder %s14, 3
    %p117 = por %p115, %p116
    %p118 = scmp.ne.s32.totalorder %s110, %s113
    %p119 = scmp.eq.s32.totalorder %s14, 0
    %p120 = por %p118, %p119
    %p121 = scmp.ne.s32.totalorder %s110, %s113
    %p122 = scmp.eq.s32.totalorder %s19, 3
    %p123 = por %p121, %p122
    %p124 = scmp.ne.s32.totalorder %s113, %s114
    %p125 = scmp.eq.s32.totalorder %s19, 0
    %p126 = por %p124, %p125
    %p127 = scmp.ne.s32.totalorder %s113, %s114
    %p128 = scmp.eq.s32.totalorder %s20, 3
    %p129 = por %p127, %p128
    %p131 = scmp.ne.s32.totalorder %s114, %s130
    %p132 = scmp.eq.s32.totalorder %s20, 0
    %p133 = por %p131, %p132
    %s135 = sadd.s32 %s134, 1
    %p138 = scmp.eq.s32.totalorder %s14, 3
    %p139 = scmp.ne.s32.totalorder %s134, %s136
    %p140 = scmp.eq.s32.totalorder %s14, 0
    %p141 = por %p139, %p140
    %p142 = scmp.ne.s32.totalorder %s134, %s136
    %p143 = scmp.eq.s32.totalorder %s19, 3
    %p144 = por %p142, %p143
    %p145 = scmp.ne.s32.totalorder %s136, %s137
    %p146 = scmp.eq.s32.totalorder %s19, 0
    %p147 = por %p145, %p146
    %p148 = scmp.ne.s32.totalorder %s136, %s137
    %p149 = scmp.eq.s32.totalorder %s20, 3
    %p150 = por %p148, %p149
    %p152 = scmp.ne.s32.totalorder %s137, %s151
    %p153 = scmp.eq.s32.totalorder %s20, 0
    %p154 = por %p152, %p153
    %s156 = sadd.s32 %s155, 1
    %p159 = scmp.eq.s32.totalorder %s14, 3
    %p160 = scmp.ne.s32.totalorder %s155, %s157
    %p161 = scmp.eq.s32.totalorder %s14, 0
    %p162 = por %p160, %p161
    %p163 = scmp.ne.s32.totalorder %s155, %s157
    %p164 = scmp.eq.s32.totalorder %s19, 3
    %p165 = por %p163, %p164
    %p166 = scmp.ne.s32.totalorder %s157, %s158
    %p167 = scmp.eq.s32.totalorder %s19, 0
    %p168 = por %p166, %p167
    %p169 = scmp.ne.s32.totalorder %s157, %s158
    %p170 = scmp.eq.s32.totalorder %s20, 3
    %p171 = por %p169, %p170
    %p173 = scmp.ne.s32.totalorder %s158, %s172
    %p174 = scmp.eq.s32.totalorder %s20, 0
    %p175 = por %p173, %p174
    %s176 = ssub.s32 %s21, %s33
    %s177 = ssub.s32 %s22, %s29
    %s178 = sor.u32 %s176, %s177
    %p179 = scmp.eq.s32.totalorder %s178, 0
    %s181 = sadd.s32 %s180, 1
    %s182 = scalar_select %p179, %s180, %s181
    %p185 = pneg %p179
    %p186 = scmp.eq.s32.totalorder %s14, 3
    %p187 = por %p185, %p186
    %p188 = scmp.ne.s32.totalorder %s180, %s183
    %p189 = scmp.eq.s32.totalorder %s14, 0
    %p190 = por %p188, %p189
    %p191 = scmp.ne.s32.totalorder %s180, %s183
    %p192 = scmp.eq.s32.totalorder %s19, 3
    %p193 = por %p191, %p192
    %p194 = scmp.ne.s32.totalorder %s183, %s184
    %p195 = scmp.eq.s32.totalorder %s19, 0
    %p196 = por %p194, %p195
    %p197 = scmp.ne.s32.totalorder %s183, %s184
    %p198 = scmp.eq.s32.totalorder %s20, 3
    %p199 = por %p197, %p198
    %p201 = scmp.ne.s32.totalorder %s184, %s200
    %p202 = scmp.eq.s32.totalorder %s20, 0
    %p203 = por %p201, %p202
    %s204 = smul.u32 %s21, 2
    %s205 = sadd.s32 %s204, %s22
    %s206 = smul.u32 %s33, 2
    %s207 = sadd.s32 %s206, %s29
    %s208 = ssub.s32 %s205, %s207
    %p209 = scmp.eq.s32.totalorder %s208, 0
    %s211 = sadd.s32 %s210, 1
    %s212 = scalar_select %p209, %s210, %s211
    %p215 = pneg %p209
    %p216 = scmp.eq.s32.totalorder %s14, 3
    %p217 = por %p215, %p216
    %p218 = scmp.ne.s32.totalorder %s210, %s213
    %p219 = scmp.eq.s32.totalorder %s14, 0
    %p220 = por %p218, %p219
    %p221 = scmp.ne.s32.totalorder %s210, %s213
    %p222 = scmp.eq.s32.totalorder %s19, 3
    %p223 = por %p221, %p222
    %p224 = scmp.ne.s32.totalorder %s213, %s214
    %p225 = scmp.eq.s32.totalorder %s19, 0
    %p226 = por %p224, %p225
    %p227 = scmp.ne.s32.totalorder %s213, %s214
    %p228 = scmp.eq.s32.totalorder %s20, 3
    %p229 = por %p227, %p228
    %p231 = scmp.ne.s32.totalorder %s214, %s230
    %p232 = scmp.eq.s32.totalorder %s20, 0
    %p233 = por %p231, %p232
    %s234 = smul.u32 %s21, 2
    %s235 = sadd.s32 %s234, %s22
    %s236 = smul.u32 %s33, 2
    %s237 = sadd.s32 %s236, %s29
    %s238 = ssub.s32 %s235, %s237
    %p239 = scmp.eq.s32.totalorder %s238, 0
    %s241 = sadd.s32 %s240, 1
    %s242 = scalar_select %p239, %s240, %s241
    %p245 = pneg %p239
    %p246 = scmp.eq.s32.totalorder %s14, 3
    %p247 = por %p245, %p246
    %p248 = scmp.ne.s32.totalorder %s240, %s243
    %p249 = scmp.eq.s32.totalorder %s14, 0
    %p250 = por %p248, %p249
    %p251 = scmp.ne.s32.totalorder %s240, %s243
    %p252 = scmp.eq.s32.totalorder %s19, 3
    %p253 = por %p251, %p252
    %p254 = scmp.ne.s32.totalorder %s243, %s244
    %p255 = scmp.eq.s32.totalorder %s19, 0
    %p256 = por %p254, %p255
    %p257 = scmp.ne.s32.totalorder %s243, %s244
    %p258 = scmp.eq.s32.totalorder %s20, 3
    %p259 = por %p257, %p258
    %p261 = scmp.ne.s32.totalorder %s244, %s260
    %p262 = scmp.eq.s32.totalorder %s20, 0
    %p263 = por %p261, %p262
    %p264 = scmp.le.s32.totalorder 1, %s14
    %p265 = scmp.lt.s32.totalorder %s14, 5
    %p266 = pnand %p264, %p265
    %p267 = pneg %p266
    // Predicated region
    $region9: #{double_conv.3} parent=5 // pred_check
      _
    $region10: #{double_conv.3} parent=5 // pred_check_branch
      %269 = sbr.rel (%p266) target = $region12
    $region11: #{double_conv.3} parent=5 // pred_region
      %s270 = ssub.s32 %s14, 1
      // Predicated region
      $region13: #{double_conv.3} parent=11 // pred_check
        %p271 = pneg %p147
      $region14: #{double_conv.3} parent=11 // pred_check_branch
        %273 = sbr.rel (%p271) target = $region16
      $region15: #{double_conv.3} parent=11 // pred_region
        _
      $region16: #{double_conv.3} parent=11 // pred_fallthru
        _
      // Predicated region
      $region17: #{double_conv.3} parent=11 // pred_check
        %p274 = pneg %p168
      $region18: #{double_conv.3} parent=11 // pred_check_branch
        %276 = sbr.rel (%p274) target = $region20
      $region19: #{double_conv.3} parent=11 // pred_region
        _
      $region20: #{double_conv.3} parent=11 // pred_fallthru
        _
    $region12: #{double_conv.3} parent=5 // pred_fallthru
      _
    %p277 = scmp.lt.s32.totalorder %s14, 4
    // Predicated region
    $region21: #{double_conv.3} parent=5 // pred_check
      %p278 = pneg %p277
    $region22: #{double_conv.3} parent=5 // pred_check_branch
      %280 = sbr.rel (%p278) target = $region24
    $region23: #{double_conv.3} parent=5 // pred_region
      // Predicated region
      $region25: #{double_conv.3} parent=23 // pred_check
        %p281 = pneg %p48
      $region26: #{double_conv.3} parent=23 // pred_check_branch
        %283 = sbr.rel (%p281) target = $region28
      $region27: #{double_conv.3} parent=23 // pred_region
        %s284 = smul.u32 8, %s22
        %p285 = scmp.lt.s32.totalorder %s21, 1
        %s286 = scalar_select %p285, %s21, 1
        %p287 = scmp.lt.s32.totalorder %s284, 15
        %s288 = scalar_select %p287, %s284, 15
        %s289 = smul.addr %s288, 2
        %s290 = smul.addr %s286, 32
        %s291 = sadd.s32 %s289, %s290
        %s292 = smul.addr %s291, 8
        %s293 = scalar_lea.vmem %s0, %s292
        %s294 = smul.u32 8, %s22
      $region28: #{double_conv.3} parent=23 // pred_fallthru
        _
      // Predicated region
      $region29: #{double_conv.3} parent=23 // pred_check
        %p295 = pneg %p84
      $region30: #{double_conv.3} parent=23 // pred_check_branch
        %297 = sbr.rel (%p295) target = $region32
      $region31: #{double_conv.3} parent=23 // pred_region
        %s298 = smul.u32 %s22, 8
        %s299 = ssub.s32 %s298, 1
        %p300 = scmp.gt.s32.totalorder %s299, 0
        %s301 = scalar_select %p300, %s299, 0
        %p302 = scmp.lt.s32.totalorder %s21, 1
        %s303 = scalar_select %p302, %s21, 1
        %p304 = scmp.lt.s32.totalorder %s301, 15
        %s305 = scalar_select %p304, %s301, 15
        %s306 = smul.addr %s305, 2
        %s307 = smul.addr %s303, 32
        %s308 = sadd.s32 %s306, %s307
        %s309 = smul.addr %s308, 8
        %s310 = scalar_lea.vmem %s1, %s309
        %s311 = smul.u32 %s22, 8
        %s312 = ssub.s32 %s311, 1
        %p313 = scmp.gt.s32.totalorder %s312, 0
        %s314 = scalar_select %p313, %s312, 0
      $region32: #{double_conv.3} parent=23 // pred_fallthru
        _
      // Predicated region
      $region33: #{double_conv.3} parent=23 // pred_check
        %p315 = pneg %p120
      $region34: #{double_conv.3} parent=23 // pred_check_branch
        %317 = sbr.rel (%p315) target = $region36
      $region35: #{double_conv.3} parent=23 // pred_region
        %s318 = sadd.s32 %s22, 1
        %s319 = smul.u32 %s318, 8
        %p320 = scmp.lt.s32.totalorder %s319, 15
        %s321 = scalar_select %p320, %s319, 15
        %p322 = scmp.lt.s32.totalorder %s21, 1
        %s323 = scalar_select %p322, %s21, 1
        %p324 = scmp.lt.s32.totalorder %s321, 15
        %s325 = scalar_select %p324, %s321, 15
        %s326 = smul.addr %s325, 2
        %s327 = smul.addr %s323, 32
        %s328 = sadd.s32 %s326, %s327
        %s329 = smul.addr %s328, 8
        %s330 = scalar_lea.vmem %s2, %s329
        %s331 = sadd.s32 %s22, 1
        %s332 = smul.u32 %s331, 8
        %p333 = scmp.lt.s32.totalorder %s332, 15
        %s334 = scalar_select %p333, %s332, 15
      $region36: #{double_conv.3} parent=23 // pred_fallthru
        _
    $region24: #{double_conv.3} parent=5 // pred_fallthru
      _
    %p335 = scmp.le.s32.totalorder 1, %s14
    %p336 = scmp.lt.s32.totalorder %s14, 5
    %p337 = pnand %p335, %p336
    %p338 = pneg %p337
    // Predicated region
    $region37: #{double_conv.3} parent=5 // pred_check
      _
    $region38: #{double_conv.3} parent=5 // pred_check_branch
      %340 = sbr.rel (%p337) target = $region40
    $region39: #{double_conv.3} parent=5 // pred_region
      %s341 = ssub.s32 %s14, 1
      %s342 = smul.u32 8, %s24
      %p343 = scmp.lt.s32.totalorder %s23, 1
      %s344 = scalar_select %p343, %s23, 1
      %p345 = scmp.lt.s32.totalorder %s342, 15
      %s346 = scalar_select %p345, %s342, 15
      %s347 = smul.addr %s346, 2
      %s348 = smul.addr %s344, 32
      %s349 = sadd.s32 %s347, %s348
      %s350 = smul.addr %s349, 8
      %s351 = scalar_lea.vmem %s0, %s350
      %p352 = pneg %p54
      %p353 = pneg %p51
      %s354 = smul.u32 %s24, 8
      %s355 = ssub.s32 %s354, 1
      %p356 = scmp.gt.s32.totalorder %s355, 0
      %s357 = scalar_select %p356, %s355, 0
      %p358 = scmp.lt.s32.totalorder %s23, 1
      %s359 = scalar_select %p358, %s23, 1
      %p360 = scmp.lt.s32.totalorder %s357, 15
      %s361 = scalar_select %p360, %s357, 15
      %s362 = smul.addr %s361, 2
      %s363 = smul.addr %s359, 32
      %s364 = sadd.s32 %s362, %s363
      %s365 = smul.addr %s364, 8
      %s366 = scalar_lea.vmem %s1, %s365
      %p367 = pneg %p90
      %p368 = pneg %p87
      %s369 = sadd.s32 %s24, 1
      %s370 = smul.u32 %s369, 8
      %p371 = scmp.lt.s32.totalorder %s370, 15
      %s372 = scalar_select %p371, %s370, 15
      %p373 = scmp.lt.s32.totalorder %s23, 1
      %s374 = scalar_select %p373, %s23, 1
      %p375 = scmp.lt.s32.totalorder %s372, 15
      %s376 = scalar_select %p375, %s372, 15
      %s377 = smul.addr %s376, 2
      %s378 = smul.addr %s374, 32
      %s379 = sadd.s32 %s377, %s378
      %s380 = smul.addr %s379, 8
      %s381 = scalar_lea.vmem %s2, %s380
      %p382 = pneg %p126
      %p383 = pneg %p123
      %p384 = pneg %p147
      %p385 = pneg %p144
      %p386 = pneg %p168
      %p387 = pneg %p165
      %p388 = pneg %p196
      %p389 = pneg %p193
      %s390 = smul.u32 8, %s24
      %p391 = scmp.lt.s32.totalorder %s23, 1
      %s392 = scalar_select %p391, %s23, 1
      %p393 = scmp.lt.s32.totalorder %s390, 15
      %s394 = scalar_select %p393, %s390, 15
      %s395 = smul.addr %s394, 2
      %s396 = smul.addr %s392, 32
      %s397 = sadd.s32 %s395, %s396
      %s398 = smul.addr %s397, 8
      %s399 = scalar_lea.vmem %s5, %s398
      %p400 = pneg %p226
      %p401 = pneg %p223
      %s402 = smul.u32 %s23, 2
      %s403 = sadd.s32 %s402, %s24
      %p404 = scmp.lt.s32.totalorder %s403, 3
      %s405 = scalar_select %p404, %s403, 3
      %s406 = scalar_lea.vmem %s6, %s405
      %p407 = pneg %p256
      %p408 = pneg %p253
      %s409 = smul.u32 %s23, 2
      %s410 = sadd.s32 %s409, %s24
      %p411 = scmp.lt.s32.totalorder %s410, 3
      %s412 = scalar_select %p411, %s410, 3
      %s413 = scalar_lea.vmem %s7, %s412
      %s414 = smul.u32 8, %s24
      %p415 = scmp.lt.s32.totalorder %s23, 1
      %s416 = scalar_select %p415, %s23, 1
      %p417 = scmp.lt.s32.totalorder %s414, 15
      %s418 = scalar_select %p417, %s414, 15
      %s419 = smul.addr %s418, 2
      %s420 = smul.addr %s416, 32
      %s421 = sadd.s32 %s419, %s420
      %s422 = smul.addr %s421, 8
      %s423 = scalar_lea.vmem %s0, %s422
      %s424 = smul.u32 8, %s24
      %s425 = smul.u32 %s24, 8
      %s426 = ssub.s32 %s425, 1
      %p427 = scmp.gt.s32.totalorder %s426, 0
      %s428 = scalar_select %p427, %s426, 0
      %p429 = scmp.lt.s32.totalorder %s23, 1
      %s430 = scalar_select %p429, %s23, 1
      %p431 = scmp.lt.s32.totalorder %s428, 15
      %s432 = scalar_select %p431, %s428, 15
      %s433 = smul.addr %s432, 2
      %s434 = smul.addr %s430, 32
      %s435 = sadd.s32 %s433, %s434
      %s436 = smul.addr %s435, 8
      %s437 = scalar_lea.vmem %s1, %s436
      %s438 = smul.u32 %s24, 8
      %s439 = ssub.s32 %s438, 1
      %p440 = scmp.gt.s32.totalorder %s439, 0
      %s441 = scalar_select %p440, %s439, 0
      %s442 = sadd.s32 %s24, 1
      %s443 = smul.u32 %s442, 8
      %p444 = scmp.lt.s32.totalorder %s443, 15
      %s445 = scalar_select %p444, %s443, 15
      %p446 = scmp.lt.s32.totalorder %s23, 1
      %s447 = scalar_select %p446, %s23, 1
      %p448 = scmp.lt.s32.totalorder %s445, 15
      %s449 = scalar_select %p448, %s445, 15
      %s450 = smul.addr %s449, 2
      %s451 = smul.addr %s447, 32
      %s452 = sadd.s32 %s450, %s451
      %s453 = smul.addr %s452, 8
      %s454 = scalar_lea.vmem %s2, %s453
      %s455 = sadd.s32 %s24, 1
      %s456 = smul.u32 %s455, 8
      %p457 = scmp.lt.s32.totalorder %s456, 15
      %s458 = scalar_select %p457, %s456, 15
      %s459 = smul.u32 8, %s24
      %p460 = scmp.lt.s32.totalorder %s23, 1
      %s461 = scalar_select %p460, %s23, 1
      %p462 = scmp.lt.s32.totalorder %s459, 15
      %s463 = scalar_select %p462, %s459, 15
      %s464 = smul.addr %s463, 2
      %s465 = smul.addr %s461, 32
      %s466 = sadd.s32 %s464, %s465
      %s467 = smul.addr %s466, 8
      %s468 = scalar_lea.vmem %s5, %s467
      %s469 = smul.u32 8, %s24
      %s470 = smul.u32 %s23, 2
      %s471 = sadd.s32 %s470, %s24
      %p472 = scmp.lt.s32.totalorder %s471, 3
      %s473 = scalar_select %p472, %s471, 3
      %s474 = scalar_lea.vmem %s6, %s473
      %s475 = smul.u32 %s23, 2
      %s476 = sadd.s32 %s475, %s24
      %s477 = smul.u32 %s23, 2
      %s478 = sadd.s32 %s477, %s24
      %p479 = scmp.lt.s32.totalorder %s478, 3
      %s480 = scalar_select %p479, %s478, 3
      %s481 = scalar_lea.vmem %s7, %s480
      %s482 = smul.u32 %s23, 2
      %s483 = sadd.s32 %s482, %s24
      %v484 = vld [vmem:[%s423] sm:$0xff]
      %v485 = vld [vmem:[%s423 + $0x8] sm:$0xff]
      %v486 = vld [vmem:[%s423 + $0x10] sm:$0xff]
      %v487 = vld [vmem:[%s423 + $0x18] sm:$0xff]
      %v488 = vld [vmem:[%s423 + $0x20] sm:$0xff]
      %v489 = vld [vmem:[%s423 + $0x28] sm:$0xff]
      %v490 = vld [vmem:[%s423 + $0x30] sm:$0xff]
      %v491 = vld [vmem:[%s423 + $0x38] sm:$0xff]
      %v492 = vld [vmem:[%s423 + $0x40] sm:$0xff]
      %v493 = vld [vmem:[%s423 + $0x48] sm:$0xff]
      %v494 = vld [vmem:[%s423 + $0x50] sm:$0xff]
      %v495 = vld [vmem:[%s423 + $0x58] sm:$0xff]
      %v496 = vld [vmem:[%s423 + $0x60] sm:$0xff]
      %v497 = vld [vmem:[%s423 + $0x68] sm:$0xff]
      %v498 = vld [vmem:[%s423 + $0x70] sm:$0xff]
      %v499 = vld [vmem:[%s423 + $0x78] sm:$0xff]
      %v500 = vld [vmem:[%s437] sm:$0xff]
      %v501 = vld [vmem:[%s437 + $0x8] sm:$0xff]
      %v502 = vld [vmem:[%s454] sm:$0xff]
      %v503 = vld [vmem:[%s454 + $0x8] sm:$0xff]
      %p504 = scmp.gt.s32.totalorder %s24, 0
      %s505 = scalar_select %p504, 1, 0
      %v506 = vstv %s505
      %vm507 = vcmp.eq.s32.totalorder %v506, 1
      %v508 = vsel %vm507, %v500, 0.0
      %v509 = vsel %vm507, %v501, 0.0
      %p510 = scmp.lt.s32.totalorder %s24, 1
      %s511 = scalar_select %p510, 1, 0
      %v512 = vstv %s511
      %vm513 = vcmp.eq.s32.totalorder %v512, 1
      %v514 = vsel %vm513, %v502, 0.0
      %v515 = vsel %vm513, %v503, 0.0
      %vm516 = vcmask 24576
      %517 = vst.msk [vmem:[#allocation2] sm:$0x1] %vm516, 0.0
      %518 = vst.msk [vmem:[#allocation2 + $0x18] sm:$0x1] %vm516, 0.0
      %519 = vst.msk [vmem:[#allocation2 + $0x30] sm:$0x1] %vm516, 0.0
      %520 = vst.msk [vmem:[#allocation2 + $0x48] sm:$0x1] %vm516, 0.0
      %521 = vst.msk [vmem:[#allocation2 + $0x60] sm:$0x1] %vm516, 0.0
      %522 = vst.msk [vmem:[#allocation2 + $0x78] sm:$0x1] %vm516, 0.0
      %523 = vst.msk [vmem:[#allocation2 + $0x90] sm:$0x1] %vm516, 0.0
      %524 = vst.msk [vmem:[#allocation2 + $0xa8] sm:$0x1] %vm516, 0.0
      %525 = vst.msk [vmem:[#allocation2 + $0xc0] sm:$0x1] %vm516, 0.0
      %526 = vst.msk [vmem:[#allocation2 + $0xd8] sm:$0x1] %vm516, 0.0
      %527 = vst.msk [vmem:[#allocation2 + $0x11] sm:$0x1] %vm516, 0.0
      %528 = vst.msk [vmem:[#allocation2 + $0x29] sm:$0x1] %vm516, 0.0
      %529 = vst.msk [vmem:[#allocation2 + $0x41] sm:$0x1] %vm516, 0.0
      %530 = vst.msk [vmem:[#allocation2 + $0x59] sm:$0x1] %vm516, 0.0
      %531 = vst.msk [vmem:[#allocation2 + $0x71] sm:$0x1] %vm516, 0.0
      %532 = vst.msk [vmem:[#allocation2 + $0x89] sm:$0x1] %vm516, 0.0
      %533 = vst.msk [vmem:[#allocation2 + $0xa1] sm:$0x1] %vm516, 0.0
      %534 = vst.msk [vmem:[#allocation2 + $0xb9] sm:$0x1] %vm516, 0.0
      %535 = vst.msk [vmem:[#allocation2 + $0xd1] sm:$0x1] %vm516, 0.0
      %536 = vst.msk [vmem:[#allocation2 + $0xe9] sm:$0x1] %vm516, 0.0
      %vm537 = vcmask 31744
      %538 = vst.msk [vmem:[#allocation2 + $0x1] sm:$0xff] %vm537, %v508
      %539 = vst.msk [vmem:[#allocation2 + $0x9] sm:$0xff] %vm537, %v509
      %s540 = scalar_lea.vmem [#allocation2], 216
      %541 = vst.msk [vmem:[%s540 + $0x1] sm:$0xff] %vm537, %v514
      %542 = vst.msk [vmem:[%s540 + $0x9] sm:$0xff] %vm537, %v515
      %s543 = scalar_lea.vmem [#allocation2], 24
      %544 = vst.msk [vmem:[%s543 + $0x1] sm:$0xff] %vm537, %v484
      %545 = vst.msk [vmem:[%s543 + $0x9] sm:$0xff] %vm537, %v485
      %546 = vst.msk [vmem:[%s543 + $0x19] sm:$0xff] %vm537, %v486
      %547 = vst.msk [vmem:[%s543 + $0x21] sm:$0xff] %vm537, %v487
      %548 = vst.msk [vmem:[%s543 + $0x31] sm:$0xff] %vm537, %v488
      %549 = vst.msk [vmem:[%s543 + $0x39] sm:$0xff] %vm537, %v489
      %550 = vst.msk [vmem:[%s543 + $0x49] sm:$0xff] %vm537, %v490
      %551 = vst.msk [vmem:[%s543 + $0x51] sm:$0xff] %vm537, %v491
      %552 = vst.msk [vmem:[%s543 + $0x61] sm:$0xff] %vm537, %v492
      %553 = vst.msk [vmem:[%s543 + $0x69] sm:$0xff] %vm537, %v493
      %554 = vst.msk [vmem:[%s543 + $0x79] sm:$0xff] %vm537, %v494
      %555 = vst.msk [vmem:[%s543 + $0x81] sm:$0xff] %vm537, %v495
      %556 = vst.msk [vmem:[%s543 + $0x91] sm:$0xff] %vm537, %v496
      %557 = vst.msk [vmem:[%s543 + $0x99] sm:$0xff] %vm537, %v497
      %558 = vst.msk [vmem:[%s543 + $0xa9] sm:$0xff] %vm537, %v498
      %559 = vst.msk [vmem:[%s543 + $0xb1] sm:$0xff] %vm537, %v499
      %v560 = vld [vmem:[#allocation2] sm:$0xff]
      %v561 = vld [vmem:[#allocation2 + $0x8] sm:$0xff]
      %v562 = vld [vmem:[#allocation2 + $0x18] sm:$0xff]
      %v563 = vld [vmem:[#allocation2 + $0x20] sm:$0xff]
      %v564 = vld [vmem:[#allocation2 + $0x30] sm:$0xff]
      %v565 = vld [vmem:[#allocation2 + $0x38] sm:$0xff]
      %v566 = vld [vmem:[#allocation2 + $0x48] sm:$0xff]
      %v567 = vld [vmem:[#allocation2 + $0x50] sm:$0xff]
      %v568 = vld [vmem:[#allocation2 + $0x60] sm:$0xff]
      %v569 = vld [vmem:[#allocation2 + $0x68] sm:$0xff]
      %v570 = vld [vmem:[#allocation2 + $0x78] sm:$0xff]
      %v571 = vld [vmem:[#allocation2 + $0x80] sm:$0xff]
      %v572 = vld [vmem:[#allocation2 + $0x90] sm:$0xff]
      %v573 = vld [vmem:[#allocation2 + $0x98] sm:$0xff]
      %v574 = vld [vmem:[#allocation2 + $0xa8] sm:$0xff]
      %v575 = vld [vmem:[#allocation2 + $0xb0] sm:$0xff]
      %v576 = vld [vmem:[#allocation2 + $0x1] sm:$0xff]
      %v577 = vld [vmem:[#allocation2 + $0x9] sm:$0xff]
      %v578 = vld [vmem:[#allocation2 + $0x19] sm:$0xff]
      %v579 = vld [vmem:[#allocation2 + $0x21] sm:$0xff]
      %v580 = vld [vmem:[#allocation2 + $0x31] sm:$0xff]
      %v581 = vld [vmem:[#allocation2 + $0x39] sm:$0xff]
      %v582 = vld [vmem:[#allocation2 + $0x49] sm:$0xff]
      %v583 = vld [vmem:[#allocation2 + $0x51] sm:$0xff]
      %v584 = vld [vmem:[#allocation2 + $0x61] sm:$0xff]
      %v585 = vld [vmem:[#allocation2 + $0x69] sm:$0xff]
      %v586 = vld [vmem:[#allocation2 + $0x79] sm:$0xff]
      %v587 = vld [vmem:[#allocation2 + $0x81] sm:$0xff]
      %v588 = vld [vmem:[#allocation2 + $0x91] sm:$0xff]
      %v589 = vld [vmem:[#allocation2 + $0x99] sm:$0xff]
      %v590 = vld [vmem:[#allocation2 + $0xa9] sm:$0xff]
      %v591 = vld [vmem:[#allocation2 + $0xb1] sm:$0xff]
      %v592 = vld [vmem:[#allocation2 + $0x2] sm:$0xff]
      %v593 = vld [vmem:[#allocation2 + $0xa] sm:$0xff]
      %v594 = vld [vmem:[#allocation2 + $0x1a] sm:$0xff]
      %v595 = vld [vmem:[#allocation2 + $0x22] sm:$0xff]
      %v596 = vld [vmem:[#allocation2 + $0x32] sm:$0xff]
      %v597 = vld [vmem:[#allocation2 + $0x3a] sm:$0xff]
      %v598 = vld [vmem:[#allocation2 + $0x4a] sm:$0xff]
      %v599 = vld [vmem:[#allocation2 + $0x52] sm:$0xff]
      %v600 = vld [vmem:[#allocation2 + $0x62] sm:$0xff]
      %v601 = vld [vmem:[#allocation2 + $0x6a] sm:$0xff]
      %v602 = vld [vmem:[#allocation2 + $0x7a] sm:$0xff]
      %v603 = vld [vmem:[#allocation2 + $0x82] sm:$0xff]
      %v604 = vld [vmem:[#allocation2 + $0x92] sm:$0xff]
      %v605 = vld [vmem:[#allocation2 + $0x9a] sm:$0xff]
      %v606 = vld [vmem:[#allocation2 + $0xaa] sm:$0xff]
      %v607 = vld [vmem:[#allocation2 + $0xb2] sm:$0xff]
      %v608 = vld [vmem:[%s543] sm:$0xff]
      %v609 = vld [vmem:[%s543 + $0x8] sm:$0xff]
      %v610 = vld [vmem:[%s543 + $0x18] sm:$0xff]
      %v611 = vld [vmem:[%s543 + $0x20] sm:$0xff]
      %v612 = vld [vmem:[%s543 + $0x30] sm:$0xff]
      %v613 = vld [vmem:[%s543 + $0x38] sm:$0xff]
      %v614 = vld [vmem:[%s543 + $0x48] sm:$0xff]
      %v615 = vld [vmem:[%s543 + $0x50] sm:$0xff]
      %v616 = vld [vmem:[%s543 + $0x60] sm:$0xff]
      %v617 = vld [vmem:[%s543 + $0x68] sm:$0xff]
      %v618 = vld [vmem:[%s543 + $0x78] sm:$0xff]
      %v619 = vld [vmem:[%s543 + $0x80] sm:$0xff]
      %v620 = vld [vmem:[%s543 + $0x90] sm:$0xff]
      %v621 = vld [vmem:[%s543 + $0x98] sm:$0xff]
      %v622 = vld [vmem:[%s543 + $0xa8] sm:$0xff]
      %v623 = vld [vmem:[%s543 + $0xb0] sm:$0xff]
      %v624 = vld [vmem:[%s543 + $0x1] sm:$0xff]
      %v625 = vld [vmem:[%s543 + $0x9] sm:$0xff]
      %v626 = vld [vmem:[%s543 + $0x19] sm:$0xff]
      %v627 = vld [vmem:[%s543 + $0x21] sm:$0xff]
      %v628 = vld [vmem:[%s543 + $0x31] sm:$0xff]
      %v629 = vld [vmem:[%s543 + $0x39] sm:$0xff]
      %v630 = vld [vmem:[%s543 + $0x49] sm:$0xff]
      %v631 = vld [vmem:[%s543 + $0x51] sm:$0xff]
      %v632 = vld [vmem:[%s543 + $0x61] sm:$0xff]
      %v633 = vld [vmem:[%s543 + $0x69] sm:$0xff]
      %v634 = vld [vmem:[%s543 + $0x79] sm:$0xff]
      %v635 = vld [vmem:[%s543 + $0x81] sm:$0xff]
      %v636 = vld [vmem:[%s543 + $0x91] sm:$0xff]
      %v637 = vld [vmem:[%s543 + $0x99] sm:$0xff]
      %v638 = vld [vmem:[%s543 + $0xa9] sm:$0xff]
      %v639 = vld [vmem:[%s543 + $0xb1] sm:$0xff]
      %v640 = vld [vmem:[%s543 + $0x2] sm:$0xff]
      %v641 = vld [vmem:[%s543 + $0xa] sm:$0xff]
      %v642 = vld [vmem:[%s543 + $0x1a] sm:$0xff]
      %v643 = vld [vmem:[%s543 + $0x22] sm:$0xff]
      %v644 = vld [vmem:[%s543 + $0x32] sm:$0xff]
      %v645 = vld [vmem:[%s543 + $0x3a] sm:$0xff]
      %v646 = vld [vmem:[%s543 + $0x4a] sm:$0xff]
      %v647 = vld [vmem:[%s543 + $0x52] sm:$0xff]
      %v648 = vld [vmem:[%s543 + $0x62] sm:$0xff]
      %v649 = vld [vmem:[%s543 + $0x6a] sm:$0xff]
      %v650 = vld [vmem:[%s543 + $0x7a] sm:$0xff]
      %v651 = vld [vmem:[%s543 + $0x82] sm:$0xff]
      %v652 = vld [vmem:[%s543 + $0x92] sm:$0xff]
      %v653 = vld [vmem:[%s543 + $0x9a] sm:$0xff]
      %v654 = vld [vmem:[%s543 + $0xaa] sm:$0xff]
      %v655 = vld [vmem:[%s543 + $0xb2] sm:$0xff]
      %s656 = scalar_lea.vmem [#allocation2], 48
      %v657 = vld [vmem:[%s656] sm:$0xff]
      %v658 = vld [vmem:[%s656 + $0x8] sm:$0xff]
      %v659 = vld [vmem:[%s656 + $0x18] sm:$0xff]
      %v660 = vld [vmem:[%s656 + $0x20] sm:$0xff]
      %v661 = vld [vmem:[%s656 + $0x30] sm:$0xff]
      %v662 = vld [vmem:[%s656 + $0x38] sm:$0xff]
      %v663 = vld [vmem:[%s656 + $0x48] sm:$0xff]
      %v664 = vld [vmem:[%s656 + $0x50] sm:$0xff]
      %v665 = vld [vmem:[%s656 + $0x60] sm:$0xff]
      %v666 = vld [vmem:[%s656 + $0x68] sm:$0xff]
      %v667 = vld [vmem:[%s656 + $0x78] sm:$0xff]
      %v668 = vld [vmem:[%s656 + $0x80] sm:$0xff]
      %v669 = vld [vmem:[%s656 + $0x90] sm:$0xff]
      %v670 = vld [vmem:[%s656 + $0x98] sm:$0xff]
      %v671 = vld [vmem:[%s656 + $0xa8] sm:$0xff]
      %v672 = vld [vmem:[%s656 + $0xb0] sm:$0xff]
      %v673 = vld [vmem:[%s656 + $0x1] sm:$0xff]
      %v674 = vld [vmem:[%s656 + $0x9] sm:$0xff]
      %v675 = vld [vmem:[%s656 + $0x19] sm:$0xff]
      %v676 = vld [vmem:[%s656 + $0x21] sm:$0xff]
      %v677 = vld [vmem:[%s656 + $0x31] sm:$0xff]
      %v678 = vld [vmem:[%s656 + $0x39] sm:$0xff]
      %v679 = vld [vmem:[%s656 + $0x49] sm:$0xff]
      %v680 = vld [vmem:[%s656 + $0x51] sm:$0xff]
      %v681 = vld [vmem:[%s656 + $0x61] sm:$0xff]
      %v682 = vld [vmem:[%s656 + $0x69] sm:$0xff]
      %v683 = vld [vmem:[%s656 + $0x79] sm:$0xff]
      %v684 = vld [vmem:[%s656 + $0x81] sm:$0xff]
      %v685 = vld [vmem:[%s656 + $0x91] sm:$0xff]
      %v686 = vld [vmem:[%s656 + $0x99] sm:$0xff]
      %v687 = vld [vmem:[%s656 + $0xa9] sm:$0xff]
      %v688 = vld [vmem:[%s656 + $0xb1] sm:$0xff]
      %v689 = vld [vmem:[%s656 + $0x2] sm:$0xff]
      %v690 = vld [vmem:[%s656 + $0xa] sm:$0xff]
      %v691 = vld [vmem:[%s656 + $0x1a] sm:$0xff]
      %v692 = vld [vmem:[%s656 + $0x22] sm:$0xff]
      %v693 = vld [vmem:[%s656 + $0x32] sm:$0xff]
      %v694 = vld [vmem:[%s656 + $0x3a] sm:$0xff]
      %v695 = vld [vmem:[%s656 + $0x4a] sm:$0xff]
      %v696 = vld [vmem:[%s656 + $0x52] sm:$0xff]
      %v697 = vld [vmem:[%s656 + $0x62] sm:$0xff]
      %v698 = vld [vmem:[%s656 + $0x6a] sm:$0xff]
      %v699 = vld [vmem:[%s656 + $0x7a] sm:$0xff]
      %v700 = vld [vmem:[%s656 + $0x82] sm:$0xff]
      %v701 = vld [vmem:[%s656 + $0x92] sm:$0xff]
      %v702 = vld [vmem:[%s656 + $0x9a] sm:$0xff]
      %v703 = vld [vmem:[%s656 + $0xaa] sm:$0xff]
      %v704 = vld [vmem:[%s656 + $0xb2] sm:$0xff]
      %721 = vrot.lane.b32.xlu0 %v576, 4
      %v722 = vpop.permute.xlu0 %721
      %723 = vrot.lane.b32.xlu0 %v577, 4
      %v724 = vpop.permute.xlu0 %723
      %725 = vrot.lane.b32.xlu0 %v578, 4
      %v726 = vpop.permute.xlu0 %725
      %727 = vrot.lane.b32.xlu0 %v579, 4
      %v728 = vpop.permute.xlu0 %727
      %729 = vrot.lane.b32.xlu0 %v580, 4
      %v730 = vpop.permute.xlu0 %729
      %731 = vrot.lane.b32.xlu0 %v581, 4
      %v732 = vpop.permute.xlu0 %731
      %733 = vrot.lane.b32.xlu0 %v582, 4
      %v734 = vpop.permute.xlu0 %733
      %735 = vrot.lane.b32.xlu0 %v583, 4
      %v736 = vpop.permute.xlu0 %735
      %737 = vrot.lane.b32.xlu0 %v584, 4
      %v738 = vpop.permute.xlu0 %737
      %739 = vrot.lane.b32.xlu0 %v585, 4
      %v740 = vpop.permute.xlu0 %739
      %741 = vrot.lane.b32.xlu0 %v586, 4
      %v742 = vpop.permute.xlu0 %741
      %743 = vrot.lane.b32.xlu0 %v587, 4
      %v744 = vpop.permute.xlu0 %743
      %745 = vrot.lane.b32.xlu0 %v588, 4
      %v746 = vpop.permute.xlu0 %745
      %747 = vrot.lane.b32.xlu0 %v589, 4
      %v748 = vpop.permute.xlu0 %747
      %749 = vrot.lane.b32.xlu0 %v590, 4
      %v750 = vpop.permute.xlu0 %749
      %751 = vrot.lane.b32.xlu0 %v591, 4
      %v752 = vpop.permute.xlu0 %751
      %785 = vrot.lane.b32.xlu0 %v592, 8
      %v786 = vpop.permute.xlu0 %785
      %787 = vrot.lane.b32.xlu0 %v593, 8
      %v788 = vpop.permute.xlu0 %787
      %789 = vrot.lane.b32.xlu0 %v594, 8
      %v790 = vpop.permute.xlu0 %789
      %791 = vrot.lane.b32.xlu0 %v595, 8
      %v792 = vpop.permute.xlu0 %791
      %793 = vrot.lane.b32.xlu0 %v596, 8
      %v794 = vpop.permute.xlu0 %793
      %795 = vrot.lane.b32.xlu0 %v597, 8
      %v796 = vpop.permute.xlu0 %795
      %797 = vrot.lane.b32.xlu0 %v598, 8
      %v798 = vpop.permute.xlu0 %797
      %799 = vrot.lane.b32.xlu0 %v599, 8
      %v800 = vpop.permute.xlu0 %799
      %801 = vrot.lane.b32.xlu0 %v600, 8
      %v802 = vpop.permute.xlu0 %801
      %803 = vrot.lane.b32.xlu0 %v601, 8
      %v804 = vpop.permute.xlu0 %803
      %805 = vrot.lane.b32.xlu0 %v602, 8
      %v806 = vpop.permute.xlu0 %805
      %807 = vrot.lane.b32.xlu0 %v603, 8
      %v808 = vpop.permute.xlu0 %807
      %809 = vrot.lane.b32.xlu0 %v604, 8
      %v810 = vpop.permute.xlu0 %809
      %811 = vrot.lane.b32.xlu0 %v605, 8
      %v812 = vpop.permute.xlu0 %811
      %813 = vrot.lane.b32.xlu0 %v606, 8
      %v814 = vpop.permute.xlu0 %813
      %815 = vrot.lane.b32.xlu0 %v607, 8
      %v816 = vpop.permute.xlu0 %815
      %849 = vrot.lane.b32.xlu0 %v608, 12
      %v850 = vpop.permute.xlu0 %849
      %851 = vrot.lane.b32.xlu0 %v609, 12
      %v852 = vpop.permute.xlu0 %851
      %853 = vrot.lane.b32.xlu0 %v610, 12
      %v854 = vpop.permute.xlu0 %853
      %855 = vrot.lane.b32.xlu0 %v611, 12
      %v856 = vpop.permute.xlu0 %855
      %857 = vrot.lane.b32.xlu0 %v612, 12
      %v858 = vpop.permute.xlu0 %857
      %859 = vrot.lane.b32.xlu0 %v613, 12
      %v860 = vpop.permute.xlu0 %859
      %861 = vrot.lane.b32.xlu0 %v614, 12
      %v862 = vpop.permute.xlu0 %861
      %863 = vrot.lane.b32.xlu0 %v615, 12
      %v864 = vpop.permute.xlu0 %863
      %865 = vrot.lane.b32.xlu0 %v616, 12
      %v866 = vpop.permute.xlu0 %865
      %867 = vrot.lane.b32.xlu0 %v617, 12
      %v868 = vpop.permute.xlu0 %867
      %869 = vrot.lane.b32.xlu0 %v618, 12
      %v870 = vpop.permute.xlu0 %869
      %871 = vrot.lane.b32.xlu0 %v619, 12
      %v872 = vpop.permute.xlu0 %871
      %873 = vrot.lane.b32.xlu0 %v620, 12
      %v874 = vpop.permute.xlu0 %873
      %875 = vrot.lane.b32.xlu0 %v621, 12
      %v876 = vpop.permute.xlu0 %875
      %877 = vrot.lane.b32.xlu0 %v622, 12
      %v878 = vpop.permute.xlu0 %877
      %879 = vrot.lane.b32.xlu0 %v623, 12
      %v880 = vpop.permute.xlu0 %879
      %913 = vrot.lane.b32.xlu0 %v624, 16
      %v914 = vpop.permute.xlu0 %913
      %915 = vrot.lane.b32.xlu0 %v625, 16
      %v916 = vpop.permute.xlu0 %915
      %917 = vrot.lane.b32.xlu0 %v626, 16
      %v918 = vpop.permute.xlu0 %917
      %919 = vrot.lane.b32.xlu0 %v627, 16
      %v920 = vpop.permute.xlu0 %919
      %921 = vrot.lane.b32.xlu0 %v628, 16
      %v922 = vpop.permute.xlu0 %921
      %923 = vrot.lane.b32.xlu0 %v629, 16
      %v924 = vpop.permute.xlu0 %923
      %925 = vrot.lane.b32.xlu0 %v630, 16
      %v926 = vpop.permute.xlu0 %925
      %927 = vrot.lane.b32.xlu0 %v631, 16
      %v928 = vpop.permute.xlu0 %927
      %929 = vrot.lane.b32.xlu0 %v632, 16
      %v930 = vpop.permute.xlu0 %929
      %931 = vrot.lane.b32.xlu0 %v633, 16
      %v932 = vpop.permute.xlu0 %931
      %933 = vrot.lane.b32.xlu0 %v634, 16
      %v934 = vpop.permute.xlu0 %933
      %935 = vrot.lane.b32.xlu0 %v635, 16
      %v936 = vpop.permute.xlu0 %935
      %937 = vrot.lane.b32.xlu0 %v636, 16
      %v938 = vpop.permute.xlu0 %937
      %939 = vrot.lane.b32.xlu0 %v637, 16
      %v940 = vpop.permute.xlu0 %939
      %941 = vrot.lane.b32.xlu0 %v638, 16
      %v942 = vpop.permute.xlu0 %941
      %943 = vrot.lane.b32.xlu0 %v639, 16
      %v944 = vpop.permute.xlu0 %943
      %977 = vrot.lane.b32.xlu0 %v640, 20
      %v978 = vpop.permute.xlu0 %977
      %979 = vrot.lane.b32.xlu0 %v641, 20
      %v980 = vpop.permute.xlu0 %979
      %981 = vrot.lane.b32.xlu0 %v642, 20
      %v982 = vpop.permute.xlu0 %981
      %983 = vrot.lane.b32.xlu0 %v643, 20
      %v984 = vpop.permute.xlu0 %983
      %985 = vrot.lane.b32.xlu0 %v644, 20
      %v986 = vpop.permute.xlu0 %985
      %987 = vrot.lane.b32.xlu0 %v645, 20
      %v988 = vpop.permute.xlu0 %987
      %989 = vrot.lane.b32.xlu0 %v646, 20
      %v990 = vpop.permute.xlu0 %989
      %991 = vrot.lane.b32.xlu0 %v647, 20
      %v992 = vpop.permute.xlu0 %991
      %993 = vrot.lane.b32.xlu0 %v648, 20
      %v994 = vpop.permute.xlu0 %993
      %995 = vrot.lane.b32.xlu0 %v649, 20
      %v996 = vpop.permute.xlu0 %995
      %997 = vrot.lane.b32.xlu0 %v650, 20
      %v998 = vpop.permute.xlu0 %997
      %999 = vrot.lane.b32.xlu0 %v651, 20
      %v1000 = vpop.permute.xlu0 %999
      %1001 = vrot.lane.b32.xlu0 %v652, 20
      %v1002 = vpop.permute.xlu0 %1001
      %1003 = vrot.lane.b32.xlu0 %v653, 20
      %v1004 = vpop.permute.xlu0 %1003
      %1005 = vrot.lane.b32.xlu0 %v654, 20
      %v1006 = vpop.permute.xlu0 %1005
      %1007 = vrot.lane.b32.xlu0 %v655, 20
      %v1008 = vpop.permute.xlu0 %1007
      %1041 = vrot.lane.b32.xlu0 %v657, 24
      %v1042 = vpop.permute.xlu0 %1041
      %1043 = vrot.lane.b32.xlu0 %v658, 24
      %v1044 = vpop.permute.xlu0 %1043
      %1045 = vrot.lane.b32.xlu0 %v659, 24
      %v1046 = vpop.permute.xlu0 %1045
      %1047 = vrot.lane.b32.xlu0 %v660, 24
      %v1048 = vpop.permute.xlu0 %1047
      %1049 = vrot.lane.b32.xlu0 %v661, 24
      %v1050 = vpop.permute.xlu0 %1049
      %1051 = vrot.lane.b32.xlu0 %v662, 24
      %v1052 = vpop.permute.xlu0 %1051
      %1053 = vrot.lane.b32.xlu0 %v663, 24
      %v1054 = vpop.permute.xlu0 %1053
      %1055 = vrot.lane.b32.xlu0 %v664, 24
      %v1056 = vpop.permute.xlu0 %1055
      %1057 = vrot.lane.b32.xlu0 %v665, 24
      %v1058 = vpop.permute.xlu0 %1057
      %1059 = vrot.lane.b32.xlu0 %v666, 24
      %v1060 = vpop.permute.xlu0 %1059
      %1061 = vrot.lane.b32.xlu0 %v667, 24
      %v1062 = vpop.permute.xlu0 %1061
      %1063 = vrot.lane.b32.xlu0 %v668, 24
      %v1064 = vpop.permute.xlu0 %1063
      %1065 = vrot.lane.b32.xlu0 %v669, 24
      %v1066 = vpop.permute.xlu0 %1065
      %1067 = vrot.lane.b32.xlu0 %v670, 24
      %v1068 = vpop.permute.xlu0 %1067
      %1069 = vrot.lane.b32.xlu0 %v671, 24
      %v1070 = vpop.permute.xlu0 %1069
      %1071 = vrot.lane.b32.xlu0 %v672, 24
      %v1072 = vpop.permute.xlu0 %1071
      %1105 = vrot.lane.b32.xlu0 %v673, 28
      %v1106 = vpop.permute.xlu0 %1105
      %1107 = vrot.lane.b32.xlu0 %v674, 28
      %v1108 = vpop.permute.xlu0 %1107
      %1109 = vrot.lane.b32.xlu0 %v675, 28
      %v1110 = vpop.permute.xlu0 %1109
      %1111 = vrot.lane.b32.xlu0 %v676, 28
      %v1112 = vpop.permute.xlu0 %1111
      %1113 = vrot.lane.b32.xlu0 %v677, 28
      %v1114 = vpop.permute.xlu0 %1113
      %1115 = vrot.lane.b32.xlu0 %v678, 28
      %v1116 = vpop.permute.xlu0 %1115
      %1117 = vrot.lane.b32.xlu0 %v679, 28
      %v1118 = vpop.permute.xlu0 %1117
      %1119 = vrot.lane.b32.xlu0 %v680, 28
      %v1120 = vpop.permute.xlu0 %1119
      %1121 = vrot.lane.b32.xlu0 %v681, 28
      %v1122 = vpop.permute.xlu0 %1121
      %1123 = vrot.lane.b32.xlu0 %v682, 28
      %v1124 = vpop.permute.xlu0 %1123
      %1125 = vrot.lane.b32.xlu0 %v683, 28
      %v1126 = vpop.permute.xlu0 %1125
      %1127 = vrot.lane.b32.xlu0 %v684, 28
      %v1128 = vpop.permute.xlu0 %1127
      %1129 = vrot.lane.b32.xlu0 %v685, 28
      %v1130 = vpop.permute.xlu0 %1129
      %1131 = vrot.lane.b32.xlu0 %v686, 28
      %v1132 = vpop.permute.xlu0 %1131
      %1133 = vrot.lane.b32.xlu0 %v687, 28
      %v1134 = vpop.permute.xlu0 %1133
      %1135 = vrot.lane.b32.xlu0 %v688, 28
      %v1136 = vpop.permute.xlu0 %1135
      %1169 = vrot.lane.b32.xlu0 %v689, 32
      %v1170 = vpop.permute.xlu0 %1169
      %1171 = vrot.lane.b32.xlu0 %v690, 32
      %v1172 = vpop.permute.xlu0 %1171
      %1173 = vrot.lane.b32.xlu0 %v691, 32
      %v1174 = vpop.permute.xlu0 %1173
      %1175 = vrot.lane.b32.xlu0 %v692, 32
      %v1176 = vpop.permute.xlu0 %1175
      %1177 = vrot.lane.b32.xlu0 %v693, 32
      %v1178 = vpop.permute.xlu0 %1177
      %1179 = vrot.lane.b32.xlu0 %v694, 32
      %v1180 = vpop.permute.xlu0 %1179
      %1181 = vrot.lane.b32.xlu0 %v695, 32
      %v1182 = vpop.permute.xlu0 %1181
      %1183 = vrot.lane.b32.xlu0 %v696, 32
      %v1184 = vpop.permute.xlu0 %1183
      %1185 = vrot.lane.b32.xlu0 %v697, 32
      %v1186 = vpop.permute.xlu0 %1185
      %1187 = vrot.lane.b32.xlu0 %v698, 32
      %v1188 = vpop.permute.xlu0 %1187
      %1189 = vrot.lane.b32.xlu0 %v699, 32
      %v1190 = vpop.permute.xlu0 %1189
      %1191 = vrot.lane.b32.xlu0 %v700, 32
      %v1192 = vpop.permute.xlu0 %1191
      %1193 = vrot.lane.b32.xlu0 %v701, 32
      %v1194 = vpop.permute.xlu0 %1193
      %1195 = vrot.lane.b32.xlu0 %v702, 32
      %v1196 = vpop.permute.xlu0 %1195
      %1197 = vrot.lane.b32.xlu0 %v703, 32
      %v1198 = vpop.permute.xlu0 %1197
      %1199 = vrot.lane.b32.xlu0 %v704, 32
      %v1200 = vpop.permute.xlu0 %1199
      %v1217 = vsel %vm537, %v560, %v722
      %v1218 = vsel %vm537, %v561, %v724
      %v1219 = vsel %vm537, %v562, %v726
      %v1220 = vsel %vm537, %v563, %v728
      %v1221 = vsel %vm537, %v564, %v730
      %v1222 = vsel %vm537, %v565, %v732
      %v1223 = vsel %vm537, %v566, %v734
      %v1224 = vsel %vm537, %v567, %v736
      %v1225 = vsel %vm537, %v568, %v738
      %v1226 = vsel %vm537, %v569, %v740
      %v1227 = vsel %vm537, %v570, %v742
      %v1228 = vsel %vm537, %v571, %v744
      %v1229 = vsel %vm537, %v572, %v746
      %v1230 = vsel %vm537, %v573, %v748
      %v1231 = vsel %vm537, %v574, %v750
      %v1232 = vsel %vm537, %v575, %v752
      %vm1233 = vcmask 64512
      %v1234 = vsel %vm1233, %v1217, %v786
      %v1235 = vsel %vm1233, %v1218, %v788
      %v1236 = vsel %vm1233, %v1219, %v790
      %v1237 = vsel %vm1233, %v1220, %v792
      %v1238 = vsel %vm1233, %v1221, %v794
      %v1239 = vsel %vm1233, %v1222, %v796
      %v1240 = vsel %vm1233, %v1223, %v798
      %v1241 = vsel %vm1233, %v1224, %v800
      %v1242 = vsel %vm1233, %v1225, %v802
      %v1243 = vsel %vm1233, %v1226, %v804
      %v1244 = vsel %vm1233, %v1227, %v806
      %v1245 = vsel %vm1233, %v1228, %v808
      %v1246 = vsel %vm1233, %v1229, %v810
      %v1247 = vsel %vm1233, %v1230, %v812
      %v1248 = vsel %vm1233, %v1231, %v814
      %v1249 = vsel %vm1233, %v1232, %v816
      %vm1250 = vcmask 97280
      %v1251 = vsel %vm1250, %v1234, %v850
      %v1252 = vsel %vm1250, %v1235, %v852
      %v1253 = vsel %vm1250, %v1236, %v854
      %v1254 = vsel %vm1250, %v1237, %v856
      %v1255 = vsel %vm1250, %v1238, %v858
      %v1256 = vsel %vm1250, %v1239, %v860
      %v1257 = vsel %vm1250, %v1240, %v862
      %v1258 = vsel %vm1250, %v1241, %v864
      %v1259 = vsel %vm1250, %v1242, %v866
      %v1260 = vsel %vm1250, %v1243, %v868
      %v1261 = vsel %vm1250, %v1244, %v870
      %v1262 = vsel %vm1250, %v1245, %v872
      %v1263 = vsel %vm1250, %v1246, %v874
      %v1264 = vsel %vm1250, %v1247, %v876
      %v1265 = vsel %vm1250, %v1248, %v878
      %v1266 = vsel %vm1250, %v1249, %v880
      %vm1267 = vcmask 130048
      %v1268 = vsel %vm1267, %v1251, %v914
      %v1269 = vsel %vm1267, %v1252, %v916
      %v1270 = vsel %vm1267, %v1253, %v918
      %v1271 = vsel %vm1267, %v1254, %v920
      %v1272 = vsel %vm1267, %v1255, %v922
      %v1273 = vsel %vm1267, %v1256, %v924
      %v1274 = vsel %vm1267, %v1257, %v926
      %v1275 = vsel %vm1267, %v1258, %v928
      %v1276 = vsel %vm1267, %v1259, %v930
      %v1277 = vsel %vm1267, %v1260, %v932
      %v1278 = vsel %vm1267, %v1261, %v934
      %v1279 = vsel %vm1267, %v1262, %v936
      %v1280 = vsel %vm1267, %v1263, %v938
      %v1281 = vsel %vm1267, %v1264, %v940
      %v1282 = vsel %vm1267, %v1265, %v942
      %v1283 = vsel %vm1267, %v1266, %v944
      %vm1284 = vcmask 162816
      %v1285 = vsel %vm1284, %v1268, %v978
      %v1286 = vsel %vm1284, %v1269, %v980
      %v1287 = vsel %vm1284, %v1270, %v982
      %v1288 = vsel %vm1284, %v1271, %v984
      %v1289 = vsel %vm1284, %v1272, %v986
      %v1290 = vsel %vm1284, %v1273, %v988
      %v1291 = vsel %vm1284, %v1274, %v990
      %v1292 = vsel %vm1284, %v1275, %v992
      %v1293 = vsel %vm1284, %v1276, %v994
      %v1294 = vsel %vm1284, %v1277, %v996
      %v1295 = vsel %vm1284, %v1278, %v998
      %v1296 = vsel %vm1284, %v1279, %v1000
      %v1297 = vsel %vm1284, %v1280, %v1002
      %v1298 = vsel %vm1284, %v1281, %v1004
      %v1299 = vsel %vm1284, %v1282, %v1006
      %v1300 = vsel %vm1284, %v1283, %v1008
      %vm1301 = vcmask 195584
      %v1302 = vsel %vm1301, %v1285, %v1042
      %v1303 = vsel %vm1301, %v1286, %v1044
      %v1304 = vsel %vm1301, %v1287, %v1046
      %v1305 = vsel %vm1301, %v1288, %v1048
      %v1306 = vsel %vm1301, %v1289, %v1050
      %v1307 = vsel %vm1301, %v1290, %v1052
      %v1308 = vsel %vm1301, %v1291, %v1054
      %v1309 = vsel %vm1301, %v1292, %v1056
      %v1310 = vsel %vm1301, %v1293, %v1058
      %v1311 = vsel %vm1301, %v1294, %v1060
      %v1312 = vsel %vm1301, %v1295, %v1062
      %v1313 = vsel %vm1301, %v1296, %v1064
      %v1314 = vsel %vm1301, %v1297, %v1066
      %v1315 = vsel %vm1301, %v1298, %v1068
      %v1316 = vsel %vm1301, %v1299, %v1070
      %v1317 = vsel %vm1301, %v1300, %v1072
      %vm1318 = vcmask 228352
      %v1319 = vsel %vm1318, %v1302, %v1106
      %v1320 = vsel %vm1318, %v1303, %v1108
      %v1321 = vsel %vm1318, %v1304, %v1110
      %v1322 = vsel %vm1318, %v1305, %v1112
      %v1323 = vsel %vm1318, %v1306, %v1114
      %v1324 = vsel %vm1318, %v1307, %v1116
      %v1325 = vsel %vm1318, %v1308, %v1118
      %v1326 = vsel %vm1318, %v1309, %v1120
      %v1327 = vsel %vm1318, %v1310, %v1122
      %v1328 = vsel %vm1318, %v1311, %v1124
      %v1329 = vsel %vm1318, %v1312, %v1126
      %v1330 = vsel %vm1318, %v1313, %v1128
      %v1331 = vsel %vm1318, %v1314, %v1130
      %v1332 = vsel %vm1318, %v1315, %v1132
      %v1333 = vsel %vm1318, %v1316, %v1134
      %v1334 = vsel %vm1318, %v1317, %v1136
      %vm1335 = vcmask 261120
      %v1336 = vsel %vm1335, %v1319, %v1170
      %v1337 = vsel %vm1335, %v1320, %v1172
      %v1338 = vsel %vm1335, %v1321, %v1174
      %v1339 = vsel %vm1335, %v1322, %v1176
      %v1340 = vsel %vm1335, %v1323, %v1178
      %v1341 = vsel %vm1335, %v1324, %v1180
      %v1342 = vsel %vm1335, %v1325, %v1182
      %v1343 = vsel %vm1335, %v1326, %v1184
      %v1344 = vsel %vm1335, %v1327, %v1186
      %v1345 = vsel %vm1335, %v1328, %v1188
      %v1346 = vsel %vm1335, %v1329, %v1190
      %v1347 = vsel %vm1335, %v1330, %v1192
      %v1348 = vsel %vm1335, %v1331, %v1194
      %v1349 = vsel %vm1335, %v1332, %v1196
      %v1350 = vsel %vm1335, %v1333, %v1198
      %v1351 = vsel %vm1335, %v1334, %v1200
      %v1352 = vld [vmem:[%s3] sm:$0xff]
      %v1353 = vld [vmem:[%s3 + $0x8] sm:$0xff]
      %v1354 = vld [vmem:[%s3 + $0x10] sm:$0xff]
      %v1355 = vld [vmem:[%s3 + $0x18] sm:$0xff]
      %v1356 = vld [vmem:[%s3 + $0x20] sm:$0xf]
      %v1357 = vld [vmem:[%s4] sm:$0x1]
      %v1359 = vperm.slane %v1357, 0
      %vm1361 = vcmask 293888
      %v1363 = vsel %vm1361, %v1336, 0
      %v1366 = vsel %vm1361, %v1337, 0
      %v1369 = vsel %vm1361, %v1338, 0
      %v1372 = vsel %vm1361, %v1339, 0
      %v1375 = vsel %vm1361, %v1340, 0
      %v1378 = vsel %vm1361, %v1341, 0
      %v1381 = vsel %vm1361, %v1342, 0
      %v1384 = vsel %vm1361, %v1343, 0
      %v1387 = vsel %vm1361, %v1344, 0
      %v1390 = vsel %vm1361, %v1345, 0
      %v1393 = vsel %vm1361, %v1346, 0
      %v1396 = vsel %vm1361, %v1347, 0
      %v1399 = vsel %vm1361, %v1348, 0
      %v1402 = vsel %vm1361, %v1349, 0
      %v1405 = vsel %vm1361, %v1350, 0
      %v1408 = vsel %vm1361, %v1351, 0
      %vm1410 = vcmask 1043456
      %v1412 = vsel %vm1410, %v1356, 0
      %1414 = vmatpush.msra.mxu0 0.0
      %1415 = vmatpush.msra.mxu0 0.0
      %1416 = vmatpush.msra.mxu0 0.0
      %1417 = vmatpush.msra.mxu0 0.0
      %1418 = vmatpush.msra.mxu0 0.0
      %1419 = vmatpush.msra.mxu0 0.0
      %1420 = vmatpush.msra.mxu0 0.0
      %1421 = vmatpush.msra.mxu0 0.0
      %1422 = vmatpush.msra.mxu0 0.0
      %1423 = vmatpush.msra.mxu0 0.0
      %1424 = vmatpush.msra.mxu0 0.0
      %1425 = vmatpush.msra.mxu0 %v1412
      %1426 = vmatpush.msra.mxu0 %v1355
      %1427 = vmatpush.msra.mxu0 %v1354
      %1428 = vmatpush.msra.mxu0 %v1353
      %1429 = vmatpush.msra.mxu0 %v1352
      %1430 = vmatmul.f32.gmra.mxu0 %v1363
      %v1431 = vpop.f32.mrf.mxu0
      %v1432 = vadd.f32 %v1359, %v1431
      %1433 = vmatmul.f32.gmra.mxu0 %v1366
      %v1434 = vpop.f32.mrf.mxu0
      %v1435 = vadd.f32 %v1359, %v1434
      %1436 = vmatmul.f32.gmra.mxu0 %v1369
      %v1437 = vpop.f32.mrf.mxu0
      %v1438 = vadd.f32 %v1359, %v1437
      %1439 = vmatmul.f32.gmra.mxu0 %v1372
      %v1440 = vpop.f32.mrf.mxu0
      %v1441 = vadd.f32 %v1359, %v1440
      %1442 = vmatmul.f32.gmra.mxu0 %v1375
      %v1443 = vpop.f32.mrf.mxu0
      %v1444 = vadd.f32 %v1359, %v1443
      %1445 = vmatmul.f32.gmra.mxu0 %v1378
      %v1446 = vpop.f32.mrf.mxu0
      %v1447 = vadd.f32 %v1359, %v1446
      %1448 = vmatmul.f32.gmra.mxu0 %v1381
      %v1449 = vpop.f32.mrf.mxu0
      %v1450 = vadd.f32 %v1359, %v1449
      %1451 = vmatmul.f32.gmra.mxu0 %v1384
      %v1452 = vpop.f32.mrf.mxu0
      %v1453 = vadd.f32 %v1359, %v1452
      %1454 = vmatmul.f32.gmra.mxu0 %v1387
      %v1455 = vpop.f32.mrf.mxu0
      %v1456 = vadd.f32 %v1359, %v1455
      %1457 = vmatmul.f32.gmra.mxu0 %v1390
      %v1458 = vpop.f32.mrf.mxu0
      %v1459 = vadd.f32 %v1359, %v1458
      %1460 = vmatmul.f32.gmra.mxu0 %v1393
      %v1461 = vpop.f32.mrf.mxu0
      %v1462 = vadd.f32 %v1359, %v1461
      %1463 = vmatmul.f32.gmra.mxu0 %v1396
      %v1464 = vpop.f32.mrf.mxu0
      %v1465 = vadd.f32 %v1359, %v1464
      %1466 = vmatmul.f32.gmra.mxu0 %v1399
      %v1467 = vpop.f32.mrf.mxu0
      %v1468 = vadd.f32 %v1359, %v1467
      %1469 = vmatmul.f32.gmra.mxu0 %v1402
      %v1470 = vpop.f32.mrf.mxu0
      %v1471 = vadd.f32 %v1359, %v1470
      %1472 = vmatmul.f32.gmra.mxu0 %v1405
      %v1473 = vpop.f32.mrf.mxu0
      %v1474 = vadd.f32 %v1359, %v1473
      %1475 = vmatmul.f32.gmra.mxu0 %v1408
      %v1476 = vpop.f32.mrf.mxu0
      %v1477 = vadd.f32 %v1359, %v1476
      %1478 = vdwg.mxu0
      %1479 = vst.msk [vmem:[%s468] sm:$0xff] %vm1233, %v1432
      %1480 = vst.msk [vmem:[%s468 + $0x8] sm:$0xff] %vm1233, %v1435
      %1481 = vst.msk [vmem:[%s468 + $0x10] sm:$0xff] %vm1233, %v1438
      %1482 = vst.msk [vmem:[%s468 + $0x18] sm:$0xff] %vm1233, %v1441
      %1483 = vst.msk [vmem:[%s468 + $0x20] sm:$0xff] %vm1233, %v1444
      %1484 = vst.msk [vmem:[%s468 + $0x28] sm:$0xff] %vm1233, %v1447
      %1485 = vst.msk [vmem:[%s468 + $0x30] sm:$0xff] %vm1233, %v1450
      %1486 = vst.msk [vmem:[%s468 + $0x38] sm:$0xff] %vm1233, %v1453
      %1487 = vst.msk [vmem:[%s468 + $0x40] sm:$0xff] %vm1233, %v1456
      %1488 = vst.msk [vmem:[%s468 + $0x48] sm:$0xff] %vm1233, %v1459
      %1489 = vst.msk [vmem:[%s468 + $0x50] sm:$0xff] %vm1233, %v1462
      %1490 = vst.msk [vmem:[%s468 + $0x58] sm:$0xff] %vm1233, %v1465
      %1491 = vst.msk [vmem:[%s468 + $0x60] sm:$0xff] %vm1233, %v1468
      %1492 = vst.msk [vmem:[%s468 + $0x68] sm:$0xff] %vm1233, %v1471
      %1493 = vst.msk [vmem:[%s468 + $0x70] sm:$0xff] %vm1233, %v1474
      %1494 = vst.msk [vmem:[%s468 + $0x78] sm:$0xff] %vm1233, %v1477
      %v1495 = vsel %vm1233, %v1432, 0.0
      %v1496 = vsel %vm1233, %v1435, 0.0
      %v1497 = vadd.f32 %v1495, %v1496
      %v1498 = vsel %vm1233, %v1438, 0.0
      %v1499 = vadd.f32 %v1497, %v1498
      %v1500 = vsel %vm1233, %v1441, 0.0
      %v1501 = vadd.f32 %v1499, %v1500
      %v1502 = vsel %vm1233, %v1444, 0.0
      %v1503 = vadd.f32 %v1501, %v1502
      %v1504 = vsel %vm1233, %v1447, 0.0
      %v1505 = vadd.f32 %v1503, %v1504
      %v1506 = vsel %vm1233, %v1450, 0.0
      %v1507 = vadd.f32 %v1505, %v1506
      %v1508 = vsel %vm1233, %v1453, 0.0
      %v1509 = vadd.f32 %v1507, %v1508
      %v1510 = vsel %vm1233, %v1456, 0.0
      %v1511 = vadd.f32 %v1509, %v1510
      %v1512 = vsel %vm1233, %v1459, 0.0
      %v1513 = vadd.f32 %v1511, %v1512
      %v1514 = vsel %vm1233, %v1462, 0.0
      %v1515 = vadd.f32 %v1513, %v1514
      %v1516 = vsel %vm1233, %v1465, 0.0
      %v1517 = vadd.f32 %v1515, %v1516
      %v1518 = vsel %vm1233, %v1468, 0.0
      %v1519 = vadd.f32 %v1517, %v1518
      %v1520 = vsel %vm1233, %v1471, 0.0
      %v1521 = vadd.f32 %v1519, %v1520
      %v1522 = vsel %vm1233, %v1474, 0.0
      %v1523 = vadd.f32 %v1521, %v1522
      %v1524 = vsel %vm1233, %v1477, 0.0
      %v1525 = vadd.f32 %v1523, %v1524
      %v1526 = vrot.slane %v1525, 4
      %v1527 = vadd.f32 %v1525, %v1526
      %v1528 = vrot.slane %v1527, 2
      %v1529 = vadd.f32 %v1527, %v1528
      %v1530 = vrot.slane %v1529, 1
      %v1531 = vadd.f32 %v1529, %v1530
      %vm1532 = vcmask 57344
      %1533 = vst.msk [vmem:[%s474] sm:$0x1] %vm1532, %v1531
      %v1534 = vmul.f32 %v1432, %v1432
      %v1535 = vmul.f32 %v1435, %v1435
      %v1536 = vmul.f32 %v1438, %v1438
      %v1537 = vmul.f32 %v1441, %v1441
      %v1538 = vmul.f32 %v1444, %v1444
      %v1539 = vmul.f32 %v1447, %v1447
      %v1540 = vmul.f32 %v1450, %v1450
      %v1541 = vmul.f32 %v1453, %v1453
      %v1542 = vmul.f32 %v1456, %v1456
      %v1543 = vmul.f32 %v1459, %v1459
      %v1544 = vmul.f32 %v1462, %v1462
      %v1545 = vmul.f32 %v1465, %v1465
      %v1546 = vmul.f32 %v1468, %v1468
      %v1547 = vmul.f32 %v1471, %v1471
      %v1548 = vmul.f32 %v1474, %v1474
      %v1549 = vmul.f32 %v1477, %v1477
      %v1550 = vsel %vm1233, %v1534, 0.0
      %v1551 = vsel %vm1233, %v1535, 0.0
      %v1552 = vadd.f32 %v1550, %v1551
      %v1553 = vsel %vm1233, %v1536, 0.0
      %v1554 = vadd.f32 %v1552, %v1553
      %v1555 = vsel %vm1233, %v1537, 0.0
      %v1556 = vadd.f32 %v1554, %v1555
      %v1557 = vsel %vm1233, %v1538, 0.0
      %v1558 = vadd.f32 %v1556, %v1557
      %v1559 = vsel %vm1233, %v1539, 0.0
      %v1560 = vadd.f32 %v1558, %v1559
      %v1561 = vsel %vm1233, %v1540, 0.0
      %v1562 = vadd.f32 %v1560, %v1561
      %v1563 = vsel %vm1233, %v1541, 0.0
      %v1564 = vadd.f32 %v1562, %v1563
      %v1565 = vsel %vm1233, %v1542, 0.0
      %v1566 = vadd.f32 %v1564, %v1565
      %v1567 = vsel %vm1233, %v1543, 0.0
      %v1568 = vadd.f32 %v1566, %v1567
      %v1569 = vsel %vm1233, %v1544, 0.0
      %v1570 = vadd.f32 %v1568, %v1569
      %v1571 = vsel %vm1233, %v1545, 0.0
      %v1572 = vadd.f32 %v1570, %v1571
      %v1573 = vsel %vm1233, %v1546, 0.0
      %v1574 = vadd.f32 %v1572, %v1573
      %v1575 = vsel %vm1233, %v1547, 0.0
      %v1576 = vadd.f32 %v1574, %v1575
      %v1577 = vsel %vm1233, %v1548, 0.0
      %v1578 = vadd.f32 %v1576, %v1577
      %v1579 = vsel %vm1233, %v1549, 0.0
      %v1580 = vadd.f32 %v1578, %v1579
      %v1581 = vrot.slane %v1580, 4
      %v1582 = vadd.f32 %v1580, %v1581
      %v1583 = vrot.slane %v1582, 2
      %v1584 = vadd.f32 %v1582, %v1583
      %v1585 = vrot.slane %v1584, 1
      %v1586 = vadd.f32 %v1584, %v1585
      %1587 = vst.msk [vmem:[%s481] sm:$0x1] %vm1532, %v1586
      %s1588 = smul.u32 8, %s24
      %p1589 = scmp.lt.s32.totalorder %s23, 1
      %s1590 = scalar_select %p1589, %s23, 1
      %p1591 = scmp.lt.s32.totalorder %s1588, 15
      %s1592 = scalar_select %p1591, %s1588, 15
      %s1593 = smul.addr %s1592, 2
      %s1594 = smul.addr %s1590, 32
      %s1595 = sadd.s32 %s1593, %s1594
      %s1596 = smul.addr %s1595, 8
      %s1597 = scalar_lea.vmem %s5, %s1596
      %s1598 = smul.u32 %s23, 2
      %s1599 = sadd.s32 %s1598, %s24
      %p1600 = scmp.lt.s32.totalorder %s1599, 3
      %s1601 = scalar_select %p1600, %s1599, 3
      %s1602 = scalar_lea.vmem %s6, %s1601
      %s1603 = smul.u32 %s23, 2
      %s1604 = sadd.s32 %s1603, %s24
      %p1605 = scmp.lt.s32.totalorder %s1604, 3
      %s1606 = scalar_select %p1605, %s1604, 3
      %s1607 = scalar_lea.vmem %s7, %s1606
      // Predicated region
      $region41: #{double_conv.3} parent=39 // pred_check
        %p1608 = pneg %p193
      $region42: #{double_conv.3} parent=39 // pred_check_branch
        %1610 = sbr.rel (%p1608) target = $region44
      $region43: #{double_conv.3} parent=39 // pred_region
        %s1611 = smul.u32 8, %s24
      $region44: #{double_conv.3} parent=39 // pred_fallthru
        _
      // Predicated region
      $region45: #{double_conv.3} parent=39 // pred_check
        %p1612 = pneg %p223
      $region46: #{double_conv.3} parent=39 // pred_check_branch
        %1614 = sbr.rel (%p1612) target = $region48
      $region47: #{double_conv.3} parent=39 // pred_region
        %s1615 = smul.u32 %s23, 2
        %s1616 = sadd.s32 %s1615, %s24
      $region48: #{double_conv.3} parent=39 // pred_fallthru
        _
      // Predicated region
      $region49: #{double_conv.3} parent=39 // pred_check
        %p1617 = pneg %p253
      $region50: #{double_conv.3} parent=39 // pred_check_branch
        %1619 = sbr.rel (%p1617) target = $region52
      $region51: #{double_conv.3} parent=39 // pred_region
        %s1620 = smul.u32 %s23, 2
        %s1621 = sadd.s32 %s1620, %s24
      $region52: #{double_conv.3} parent=39 // pred_fallthru
        _
    $region40: #{double_conv.3} parent=5 // pred_fallthru
      _
    %p1622 = scmp.le.s32.totalorder 2, %s14
    // Predicated region
    $region53: #{double_conv.3} parent=5 // pred_check
      %p1623 = pneg %p1622
    $region54: #{double_conv.3} parent=5 // pred_check_branch
      %1625 = sbr.rel (%p1623) target = $region56
    $region55: #{double_conv.3} parent=5 // pred_region
      %s1626 = ssub.s32 %s14, 2
      // Predicated region
      $region57: #{double_conv.3} parent=55 // pred_check
        %p1627 = pneg %p199
      $region58: #{double_conv.3} parent=55 // pred_check_branch
        %1629 = sbr.rel (%p1627) target = $region60
      $region59: #{double_conv.3} parent=55 // pred_region
        %s1630 = smul.u32 8, %s26
        %p1631 = scmp.lt.s32.totalorder %s25, 1
        %s1632 = scalar_select %p1631, %s25, 1
        %p1633 = scmp.lt.s32.totalorder %s1630, 15
        %s1634 = scalar_select %p1633, %s1630, 15
        %s1635 = smul.addr %s1634, 2
        %s1636 = smul.addr %s1632, 32
        %s1637 = sadd.s32 %s1635, %s1636
        %s1638 = smul.addr %s1637, 8
        %s1639 = scalar_lea.vmem %s5, %s1638
      $region60: #{double_conv.3} parent=55 // pred_fallthru
        _
      // Predicated region
      $region61: #{double_conv.3} parent=55 // pred_check
        %p1640 = pneg %p229
      $region62: #{double_conv.3} parent=55 // pred_check_branch
        %1642 = sbr.rel (%p1640) target = $region64
      $region63: #{double_conv.3} parent=55 // pred_region
        %s1643 = smul.u32 %s25, 2
        %s1644 = sadd.s32 %s1643, %s26
        %p1645 = scmp.lt.s32.totalorder %s1644, 3
        %s1646 = scalar_select %p1645, %s1644, 3
        %s1647 = scalar_lea.vmem %s6, %s1646
      $region64: #{double_conv.3} parent=55 // pred_fallthru
        _
      // Predicated region
      $region65: #{double_conv.3} parent=55 // pred_check
        %p1648 = pneg %p259
      $region66: #{double_conv.3} parent=55 // pred_check_branch
        %1650 = sbr.rel (%p1648) target = $region68
      $region67: #{double_conv.3} parent=55 // pred_region
        %s1651 = smul.u32 %s25, 2
        %s1652 = sadd.s32 %s1651, %s26
        %p1653 = scmp.lt.s32.totalorder %s1652, 3
        %s1654 = scalar_select %p1653, %s1652, 3
        %s1655 = scalar_lea.vmem %s7, %s1654
      $region68: #{double_conv.3} parent=55 // pred_fallthru
        _
    $region56: #{double_conv.3} parent=5 // pred_fallthru
      _
  $region6: #{double_conv.3} parent=0 // loop_footer
    %s18 = sadd.s32 1, %s14
  $region7: #{double_conv.3} parent=0 // loop_footer_branch
    %13 = sbr.rel target = $region3
  $region8: #{double_conv.3} parent=0 // loop_exit
    _

// kernel: double_conv.4
$region0: #{double_conv.4}
  #allocation0 [shape = 'u32[]', space=smem, size = 0x4, offset = 0x4, fixed_abs, tag = 'smem constant byte address 0x4 - core index']
  #allocation1 [shape = 'u32[72,128]{1,0:T(1,128)}', space=vmem, size = 0x9000, scoped, tag = 'internal scratch']
  #allocation2 [shape = 'f32[10,18,8]{2,1,0:T(8,128)}', space=vmem, size = 0x1e000, scoped, tag = 'scratch operand']
  %s0 = inlined_call_operand.vmem [shape: f32[2,8], index: 0, kind: input, shape index: {}]
  %s1 = inlined_call_operand.vmem [shape: f32[2,16,16,8], index: 1, kind: input, shape index: {}, may-alias: {1,2,3}]
  %s2 = inlined_call_operand.vmem [shape: f32[2,16,16,8], index: 2, kind: input, shape index: {}, may-alias: {1,2,3}]
  %s3 = inlined_call_operand.vmem [shape: f32[2,16,16,8], index: 3, kind: input, shape index: {}, may-alias: {1,2,3}]
  %s4 = inlined_call_operand.vmem [shape: f32[72,8], index: 4, kind: input, shape index: {}]
  %s5 = inlined_call_operand.vmem [shape: f32[1,8], index: 5, kind: input, shape index: {}]
  %s6 = inlined_call_operand.vmem [shape: f32[2,16,16,8], index: 6, kind: output, shape index: {0}]
  %s7 = inlined_call_operand.vmem [shape: f32[4,1,8], index: 7, kind: output, shape index: {1}]
  %s8 = inlined_call_operand.vmem [shape: f32[4,1,8], index: 8, kind: output, shape index: {2}]
  %9 = xla_tuple %s6, %s7, %s8
  %s10 = sld [smem:[#allocation0]]
  $region73: #{double_conv.4} parent=0
    _
  %s12 = ssub.s32 1, %s10
  %s13 = scalar_select 0, %s12, %s10
  loop: start=0, step=1, limit=6
  $region2: #{double_conv.4} parent=0 // loop_pre_header
    _
  $region3: #{double_conv.4} parent=0 // loop_header
    %s15 = sphi 0, %s19
    %p16 = scmp.ge.s32.totalorder %s15, 6
    %s22 = sphi 0, %s34
    %s23 = sphi 0, %s30
    %s24 = sphi 0, %s22
    %s25 = sphi 0, %s23
    %s26 = sphi 0, %s24
    %s27 = sphi 0, %s25
    %s35 = sphi 0, %s35
    %s37 = sphi 0, %s35
    %s38 = sphi 0, %s37
    %s52 = sphi 0, %s38
    %s60 = sphi 0, %s62
    %s63 = sphi 0, %s60
    %s64 = sphi 0, %s63
    %s80 = sphi 0, %s64
    %s96 = sphi 0, %s98
    %s99 = sphi 0, %s96
    %s100 = sphi 0, %s99
    %s116 = sphi 0, %s100
    %s132 = sphi 0, %s134
    %s135 = sphi 0, %s132
    %s136 = sphi 0, %s135
    %s152 = sphi 0, %s136
    %s156 = sphi 0, %s156
    %s158 = sphi 0, %s156
    %s159 = sphi 0, %s158
    %s173 = sphi 0, %s159
    %s177 = sphi 0, %s177
    %s179 = sphi 0, %s177
    %s180 = sphi 0, %s179
    %s194 = sphi 0, %s180
    %s202 = sphi 0, %s204
    %s205 = sphi 0, %s202
    %s206 = sphi 0, %s205
    %s222 = sphi 0, %s206
    %s232 = sphi 0, %s234
    %s235 = sphi 0, %s232
    %s236 = sphi 0, %s235
    %s252 = sphi 0, %s236
    %s262 = sphi 0, %s264
    %s265 = sphi 0, %s262
    %s266 = sphi 0, %s265
    %s282 = sphi 0, %s266
  $region4: #{double_conv.4} parent=0 // loop_header_branch
    %18 = sbr.rel (%p16) target = $region8
  $region5: #{double_conv.4} parent=0 // loop_body
    %s20 = ssub.s32 %s15, 1
    %s21 = ssub.s32 %s15, 2
    %s28 = sadd.s32 1, %s23
    %p29 = scmp.ge.s32.totalorder %s28, 2
    %s30 = scalar_select %p29, 0, %s28
    %s31 = sadd.s32 1, %s22
    %s32 = scalar_select %p29, %s31, %s22
    %p33 = scmp.ge.s32.totalorder %s32, 2
    %s34 = scalar_select %p33, 0, %s32
    %s36 = sadd.s32 %s35, 1
    %p39 = scmp.eq.s32.totalorder %s15, 3
    %p40 = scmp.ne.s32.totalorder %s35, %s37
    %p41 = scmp.eq.s32.totalorder %s15, 0
    %p42 = por %p40, %p41
    %p43 = scmp.ne.s32.totalorder %s35, %s37
    %p44 = scmp.eq.s32.totalorder %s20, 3
    %p45 = por %p43, %p44
    %p46 = scmp.ne.s32.totalorder %s37, %s38
    %p47 = scmp.eq.s32.totalorder %s20, 0
    %p48 = por %p46, %p47
    %p49 = scmp.ne.s32.totalorder %s37, %s38
    %p50 = scmp.eq.s32.totalorder %s21, 3
    %p51 = por %p49, %p50
    %p53 = scmp.ne.s32.totalorder %s38, %s52
    %p54 = scmp.eq.s32.totalorder %s21, 0
    %p55 = por %p53, %p54
    %s56 = ssub.s32 %s22, %s34
    %s57 = ssub.s32 %s23, %s30
    %s58 = sor.u32 %s56, %s57
    %p59 = scmp.eq.s32.totalorder %s58, 0
    %s61 = sadd.s32 %s60, 1
    %s62 = scalar_select %p59, %s60, %s61
    %p65 = pneg %p59
    %p66 = scmp.eq.s32.totalorder %s15, 3
    %p67 = por %p65, %p66
    %p68 = scmp.ne.s32.totalorder %s60, %s63
    %p69 = scmp.eq.s32.totalorder %s15, 0
    %p70 = por %p68, %p69
    %p71 = scmp.ne.s32.totalorder %s60, %s63
    %p72 = scmp.eq.s32.totalorder %s20, 3
    %p73 = por %p71, %p72
    %p74 = scmp.ne.s32.totalorder %s63, %s64
    %p75 = scmp.eq.s32.totalorder %s20, 0
    %p76 = por %p74, %p75
    %p77 = scmp.ne.s32.totalorder %s63, %s64
    %p78 = scmp.eq.s32.totalorder %s21, 3
    %p79 = por %p77, %p78
    %p81 = scmp.ne.s32.totalorder %s64, %s80
    %p82 = scmp.eq.s32.totalorder %s21, 0
    %p83 = por %p81, %p82
    %s84 = smul.u32 %s23, 8
    %s85 = ssub.s32 %s84, 1
    %p86 = scmp.gt.s32.totalorder %s85, 0
    %s87 = scalar_select %p86, %s85, 0
    %s88 = smul.u32 %s30, 8
    %s89 = ssub.s32 %s88, 1
    %p90 = scmp.gt.s32.totalorder %s89, 0
    %s91 = scalar_select %p90, %s89, 0
    %s92 = ssub.s32 %s22, %s34
    %s93 = ssub.s32 %s87, %s91
    %s94 = sor.u32 %s92, %s93
    %p95 = scmp.eq.s32.totalorder %s94, 0
    %s97 = sadd.s32 %s96, 1
    %s98 = scalar_select %p95, %s96, %s97
    %p101 = pneg %p95
    %p102 = scmp.eq.s32.totalorder %s15, 3
    %p103 = por %p101, %p102
    %p104 = scmp.ne.s32.totalorder %s96, %s99
    %p105 = scmp.eq.s32.totalorder %s15, 0
    %p106 = por %p104, %p105
    %p107 = scmp.ne.s32.totalorder %s96, %s99
    %p108 = scmp.eq.s32.totalorder %s20, 3
    %p109 = por %p107, %p108
    %p110 = scmp.ne.s32.totalorder %s99, %s100
    %p111 = scmp.eq.s32.totalorder %s20, 0
    %p112 = por %p110, %p111
    %p113 = scmp.ne.s32.totalorder %s99, %s100
    %p114 = scmp.eq.s32.totalorder %s21, 3
    %p115 = por %p113, %p114
    %p117 = scmp.ne.s32.totalorder %s100, %s116
    %p118 = scmp.eq.s32.totalorder %s21, 0
    %p119 = por %p117, %p118
    %s120 = sadd.s32 %s23, 1
    %s121 = smul.u32 %s120, 8
    %p122 = scmp.lt.s32.totalorder %s121, 15
    %s123 = scalar_select %p122, %s121, 15
    %s124 = sadd.s32 %s30, 1
    %s125 = smul.u32 %s124, 8
    %p126 = scmp.lt.s32.totalorder %s125, 15
    %s127 = scalar_select %p126, %s125, 15
    %s128 = ssub.s32 %s22, %s34
    %s129 = ssub.s32 %s123, %s127
    %s130 = sor.u32 %s128, %s129
    %p131 = scmp.eq.s32.totalorder %s130, 0
    %s133 = sadd.s32 %s132, 1
    %s134 = scalar_select %p131, %s132, %s133
    %p137 = pneg %p131
    %p138 = scmp.eq.s32.totalorder %s15, 3
    %p139 = por %p137, %p138
    %p140 = scmp.ne.s32.totalorder %s132, %s135
    %p141 = scmp.eq.s32.totalorder %s15, 0
    %p142 = por %p140, %p141
    %p143 = scmp.ne.s32.totalorder %s132, %s135
    %p144 = scmp.eq.s32.totalorder %s20, 3
    %p145 = por %p143, %p144
    %p146 = scmp.ne.s32.totalorder %s135, %s136
    %p147 = scmp.eq.s32.totalorder %s20, 0
    %p148 = por %p146, %p147
    %p149 = scmp.ne.s32.totalorder %s135, %s136
    %p150 = scmp.eq.s32.totalorder %s21, 3
    %p151 = por %p149, %p150
    %p153 = scmp.ne.s32.totalorder %s136, %s152
    %p154 = scmp.eq.s32.totalorder %s21, 0
    %p155 = por %p153, %p154
    %s157 = sadd.s32 %s156, 1
    %p160 = scmp.eq.s32.totalorder %s15, 3
    %p161 = scmp.ne.s32.totalorder %s156, %s158
    %p162 = scmp.eq.s32.totalorder %s15, 0
    %p163 = por %p161, %p162
    %p164 = scmp.ne.s32.totalorder %s156, %s158
    %p165 = scmp.eq.s32.totalorder %s20, 3
    %p166 = por %p164, %p165
    %p167 = scmp.ne.s32.totalorder %s158, %s159
    %p168 = scmp.eq.s32.totalorder %s20, 0
    %p169 = por %p167, %p168
    %p170 = scmp.ne.s32.totalorder %s158, %s159
    %p171 = scmp.eq.s32.totalorder %s21, 3
    %p172 = por %p170, %p171
    %p174 = scmp.ne.s32.totalorder %s159, %s173
    %p175 = scmp.eq.s32.totalorder %s21, 0
    %p176 = por %p174, %p175
    %s178 = sadd.s32 %s177, 1
    %p181 = scmp.eq.s32.totalorder %s15, 3
    %p182 = scmp.ne.s32.totalorder %s177, %s179
    %p183 = scmp.eq.s32.totalorder %s15, 0
    %p184 = por %p182, %p183
    %p185 = scmp.ne.s32.totalorder %s177, %s179
    %p186 = scmp.eq.s32.totalorder %s20, 3
    %p187 = por %p185, %p186
    %p188 = scmp.ne.s32.totalorder %s179, %s180
    %p189 = scmp.eq.s32.totalorder %s20, 0
    %p190 = por %p188, %p189
    %p191 = scmp.ne.s32.totalorder %s179, %s180
    %p192 = scmp.eq.s32.totalorder %s21, 3
    %p193 = por %p191, %p192
    %p195 = scmp.ne.s32.totalorder %s180, %s194
    %p196 = scmp.eq.s32.totalorder %s21, 0
    %p197 = por %p195, %p196
    %s198 = ssub.s32 %s22, %s34
    %s199 = ssub.s32 %s23, %s30
    %s200 = sor.u32 %s198, %s199
    %p201 = scmp.eq.s32.totalorder %s200, 0
    %s203 = sadd.s32 %s202, 1
    %s204 = scalar_select %p201, %s202, %s203
    %p207 = pneg %p201
    %p208 = scmp.eq.s32.totalorder %s15, 3
    %p209 = por %p207, %p208
    %p210 = scmp.ne.s32.totalorder %s202, %s205
    %p211 = scmp.eq.s32.totalorder %s15, 0
    %p212 = por %p210, %p211
    %p213 = scmp.ne.s32.totalorder %s202, %s205
    %p214 = scmp.eq.s32.totalorder %s20, 3
    %p215 = por %p213, %p214
    %p216 = scmp.ne.s32.totalorder %s205, %s206
    %p217 = scmp.eq.s32.totalorder %s20, 0
    %p218 = por %p216, %p217
    %p219 = scmp.ne.s32.totalorder %s205, %s206
    %p220 = scmp.eq.s32.totalorder %s21, 3
    %p221 = por %p219, %p220
    %p223 = scmp.ne.s32.totalorder %s206, %s222
    %p224 = scmp.eq.s32.totalorder %s21, 0
    %p225 = por %p223, %p224
    %s226 = smul.u32 %s22, 2
    %s227 = sadd.s32 %s226, %s23
    %s228 = smul.u32 %s34, 2
    %s229 = sadd.s32 %s228, %s30
    %s230 = ssub.s32 %s227, %s229
    %p231 = scmp.eq.s32.totalorder %s230, 0
    %s233 = sadd.s32 %s232, 1
    %s234 = scalar_select %p231, %s232, %s233
    %p237 = pneg %p231
    %p238 = scmp.eq.s32.totalorder %s15, 3
    %p239 = por %p237, %p238
    %p240 = scmp.ne.s32.totalorder %s232, %s235
    %p241 = scmp.eq.s32.totalorder %s15, 0
    %p242 = por %p240, %p241
    %p243 = scmp.ne.s32.totalorder %s232, %s235
    %p244 = scmp.eq.s32.totalorder %s20, 3
    %p245 = por %p243, %p244
    %p246 = scmp.ne.s32.totalorder %s235, %s236
    %p247 = scmp.eq.s32.totalorder %s20, 0
    %p248 = por %p246, %p247
    %p249 = scmp.ne.s32.totalorder %s235, %s236
    %p250 = scmp.eq.s32.totalorder %s21, 3
    %p251 = por %p249, %p250
    %p253 = scmp.ne.s32.totalorder %s236, %s252
    %p254 = scmp.eq.s32.totalorder %s21, 0
    %p255 = por %p253, %p254
    %s256 = smul.u32 %s22, 2
    %s257 = sadd.s32 %s256, %s23
    %s258 = smul.u32 %s34, 2
    %s259 = sadd.s32 %s258, %s30
    %s260 = ssub.s32 %s257, %s259
    %p261 = scmp.eq.s32.totalorder %s260, 0
    %s263 = sadd.s32 %s262, 1
    %s264 = scalar_select %p261, %s262, %s263
    %p267 = pneg %p261
    %p268 = scmp.eq.s32.totalorder %s15, 3
    %p269 = por %p267, %p268
    %p270 = scmp.ne.s32.totalorder %s262, %s265
    %p271 = scmp.eq.s32.totalorder %s15, 0
    %p272 = por %p270, %p271
    %p273 = scmp.ne.s32.totalorder %s262, %s265
    %p274 = scmp.eq.s32.totalorder %s20, 3
    %p275 = por %p273, %p274
    %p276 = scmp.ne.s32.totalorder %s265, %s266
    %p277 = scmp.eq.s32.totalorder %s20, 0
    %p278 = por %p276, %p277
    %p279 = scmp.ne.s32.totalorder %s265, %s266
    %p280 = scmp.eq.s32.totalorder %s21, 3
    %p281 = por %p279, %p280
    %p283 = scmp.ne.s32.totalorder %s266, %s282
    %p284 = scmp.eq.s32.totalorder %s21, 0
    %p285 = por %p283, %p284
    %p286 = scmp.le.s32.totalorder 1, %s15
    %p287 = scmp.lt.s32.totalorder %s15, 5
    %p288 = pnand %p286, %p287
    %p289 = pneg %p288
    // Predicated region
    $region9: #{double_conv.4} parent=5 // pred_check
      _
    $region10: #{double_conv.4} parent=5 // pred_check_branch
      %291 = sbr.rel (%p288) target = $region12
    $region11: #{double_conv.4} parent=5 // pred_region
      %s292 = ssub.s32 %s15, 1
      // Predicated region
      $region13: #{double_conv.4} parent=11 // pred_check
        %p293 = pneg %p48
      $region14: #{double_conv.4} parent=11 // pred_check_branch
        %295 = sbr.rel (%p293) target = $region16
      $region15: #{double_conv.4} parent=11 // pred_region
        _
      $region16: #{double_conv.4} parent=11 // pred_fallthru
        _
      // Predicated region
      $region17: #{double_conv.4} parent=11 // pred_check
        %p296 = pneg %p169
      $region18: #{double_conv.4} parent=11 // pred_check_branch
        %298 = sbr.rel (%p296) target = $region20
      $region19: #{double_conv.4} parent=11 // pred_region
        _
      $region20: #{double_conv.4} parent=11 // pred_fallthru
        _
      // Predicated region
      $region21: #{double_conv.4} parent=11 // pred_check
        %p299 = pneg %p190
      $region22: #{double_conv.4} parent=11 // pred_check_branch
        %301 = sbr.rel (%p299) target = $region24
      $region23: #{double_conv.4} parent=11 // pred_region
        _
      $region24: #{double_conv.4} parent=11 // pred_fallthru
        _
    $region12: #{double_conv.4} parent=5 // pred_fallthru
      _
    %p302 = scmp.lt.s32.totalorder %s15, 4
    // Predicated region
    $region25: #{double_conv.4} parent=5 // pred_check
      %p303 = pneg %p302
    $region26: #{double_conv.4} parent=5 // pred_check_branch
      %305 = sbr.rel (%p303) target = $region28
    $region27: #{double_conv.4} parent=5 // pred_region
      // Predicated region
      $region29: #{double_conv.4} parent=27 // pred_check
        %p306 = pneg %p70
      $region30: #{double_conv.4} parent=27 // pred_check_branch
        %308 = sbr.rel (%p306) target = $region32
      $region31: #{double_conv.4} parent=27 // pred_region
        %s309 = smul.u32 8, %s23
        %p310 = scmp.lt.s32.totalorder %s22, 1
        %s311 = scalar_select %p310, %s22, 1
        %p312 = scmp.lt.s32.totalorder %s309, 15
        %s313 = scalar_select %p312, %s309, 15
        %s314 = smul.addr %s313, 2
        %s315 = smul.addr %s311, 32
        %s316 = sadd.s32 %s314, %s315
        %s317 = smul.addr %s316, 8
        %s318 = scalar_lea.vmem %s1, %s317
        %s319 = smul.u32 8, %s23
      $region32: #{double_conv.4} parent=27 // pred_fallthru
        _
      // Predicated region
      $region33: #{double_conv.4} parent=27 // pred_check
        %p320 = pneg %p106
      $region34: #{double_conv.4} parent=27 // pred_check_branch
        %322 = sbr.rel (%p320) target = $region36
      $region35: #{double_conv.4} parent=27 // pred_region
        %s323 = smul.u32 %s23, 8
        %s324 = ssub.s32 %s323, 1
        %p325 = scmp.gt.s32.totalorder %s324, 0
        %s326 = scalar_select %p325, %s324, 0
        %p327 = scmp.lt.s32.totalorder %s22, 1
        %s328 = scalar_select %p327, %s22, 1
        %p329 = scmp.lt.s32.totalorder %s326, 15
        %s330 = scalar_select %p329, %s326, 15
        %s331 = smul.addr %s330, 2
        %s332 = smul.addr %s328, 32
        %s333 = sadd.s32 %s331, %s332
        %s334 = smul.addr %s333, 8
        %s335 = scalar_lea.vmem %s2, %s334
        %s336 = smul.u32 %s23, 8
        %s337 = ssub.s32 %s336, 1
        %p338 = scmp.gt.s32.totalorder %s337, 0
        %s339 = scalar_select %p338, %s337, 0
      $region36: #{double_conv.4} parent=27 // pred_fallthru
        _
      // Predicated region
      $region37: #{double_conv.4} parent=27 // pred_check
        %p340 = pneg %p142
      $region38: #{double_conv.4} parent=27 // pred_check_branch
        %342 = sbr.rel (%p340) target = $region40
      $region39: #{double_conv.4} parent=27 // pred_region
        %s343 = sadd.s32 %s23, 1
        %s344 = smul.u32 %s343, 8
        %p345 = scmp.lt.s32.totalorder %s344, 15
        %s346 = scalar_select %p345, %s344, 15
        %p347 = scmp.lt.s32.totalorder %s22, 1
        %s348 = scalar_select %p347, %s22, 1
        %p349 = scmp.lt.s32.totalorder %s346, 15
        %s350 = scalar_select %p349, %s346, 15
        %s351 = smul.addr %s350, 2
        %s352 = smul.addr %s348, 32
        %s353 = sadd.s32 %s351, %s352
        %s354 = smul.addr %s353, 8
        %s355 = scalar_lea.vmem %s3, %s354
        %s356 = sadd.s32 %s23, 1
        %s357 = smul.u32 %s356, 8
        %p358 = scmp.lt.s32.totalorder %s357, 15
        %s359 = scalar_select %p358, %s357, 15
      $region40: #{double_conv.4} parent=27 // pred_fallthru
        _
    $region28: #{double_conv.4} parent=5 // pred_fallthru
      _
    %p360 = scmp.le.s32.totalorder 1, %s15
    %p361 = scmp.lt.s32.totalorder %s15, 5
    %p362 = pnand %p360, %p361
    %p363 = pneg %p362
    // Predicated region
    $region41: #{double_conv.4} parent=5 // pred_check
      _
    $region42: #{double_conv.4} parent=5 // pred_check_branch
      %365 = sbr.rel (%p362) target = $region44
    $region43: #{double_conv.4} parent=5 // pred_region
      %s366 = ssub.s32 %s15, 1
      %p367 = pneg %p48
      %p368 = pneg %p45
      %s369 = smul.u32 8, %s25
      %p370 = scmp.lt.s32.totalorder %s24, 1
      %s371 = scalar_select %p370, %s24, 1
      %p372 = scmp.lt.s32.totalorder %s369, 15
      %s373 = scalar_select %p372, %s369, 15
      %s374 = smul.addr %s373, 2
      %s375 = smul.addr %s371, 32
      %s376 = sadd.s32 %s374, %s375
      %s377 = smul.addr %s376, 8
      %s378 = scalar_lea.vmem %s1, %s377
      %p379 = pneg %p76
      %p380 = pneg %p73
      %s381 = smul.u32 %s25, 8
      %s382 = ssub.s32 %s381, 1
      %p383 = scmp.gt.s32.totalorder %s382, 0
      %s384 = scalar_select %p383, %s382, 0
      %p385 = scmp.lt.s32.totalorder %s24, 1
      %s386 = scalar_select %p385, %s24, 1
      %p387 = scmp.lt.s32.totalorder %s384, 15
      %s388 = scalar_select %p387, %s384, 15
      %s389 = smul.addr %s388, 2
      %s390 = smul.addr %s386, 32
      %s391 = sadd.s32 %s389, %s390
      %s392 = smul.addr %s391, 8
      %s393 = scalar_lea.vmem %s2, %s392
      %p394 = pneg %p112
      %p395 = pneg %p109
      %s396 = sadd.s32 %s25, 1
      %s397 = smul.u32 %s396, 8
      %p398 = scmp.lt.s32.totalorder %s397, 15
      %s399 = scalar_select %p398, %s397, 15
      %p400 = scmp.lt.s32.totalorder %s24, 1
      %s401 = scalar_select %p400, %s24, 1
      %p402 = scmp.lt.s32.totalorder %s399, 15
      %s403 = scalar_select %p402, %s399, 15
      %s404 = smul.addr %s403, 2
      %s405 = smul.addr %s401, 32
      %s406 = sadd.s32 %s404, %s405
      %s407 = smul.addr %s406, 8
      %s408 = scalar_lea.vmem %s3, %s407
      %p409 = pneg %p148
      %p410 = pneg %p145
      %p411 = pneg %p169
      %p412 = pneg %p166
      %p413 = pneg %p190
      %p414 = pneg %p187
      %p415 = pneg %p218
      %p416 = pneg %p215
      %s417 = smul.u32 8, %s25
      %p418 = scmp.lt.s32.totalorder %s24, 1
      %s419 = scalar_select %p418, %s24, 1
      %p420 = scmp.lt.s32.totalorder %s417, 15
      %s421 = scalar_select %p420, %s417, 15
      %s422 = smul.addr %s421, 2
      %s423 = smul.addr %s419, 32
      %s424 = sadd.s32 %s422, %s423
      %s425 = smul.addr %s424, 8
      %s426 = scalar_lea.vmem %s6, %s425
      %p427 = pneg %p248
      %p428 = pneg %p245
      %s429 = smul.u32 %s24, 2
      %s430 = sadd.s32 %s429, %s25
      %p431 = scmp.lt.s32.totalorder %s430, 3
      %s432 = scalar_select %p431, %s430, 3
      %s433 = scalar_lea.vmem %s7, %s432
      %p434 = pneg %p278
      %p435 = pneg %p275
      %s436 = smul.u32 %s24, 2
      %s437 = sadd.s32 %s436, %s25
      %p438 = scmp.lt.s32.totalorder %s437, 3
      %s439 = scalar_select %p438, %s437, 3
      %s440 = scalar_lea.vmem %s8, %s439
      %s441 = smul.u32 8, %s25
      %p442 = scmp.lt.s32.totalorder %s24, 1
      %s443 = scalar_select %p442, %s24, 1
      %p444 = scmp.lt.s32.totalorder %s441, 15
      %s445 = scalar_select %p444, %s441, 15
      %s446 = smul.addr %s445, 2
      %s447 = smul.addr %s443, 32
      %s448 = sadd.s32 %s446, %s447
      %s449 = smul.addr %s448, 8
      %s450 = scalar_lea.vmem %s1, %s449
      %s451 = smul.u32 8, %s25
      %s452 = smul.u32 %s25, 8
      %s453 = ssub.s32 %s452, 1
      %p454 = scmp.gt.s32.totalorder %s453, 0
      %s455 = scalar_select %p454, %s453, 0
      %p456 = scmp.lt.s32.totalorder %s24, 1
      %s457 = scalar_select %p456, %s24, 1
      %p458 = scmp.lt.s32.totalorder %s455, 15
      %s459 = scalar_select %p458, %s455, 15
      %s460 = smul.addr %s459, 2
      %s461 = smul.addr %s457, 32
      %s462 = sadd.s32 %s460, %s461
      %s463 = smul.addr %s462, 8
      %s464 = scalar_lea.vmem %s2, %s463
      %s465 = smul.u32 %s25, 8
      %s466 = ssub.s32 %s465, 1
      %p467 = scmp.gt.s32.totalorder %s466, 0
      %s468 = scalar_select %p467, %s466, 0
      %s469 = sadd.s32 %s25, 1
      %s470 = smul.u32 %s469, 8
      %p471 = scmp.lt.s32.totalorder %s470, 15
      %s472 = scalar_select %p471, %s470, 15
      %p473 = scmp.lt.s32.totalorder %s24, 1
      %s474 = scalar_select %p473, %s24, 1
      %p475 = scmp.lt.s32.totalorder %s472, 15
      %s476 = scalar_select %p475, %s472, 15
      %s477 = smul.addr %s476, 2
      %s478 = smul.addr %s474, 32
      %s479 = sadd.s32 %s477, %s478
      %s480 = smul.addr %s479, 8
      %s481 = scalar_lea.vmem %s3, %s480
      %s482 = sadd.s32 %s25, 1
      %s483 = smul.u32 %s482, 8
      %p484 = scmp.lt.s32.totalorder %s483, 15
      %s485 = scalar_select %p484, %s483, 15
      %s486 = smul.u32 8, %s25
      %p487 = scmp.lt.s32.totalorder %s24, 1
      %s488 = scalar_select %p487, %s24, 1
      %p489 = scmp.lt.s32.totalorder %s486, 15
      %s490 = scalar_select %p489, %s486, 15
      %s491 = smul.addr %s490, 2
      %s492 = smul.addr %s488, 32
      %s493 = sadd.s32 %s491, %s492
      %s494 = smul.addr %s493, 8
      %s495 = scalar_lea.vmem %s6, %s494
      %s496 = smul.u32 8, %s25
      %s497 = smul.u32 %s24, 2
      %s498 = sadd.s32 %s497, %s25
      %p499 = scmp.lt.s32.totalorder %s498, 3
      %s500 = scalar_select %p499, %s498, 3
      %s501 = scalar_lea.vmem %s7, %s500
      %s502 = smul.u32 %s24, 2
      %s503 = sadd.s32 %s502, %s25
      %s504 = smul.u32 %s24, 2
      %s505 = sadd.s32 %s504, %s25
      %p506 = scmp.lt.s32.totalorder %s505, 3
      %s507 = scalar_select %p506, %s505, 3
      %s508 = scalar_lea.vmem %s8, %s507
      %s509 = smul.u32 %s24, 2
      %s510 = sadd.s32 %s509, %s25
      %v511 = vld [vmem:[%s450] sm:$0xff]
      %v512 = vld [vmem:[%s450 + $0x8] sm:$0xff]
      %v513 = vld [vmem:[%s450 + $0x10] sm:$0xff]
      %v514 = vld [vmem:[%s450 + $0x18] sm:$0xff]
      %v515 = vld [vmem:[%s450 + $0x20] sm:$0xff]
      %v516 = vld [vmem:[%s450 + $0x28] sm:$0xff]
      %v517 = vld [vmem:[%s450 + $0x30] sm:$0xff]
      %v518 = vld [vmem:[%s450 + $0x38] sm:$0xff]
      %v519 = vld [vmem:[%s450 + $0x40] sm:$0xff]
      %v520 = vld [vmem:[%s450 + $0x48] sm:$0xff]
      %v521 = vld [vmem:[%s450 + $0x50] sm:$0xff]
      %v522 = vld [vmem:[%s450 + $0x58] sm:$0xff]
      %v523 = vld [vmem:[%s450 + $0x60] sm:$0xff]
      %v524 = vld [vmem:[%s450 + $0x68] sm:$0xff]
      %v525 = vld [vmem:[%s450 + $0x70] sm:$0xff]
      %v526 = vld [vmem:[%s450 + $0x78] sm:$0xff]
      %v527 = vld [vmem:[%s464] sm:$0xff]
      %v528 = vld [vmem:[%s464 + $0x8] sm:$0xff]
      %v529 = vld [vmem:[%s481] sm:$0xff]
      %v530 = vld [vmem:[%s481 + $0x8] sm:$0xff]
      %v531 = vld [vmem:[%s0] sm:$0x1]
      %v532 = vld [vmem:[%s0 + $0x1] sm:$0x1]
      %v533 = vperm.slane %v531, 0
      %v534 = vmul.f32 %v511, %v533
      %v535 = vmul.f32 %v512, %v533
      %v536 = vmul.f32 %v513, %v533
      %v537 = vmul.f32 %v514, %v533
      %v538 = vmul.f32 %v515, %v533
      %v539 = vmul.f32 %v516, %v533
      %v540 = vmul.f32 %v517, %v533
      %v541 = vmul.f32 %v518, %v533
      %v542 = vmul.f32 %v519, %v533
      %v543 = vmul.f32 %v520, %v533
      %v544 = vmul.f32 %v521, %v533
      %v545 = vmul.f32 %v522, %v533
      %v546 = vmul.f32 %v523, %v533
      %v547 = vmul.f32 %v524, %v533
      %v548 = vmul.f32 %v525, %v533
      %v549 = vmul.f32 %v526, %v533
      %v550 = vperm.slane %v532, 0
      %v551 = vadd.f32 %v534, %v550
      %v552 = vadd.f32 %v535, %v550
      %v553 = vadd.f32 %v536, %v550
      %v554 = vadd.f32 %v537, %v550
      %v555 = vadd.f32 %v538, %v550
      %v556 = vadd.f32 %v539, %v550
      %v557 = vadd.f32 %v540, %v550
      %v558 = vadd.f32 %v541, %v550
      %v559 = vadd.f32 %v542, %v550
      %v560 = vadd.f32 %v543, %v550
      %v561 = vadd.f32 %v544, %v550
      %v562 = vadd.f32 %v545, %v550
      %v563 = vadd.f32 %v546, %v550
      %v564 = vadd.f32 %v547, %v550
      %v565 = vadd.f32 %v548, %v550
      %v566 = vadd.f32 %v549, %v550
      %v567 = vmax.f32 %v551, 0.0
      %v568 = vmax.f32 %v552, 0.0
      %v569 = vmax.f32 %v553, 0.0
      %v570 = vmax.f32 %v554, 0.0
      %v571 = vmax.f32 %v555, 0.0
      %v572 = vmax.f32 %v556, 0.0
      %v573 = vmax.f32 %v557, 0.0
      %v574 = vmax.f32 %v558, 0.0
      %v575 = vmax.f32 %v559, 0.0
      %v576 = vmax.f32 %v560, 0.0
      %v577 = vmax.f32 %v561, 0.0
      %v578 = vmax.f32 %v562, 0.0
      %v579 = vmax.f32 %v563, 0.0
      %v580 = vmax.f32 %v564, 0.0
      %v581 = vmax.f32 %v565, 0.0
      %v582 = vmax.f32 %v566, 0.0
      %v583 = vmul.f32 %v527, %v533
      %v584 = vmul.f32 %v528, %v533
      %v585 = vadd.f32 %v583, %v550
      %v586 = vadd.f32 %v584, %v550
      %v587 = vmax.f32 %v585, 0.0
      %v588 = vmax.f32 %v586, 0.0
      %v589 = vmul.f32 %v529, %v533
      %v590 = vmul.f32 %v530, %v533
      %v591 = vadd.f32 %v589, %v550
      %v592 = vadd.f32 %v590, %v550
      %v593 = vmax.f32 %v591, 0.0
      %v594 = vmax.f32 %v592, 0.0
      %p595 = scmp.gt.s32.totalorder %s25, 0
      %s596 = scalar_select %p595, 1, 0
      %v597 = vstv %s596
      %vm598 = vcmp.eq.s32.totalorder %v597, 1
      %v599 = vsel %vm598, %v587, 0.0
      %v600 = vsel %vm598, %v588, 0.0
      %p601 = scmp.lt.s32.totalorder %s25, 1
      %s602 = scalar_select %p601, 1, 0
      %v603 = vstv %s602
      %vm604 = vcmp.eq.s32.totalorder %v603, 1
      %v605 = vsel %vm604, %v593, 0.0
      %v606 = vsel %vm604, %v594, 0.0
      %vm607 = vcmask 57344
      %608 = vst.msk [vmem:[#allocation2] sm:$0x1] %vm607, 0.0
      %609 = vst.msk [vmem:[#allocation2 + $0x18] sm:$0x1] %vm607, 0.0
      %610 = vst.msk [vmem:[#allocation2 + $0x30] sm:$0x1] %vm607, 0.0
      %611 = vst.msk [vmem:[#allocation2 + $0x48] sm:$0x1] %vm607, 0.0
      %612 = vst.msk [vmem:[#allocation2 + $0x60] sm:$0x1] %vm607, 0.0
      %613 = vst.msk [vmem:[#allocation2 + $0x78] sm:$0x1] %vm607, 0.0
      %614 = vst.msk [vmem:[#allocation2 + $0x90] sm:$0x1] %vm607, 0.0
      %615 = vst.msk [vmem:[#allocation2 + $0xa8] sm:$0x1] %vm607, 0.0
      %616 = vst.msk [vmem:[#allocation2 + $0xc0] sm:$0x1] %vm607, 0.0
      %617 = vst.msk [vmem:[#allocation2 + $0xd8] sm:$0x1] %vm607, 0.0
      %618 = vst.msk [vmem:[#allocation2 + $0x11] sm:$0x1] %vm607, 0.0
      %619 = vst.msk [vmem:[#allocation2 + $0x29] sm:$0x1] %vm607, 0.0
      %620 = vst.msk [vmem:[#allocation2 + $0x41] sm:$0x1] %vm607, 0.0
      %621 = vst.msk [vmem:[#allocation2 + $0x59] sm:$0x1] %vm607, 0.0
      %622 = vst.msk [vmem:[#allocation2 + $0x71] sm:$0x1] %vm607, 0.0
      %623 = vst.msk [vmem:[#allocation2 + $0x89] sm:$0x1] %vm607, 0.0
      %624 = vst.msk [vmem:[#allocation2 + $0xa1] sm:$0x1] %vm607, 0.0
      %625 = vst.msk [vmem:[#allocation2 + $0xb9] sm:$0x1] %vm607, 0.0
      %626 = vst.msk [vmem:[#allocation2 + $0xd1] sm:$0x1] %vm607, 0.0
      %627 = vst.msk [vmem:[#allocation2 + $0xe9] sm:$0x1] %vm607, 0.0
      %vm628 = vcmask 64512
      %629 = vst.msk [vmem:[#allocation2 + $0x1] sm:$0xff] %vm628, %v599
      %630 = vst.msk [vmem:[#allocation2 + $0x9] sm:$0xff] %vm628, %v600
      %s631 = scalar_lea.vmem [#allocation2], 216
      %632 = vst.msk [vmem:[%s631 + $0x1] sm:$0xff] %vm628, %v605
      %633 = vst.msk [vmem:[%s631 + $0x9] sm:$0xff] %vm628, %v606
      %s634 = scalar_lea.vmem [#allocation2], 24
      %635 = vst.msk [vmem:[%s634 + $0x1] sm:$0xff] %vm628, %v567
      %636 = vst.msk [vmem:[%s634 + $0x9] sm:$0xff] %vm628, %v568
      %637 = vst.msk [vmem:[%s634 + $0x19] sm:$0xff] %vm628, %v569
      %638 = vst.msk [vmem:[%s634 + $0x21] sm:$0xff] %vm628, %v570
      %639 = vst.msk [vmem:[%s634 + $0x31] sm:$0xff] %vm628, %v571
      %640 = vst.msk [vmem:[%s634 + $0x39] sm:$0xff] %vm628, %v572
      %641 = vst.msk [vmem:[%s634 + $0x49] sm:$0xff] %vm628, %v573
      %642 = vst.msk [vmem:[%s634 + $0x51] sm:$0xff] %vm628, %v574
      %643 = vst.msk [vmem:[%s634 + $0x61] sm:$0xff] %vm628, %v575
      %644 = vst.msk [vmem:[%s634 + $0x69] sm:$0xff] %vm628, %v576
      %645 = vst.msk [vmem:[%s634 + $0x79] sm:$0xff] %vm628, %v577
      %646 = vst.msk [vmem:[%s634 + $0x81] sm:$0xff] %vm628, %v578
      %647 = vst.msk [vmem:[%s634 + $0x91] sm:$0xff] %vm628, %v579
      %648 = vst.msk [vmem:[%s634 + $0x99] sm:$0xff] %vm628, %v580
      %649 = vst.msk [vmem:[%s634 + $0xa9] sm:$0xff] %vm628, %v581
      %650 = vst.msk [vmem:[%s634 + $0xb1] sm:$0xff] %vm628, %v582
      %v651 = vld [vmem:[#allocation2] sm:$0xff]
      %v652 = vld [vmem:[#allocation2 + $0x8] sm:$0xff]
      %v653 = vld [vmem:[#allocation2 + $0x18] sm:$0xff]
      %v654 = vld [vmem:[#allocation2 + $0x20] sm:$0xff]
      %v655 = vld [vmem:[#allocation2 + $0x30] sm:$0xff]
      %v656 = vld [vmem:[#allocation2 + $0x38] sm:$0xff]
      %v657 = vld [vmem:[#allocation2 + $0x48] sm:$0xff]
      %v658 = vld [vmem:[#allocation2 + $0x50] sm:$0xff]
      %v659 = vld [vmem:[#allocation2 + $0x60] sm:$0xff]
      %v660 = vld [vmem:[#allocation2 + $0x68] sm:$0xff]
      %v661 = vld [vmem:[#allocation2 + $0x78] sm:$0xff]
      %v662 = vld [vmem:[#allocation2 + $0x80] sm:$0xff]
      %v663 = vld [vmem:[#allocation2 + $0x90] sm:$0xff]
      %v664 = vld [vmem:[#allocation2 + $0x98] sm:$0xff]
      %v665 = vld [vmem:[#allocation2 + $0xa8] sm:$0xff]
      %v666 = vld [vmem:[#allocation2 + $0xb0] sm:$0xff]
      %v667 = vld [vmem:[#allocation2 + $0x1] sm:$0xff]
      %v668 = vld [vmem:[#allocation2 + $0x9] sm:$0xff]
      %v669 = vld [vmem:[#allocation2 + $0x19] sm:$0xff]
      %v670 = vld [vmem:[#allocation2 + $0x21] sm:$0xff]
      %v671 = vld [vmem:[#allocation2 + $0x31] sm:$0xff]
      %v672 = vld [vmem:[#allocation2 + $0x39] sm:$0xff]
      %v673 = vld [vmem:[#allocation2 + $0x49] sm:$0xff]
      %v674 = vld [vmem:[#allocation2 + $0x51] sm:$0xff]
      %v675 = vld [vmem:[#allocation2 + $0x61] sm:$0xff]
      %v676 = vld [vmem:[#allocation2 + $0x69] sm:$0xff]
      %v677 = vld [vmem:[#allocation2 + $0x79] sm:$0xff]
      %v678 = vld [vmem:[#allocation2 + $0x81] sm:$0xff]
      %v679 = vld [vmem:[#allocation2 + $0x91] sm:$0xff]
      %v680 = vld [vmem:[#allocation2 + $0x99] sm:$0xff]
      %v681 = vld [vmem:[#allocation2 + $0xa9] sm:$0xff]
      %v682 = vld [vmem:[#allocation2 + $0xb1] sm:$0xff]
      %v683 = vld [vmem:[#allocation2 + $0x2] sm:$0xff]
      %v684 = vld [vmem:[#allocation2 + $0xa] sm:$0xff]
      %v685 = vld [vmem:[#allocation2 + $0x1a] sm:$0xff]
      %v686 = vld [vmem:[#allocation2 + $0x22] sm:$0xff]
      %v687 = vld [vmem:[#allocation2 + $0x32] sm:$0xff]
      %v688 = vld [vmem:[#allocation2 + $0x3a] sm:$0xff]
      %v689 = vld [vmem:[#allocation2 + $0x4a] sm:$0xff]
      %v690 = vld [vmem:[#allocation2 + $0x52] sm:$0xff]
      %v691 = vld [vmem:[#allocation2 + $0x62] sm:$0xff]
      %v692 = vld [vmem:[#allocation2 + $0x6a] sm:$0xff]
      %v693 = vld [vmem:[#allocation2 + $0x7a] sm:$0xff]
      %v694 = vld [vmem:[#allocation2 + $0x82] sm:$0xff]
      %v695 = vld [vmem:[#allocation2 + $0x92] sm:$0xff]
      %v696 = vld [vmem:[#allocation2 + $0x9a] sm:$0xff]
      %v697 = vld [vmem:[#allocation2 + $0xaa] sm:$0xff]
      %v698 = vld [vmem:[#allocation2 + $0xb2] sm:$0xff]
      %v699 = vld [vmem:[%s634] sm:$0xff]
      %v700 = vld [vmem:[%s634 + $0x8] sm:$0xff]
      %v701 = vld [vmem:[%s634 + $0x18] sm:$0xff]
      %v702 = vld [vmem:[%s634 + $0x20] sm:$0xff]
      %v703 = vld [vmem:[%s634 + $0x30] sm:$0xff]
      %v704 = vld [vmem:[%s634 + $0x38] sm:$0xff]
      %v705 = vld [vmem:[%s634 + $0x48] sm:$0xff]
      %v706 = vld [vmem:[%s634 + $0x50] sm:$0xff]
      %v707 = vld [vmem:[%s634 + $0x60] sm:$0xff]
      %v708 = vld [vmem:[%s634 + $0x68] sm:$0xff]
      %v709 = vld [vmem:[%s634 + $0x78] sm:$0xff]
      %v710 = vld [vmem:[%s634 + $0x80] sm:$0xff]
      %v711 = vld [vmem:[%s634 + $0x90] sm:$0xff]
      %v712 = vld [vmem:[%s634 + $0x98] sm:$0xff]
      %v713 = vld [vmem:[%s634 + $0xa8] sm:$0xff]
      %v714 = vld [vmem:[%s634 + $0xb0] sm:$0xff]
      %v715 = vld [vmem:[%s634 + $0x1] sm:$0xff]
      %v716 = vld [vmem:[%s634 + $0x9] sm:$0xff]
      %v717 = vld [vmem:[%s634 + $0x19] sm:$0xff]
      %v718 = vld [vmem:[%s634 + $0x21] sm:$0xff]
      %v719 = vld [vmem:[%s634 + $0x31] sm:$0xff]
      %v720 = vld [vmem:[%s634 + $0x39] sm:$0xff]
      %v721 = vld [vmem:[%s634 + $0x49] sm:$0xff]
      %v722 = vld [vmem:[%s634 + $0x51] sm:$0xff]
      %v723 = vld [vmem:[%s634 + $0x61] sm:$0xff]
      %v724 = vld [vmem:[%s634 + $0x69] sm:$0xff]
      %v725 = vld [vmem:[%s634 + $0x79] sm:$0xff]
      %v726 = vld [vmem:[%s634 + $0x81] sm:$0xff]
      %v727 = vld [vmem:[%s634 + $0x91] sm:$0xff]
      %v728 = vld [vmem:[%s634 + $0x99] sm:$0xff]
      %v729 = vld [vmem:[%s634 + $0xa9] sm:$0xff]
      %v730 = vld [vmem:[%s634 + $0xb1] sm:$0xff]
      %v731 = vld [vmem:[%s634 + $0x2] sm:$0xff]
      %v732 = vld [vmem:[%s634 + $0xa] sm:$0xff]
      %v733 = vld [vmem:[%s634 + $0x1a] sm:$0xff]
      %v734 = vld [vmem:[%s634 + $0x22] sm:$0xff]
      %v735 = vld [vmem:[%s634 + $0x32] sm:$0xff]
      %v736 = vld [vmem:[%s634 + $0x3a] sm:$0xff]
      %v737 = vld [vmem:[%s634 + $0x4a] sm:$0xff]
      %v738 = vld [vmem:[%s634 + $0x52] sm:$0xff]
      %v739 = vld [vmem:[%s634 + $0x62] sm:$0xff]
      %v740 = vld [vmem:[%s634 + $0x6a] sm:$0xff]
      %v741 = vld [vmem:[%s634 + $0x7a] sm:$0xff]
      %v742 = vld [vmem:[%s634 + $0x82] sm:$0xff]
      %v743 = vld [vmem:[%s634 + $0x92] sm:$0xff]
      %v744 = vld [vmem:[%s634 + $0x9a] sm:$0xff]
      %v745 = vld [vmem:[%s634 + $0xaa] sm:$0xff]
      %v746 = vld [vmem:[%s634 + $0xb2] sm:$0xff]
      %s747 = scalar_lea.vmem [#allocation2], 48
      %v748 = vld [vmem:[%s747] sm:$0xff]
      %v749 = vld [vmem:[%s747 + $0x8] sm:$0xff]
      %v750 = vld [vmem:[%s747 + $0x18] sm:$0xff]
      %v751 = vld [vmem:[%s747 + $0x20] sm:$0xff]
      %v752 = vld [vmem:[%s747 + $0x30] sm:$0xff]
      %v753 = vld [vmem:[%s747 + $0x38] sm:$0xff]
      %v754 = vld [vmem:[%s747 + $0x48] sm:$0xff]
      %v755 = vld [vmem:[%s747 + $0x50] sm:$0xff]
      %v756 = vld [vmem:[%s747 + $0x60] sm:$0xff]
      %v757 = vld [vmem:[%s747 + $0x68] sm:$0xff]
      %v758 = vld [vmem:[%s747 + $0x78] sm:$0xff]
      %v759 = vld [vmem:[%s747 + $0x80] sm:$0xff]
      %v760 = vld [vmem:[%s747 + $0x90] sm:$0xff]
      %v761 = vld [vmem:[%s747 + $0x98] sm:$0xff]
      %v762 = vld [vmem:[%s747 + $0xa8] sm:$0xff]
      %v763 = vld [vmem:[%s747 + $0xb0] sm:$0xff]
      %v764 = vld [vmem:[%s747 + $0x1] sm:$0xff]
      %v765 = vld [vmem:[%s747 + $0x9] sm:$0xff]
      %v766 = vld [vmem:[%s747 + $0x19] sm:$0xff]
      %v767 = vld [vmem:[%s747 + $0x21] sm:$0xff]
      %v768 = vld [vmem:[%s747 + $0x31] sm:$0xff]
      %v769 = vld [vmem:[%s747 + $0x39] sm:$0xff]
      %v770 = vld [vmem:[%s747 + $0x49] sm:$0xff]
      %v771 = vld [vmem:[%s747 + $0x51] sm:$0xff]
      %v772 = vld [vmem:[%s747 + $0x61] sm:$0xff]
      %v773 = vld [vmem:[%s747 + $0x69] sm:$0xff]
      %v774 = vld [vmem:[%s747 + $0x79] sm:$0xff]
      %v775 = vld [vmem:[%s747 + $0x81] sm:$0xff]
      %v776 = vld [vmem:[%s747 + $0x91] sm:$0xff]
      %v777 = vld [vmem:[%s747 + $0x99] sm:$0xff]
      %v778 = vld [vmem:[%s747 + $0xa9] sm:$0xff]
      %v779 = vld [vmem:[%s747 + $0xb1] sm:$0xff]
      %v780 = vld [vmem:[%s747 + $0x2] sm:$0xff]
      %v781 = vld [vmem:[%s747 + $0xa] sm:$0xff]
      %v782 = vld [vmem:[%s747 + $0x1a] sm:$0xff]
      %v783 = vld [vmem:[%s747 + $0x22] sm:$0xff]
      %v784 = vld [vmem:[%s747 + $0x32] sm:$0xff]
      %v785 = vld [vmem:[%s747 + $0x3a] sm:$0xff]
      %v786 = vld [vmem:[%s747 + $0x4a] sm:$0xff]
      %v787 = vld [vmem:[%s747 + $0x52] sm:$0xff]
      %v788 = vld [vmem:[%s747 + $0x62] sm:$0xff]
      %v789 = vld [vmem:[%s747 + $0x6a] sm:$0xff]
      %v790 = vld [vmem:[%s747 + $0x7a] sm:$0xff]
      %v791 = vld [vmem:[%s747 + $0x82] sm:$0xff]
      %v792 = vld [vmem:[%s747 + $0x92] sm:$0xff]
      %v793 = vld [vmem:[%s747 + $0x9a] sm:$0xff]
      %v794 = vld [vmem:[%s747 + $0xaa] sm:$0xff]
      %v795 = vld [vmem:[%s747 + $0xb2] sm:$0xff]
      %812 = vrot.lane.b32.xlu0 %v667, 8
      %v813 = vpop.permute.xlu0 %812
      %814 = vrot.lane.b32.xlu0 %v668, 8
      %v815 = vpop.permute.xlu0 %814
      %816 = vrot.lane.b32.xlu0 %v669, 8
      %v817 = vpop.permute.xlu0 %816
      %818 = vrot.lane.b32.xlu0 %v670, 8
      %v819 = vpop.permute.xlu0 %818
      %820 = vrot.lane.b32.xlu0 %v671, 8
      %v821 = vpop.permute.xlu0 %820
      %822 = vrot.lane.b32.xlu0 %v672, 8
      %v823 = vpop.permute.xlu0 %822
      %824 = vrot.lane.b32.xlu0 %v673, 8
      %v825 = vpop.permute.xlu0 %824
      %826 = vrot.lane.b32.xlu0 %v674, 8
      %v827 = vpop.permute.xlu0 %826
      %828 = vrot.lane.b32.xlu0 %v675, 8
      %v829 = vpop.permute.xlu0 %828
      %830 = vrot.lane.b32.xlu0 %v676, 8
      %v831 = vpop.permute.xlu0 %830
      %832 = vrot.lane.b32.xlu0 %v677, 8
      %v833 = vpop.permute.xlu0 %832
      %834 = vrot.lane.b32.xlu0 %v678, 8
      %v835 = vpop.permute.xlu0 %834
      %836 = vrot.lane.b32.xlu0 %v679, 8
      %v837 = vpop.permute.xlu0 %836
      %838 = vrot.lane.b32.xlu0 %v680, 8
      %v839 = vpop.permute.xlu0 %838
      %840 = vrot.lane.b32.xlu0 %v681, 8
      %v841 = vpop.permute.xlu0 %840
      %842 = vrot.lane.b32.xlu0 %v682, 8
      %v843 = vpop.permute.xlu0 %842
      %876 = vrot.lane.b32.xlu0 %v683, 16
      %v877 = vpop.permute.xlu0 %876
      %878 = vrot.lane.b32.xlu0 %v684, 16
      %v879 = vpop.permute.xlu0 %878
      %880 = vrot.lane.b32.xlu0 %v685, 16
      %v881 = vpop.permute.xlu0 %880
      %882 = vrot.lane.b32.xlu0 %v686, 16
      %v883 = vpop.permute.xlu0 %882
      %884 = vrot.lane.b32.xlu0 %v687, 16
      %v885 = vpop.permute.xlu0 %884
      %886 = vrot.lane.b32.xlu0 %v688, 16
      %v887 = vpop.permute.xlu0 %886
      %888 = vrot.lane.b32.xlu0 %v689, 16
      %v889 = vpop.permute.xlu0 %888
      %890 = vrot.lane.b32.xlu0 %v690, 16
      %v891 = vpop.permute.xlu0 %890
      %892 = vrot.lane.b32.xlu0 %v691, 16
      %v893 = vpop.permute.xlu0 %892
      %894 = vrot.lane.b32.xlu0 %v692, 16
      %v895 = vpop.permute.xlu0 %894
      %896 = vrot.lane.b32.xlu0 %v693, 16
      %v897 = vpop.permute.xlu0 %896
      %898 = vrot.lane.b32.xlu0 %v694, 16
      %v899 = vpop.permute.xlu0 %898
      %900 = vrot.lane.b32.xlu0 %v695, 16
      %v901 = vpop.permute.xlu0 %900
      %902 = vrot.lane.b32.xlu0 %v696, 16
      %v903 = vpop.permute.xlu0 %902
      %904 = vrot.lane.b32.xlu0 %v697, 16
      %v905 = vpop.permute.xlu0 %904
      %906 = vrot.lane.b32.xlu0 %v698, 16
      %v907 = vpop.permute.xlu0 %906
      %940 = vrot.lane.b32.xlu0 %v699, 24
      %v941 = vpop.permute.xlu0 %940
      %942 = vrot.lane.b32.xlu0 %v700, 24
      %v943 = vpop.permute.xlu0 %942
      %944 = vrot.lane.b32.xlu0 %v701, 24
      %v945 = vpop.permute.xlu0 %944
      %946 = vrot.lane.b32.xlu0 %v702, 24
      %v947 = vpop.permute.xlu0 %946
      %948 = vrot.lane.b32.xlu0 %v703, 24
      %v949 = vpop.permute.xlu0 %948
      %950 = vrot.lane.b32.xlu0 %v704, 24
      %v951 = vpop.permute.xlu0 %950
      %952 = vrot.lane.b32.xlu0 %v705, 24
      %v953 = vpop.permute.xlu0 %952
      %954 = vrot.lane.b32.xlu0 %v706, 24
      %v955 = vpop.permute.xlu0 %954
      %956 = vrot.lane.b32.xlu0 %v707, 24
      %v957 = vpop.permute.xlu0 %956
      %958 = vrot.lane.b32.xlu0 %v708, 24
      %v959 = vpop.permute.xlu0 %958
      %960 = vrot.lane.b32.xlu0 %v709, 24
      %v961 = vpop.permute.xlu0 %960
      %962 = vrot.lane.b32.xlu0 %v710, 24
      %v963 = vpop.permute.xlu0 %962
      %964 = vrot.lane.b32.xlu0 %v711, 24
      %v965 = vpop.permute.xlu0 %964
      %966 = vrot.lane.b32.xlu0 %v712, 24
      %v967 = vpop.permute.xlu0 %966
      %968 = vrot.lane.b32.xlu0 %v713, 24
      %v969 = vpop.permute.xlu0 %968
      %970 = vrot.lane.b32.xlu0 %v714, 24
      %v971 = vpop.permute.xlu0 %970
      %1004 = vrot.lane.b32.xlu0 %v715, 32
      %v1005 = vpop.permute.xlu0 %1004
      %1006 = vrot.lane.b32.xlu0 %v716, 32
      %v1007 = vpop.permute.xlu0 %1006
      %1008 = vrot.lane.b32.xlu0 %v717, 32
      %v1009 = vpop.permute.xlu0 %1008
      %1010 = vrot.lane.b32.xlu0 %v718, 32
      %v1011 = vpop.permute.xlu0 %1010
      %1012 = vrot.lane.b32.xlu0 %v719, 32
      %v1013 = vpop.permute.xlu0 %1012
      %1014 = vrot.lane.b32.xlu0 %v720, 32
      %v1015 = vpop.permute.xlu0 %1014
      %1016 = vrot.lane.b32.xlu0 %v721, 32
      %v1017 = vpop.permute.xlu0 %1016
      %1018 = vrot.lane.b32.xlu0 %v722, 32
      %v1019 = vpop.permute.xlu0 %1018
      %1020 = vrot.lane.b32.xlu0 %v723, 32
      %v1021 = vpop.permute.xlu0 %1020
      %1022 = vrot.lane.b32.xlu0 %v724, 32
      %v1023 = vpop.permute.xlu0 %1022
      %1024 = vrot.lane.b32.xlu0 %v725, 32
      %v1025 = vpop.permute.xlu0 %1024
      %1026 = vrot.lane.b32.xlu0 %v726, 32
      %v1027 = vpop.permute.xlu0 %1026
      %1028 = vrot.lane.b32.xlu0 %v727, 32
      %v1029 = vpop.permute.xlu0 %1028
      %1030 = vrot.lane.b32.xlu0 %v728, 32
      %v1031 = vpop.permute.xlu0 %1030
      %1032 = vrot.lane.b32.xlu0 %v729, 32
      %v1033 = vpop.permute.xlu0 %1032
      %1034 = vrot.lane.b32.xlu0 %v730, 32
      %v1035 = vpop.permute.xlu0 %1034
      %1068 = vrot.lane.b32.xlu0 %v731, 40
      %v1069 = vpop.permute.xlu0 %1068
      %1070 = vrot.lane.b32.xlu0 %v732, 40
      %v1071 = vpop.permute.xlu0 %1070
      %1072 = vrot.lane.b32.xlu0 %v733, 40
      %v1073 = vpop.permute.xlu0 %1072
      %1074 = vrot.lane.b32.xlu0 %v734, 40
      %v1075 = vpop.permute.xlu0 %1074
      %1076 = vrot.lane.b32.xlu0 %v735, 40
      %v1077 = vpop.permute.xlu0 %1076
      %1078 = vrot.lane.b32.xlu0 %v736, 40
      %v1079 = vpop.permute.xlu0 %1078
      %1080 = vrot.lane.b32.xlu0 %v737, 40
      %v1081 = vpop.permute.xlu0 %1080
      %1082 = vrot.lane.b32.xlu0 %v738, 40
      %v1083 = vpop.permute.xlu0 %1082
      %1084 = vrot.lane.b32.xlu0 %v739, 40
      %v1085 = vpop.permute.xlu0 %1084
      %1086 = vrot.lane.b32.xlu0 %v740, 40
      %v1087 = vpop.permute.xlu0 %1086
      %1088 = vrot.lane.b32.xlu0 %v741, 40
      %v1089 = vpop.permute.xlu0 %1088
      %1090 = vrot.lane.b32.xlu0 %v742, 40
      %v1091 = vpop.permute.xlu0 %1090
      %1092 = vrot.lane.b32.xlu0 %v743, 40
      %v1093 = vpop.permute.xlu0 %1092
      %1094 = vrot.lane.b32.xlu0 %v744, 40
      %v1095 = vpop.permute.xlu0 %1094
      %1096 = vrot.lane.b32.xlu0 %v745, 40
      %v1097 = vpop.permute.xlu0 %1096
      %1098 = vrot.lane.b32.xlu0 %v746, 40
      %v1099 = vpop.permute.xlu0 %1098
      %1132 = vrot.lane.b32.xlu0 %v748, 48
      %v1133 = vpop.permute.xlu0 %1132
      %1134 = vrot.lane.b32.xlu0 %v749, 48
      %v1135 = vpop.permute.xlu0 %1134
      %1136 = vrot.lane.b32.xlu0 %v750, 48
      %v1137 = vpop.permute.xlu0 %1136
      %1138 = vrot.lane.b32.xlu0 %v751, 48
      %v1139 = vpop.permute.xlu0 %1138
      %1140 = vrot.lane.b32.xlu0 %v752, 48
      %v1141 = vpop.permute.xlu0 %1140
      %1142 = vrot.lane.b32.xlu0 %v753, 48
      %v1143 = vpop.permute.xlu0 %1142
      %1144 = vrot.lane.b32.xlu0 %v754, 48
      %v1145 = vpop.permute.xlu0 %1144
      %1146 = vrot.lane.b32.xlu0 %v755, 48
      %v1147 = vpop.permute.xlu0 %1146
      %1148 = vrot.lane.b32.xlu0 %v756, 48
      %v1149 = vpop.permute.xlu0 %1148
      %1150 = vrot.lane.b32.xlu0 %v757, 48
      %v1151 = vpop.permute.xlu0 %1150
      %1152 = vrot.lane.b32.xlu0 %v758, 48
      %v1153 = vpop.permute.xlu0 %1152
      %1154 = vrot.lane.b32.xlu0 %v759, 48
      %v1155 = vpop.permute.xlu0 %1154
      %1156 = vrot.lane.b32.xlu0 %v760, 48
      %v1157 = vpop.permute.xlu0 %1156
      %1158 = vrot.lane.b32.xlu0 %v761, 48
      %v1159 = vpop.permute.xlu0 %1158
      %1160 = vrot.lane.b32.xlu0 %v762, 48
      %v1161 = vpop.permute.xlu0 %1160
      %1162 = vrot.lane.b32.xlu0 %v763, 48
      %v1163 = vpop.permute.xlu0 %1162
      %1196 = vrot.lane.b32.xlu0 %v764, 56
      %v1197 = vpop.permute.xlu0 %1196
      %1198 = vrot.lane.b32.xlu0 %v765, 56
      %v1199 = vpop.permute.xlu0 %1198
      %1200 = vrot.lane.b32.xlu0 %v766, 56
      %v1201 = vpop.permute.xlu0 %1200
      %1202 = vrot.lane.b32.xlu0 %v767, 56
      %v1203 = vpop.permute.xlu0 %1202
      %1204 = vrot.lane.b32.xlu0 %v768, 56
      %v1205 = vpop.permute.xlu0 %1204
      %1206 = vrot.lane.b32.xlu0 %v769, 56
      %v1207 = vpop.permute.xlu0 %1206
      %1208 = vrot.lane.b32.xlu0 %v770, 56
      %v1209 = vpop.permute.xlu0 %1208
      %1210 = vrot.lane.b32.xlu0 %v771, 56
      %v1211 = vpop.permute.xlu0 %1210
      %1212 = vrot.lane.b32.xlu0 %v772, 56
      %v1213 = vpop.permute.xlu0 %1212
      %1214 = vrot.lane.b32.xlu0 %v773, 56
      %v1215 = vpop.permute.xlu0 %1214
      %1216 = vrot.lane.b32.xlu0 %v774, 56
      %v1217 = vpop.permute.xlu0 %1216
      %1218 = vrot.lane.b32.xlu0 %v775, 56
      %v1219 = vpop.permute.xlu0 %1218
      %1220 = vrot.lane.b32.xlu0 %v776, 56
      %v1221 = vpop.permute.xlu0 %1220
      %1222 = vrot.lane.b32.xlu0 %v777, 56
      %v1223 = vpop.permute.xlu0 %1222
      %1224 = vrot.lane.b32.xlu0 %v778, 56
      %v1225 = vpop.permute.xlu0 %1224
      %1226 = vrot.lane.b32.xlu0 %v779, 56
      %v1227 = vpop.permute.xlu0 %1226
      %1260 = vrot.lane.b32.xlu0 %v780, 64
      %v1261 = vpop.permute.xlu0 %1260
      %1262 = vrot.lane.b32.xlu0 %v781, 64
      %v1263 = vpop.permute.xlu0 %1262
      %1264 = vrot.lane.b32.xlu0 %v782, 64
      %v1265 = vpop.permute.xlu0 %1264
      %1266 = vrot.lane.b32.xlu0 %v783, 64
      %v1267 = vpop.permute.xlu0 %1266
      %1268 = vrot.lane.b32.xlu0 %v784, 64
      %v1269 = vpop.permute.xlu0 %1268
      %1270 = vrot.lane.b32.xlu0 %v785, 64
      %v1271 = vpop.permute.xlu0 %1270
      %1272 = vrot.lane.b32.xlu0 %v786, 64
      %v1273 = vpop.permute.xlu0 %1272
      %1274 = vrot.lane.b32.xlu0 %v787, 64
      %v1275 = vpop.permute.xlu0 %1274
      %1276 = vrot.lane.b32.xlu0 %v788, 64
      %v1277 = vpop.permute.xlu0 %1276
      %1278 = vrot.lane.b32.xlu0 %v789, 64
      %v1279 = vpop.permute.xlu0 %1278
      %1280 = vrot.lane.b32.xlu0 %v790, 64
      %v1281 = vpop.permute.xlu0 %1280
      %1282 = vrot.lane.b32.xlu0 %v791, 64
      %v1283 = vpop.permute.xlu0 %1282
      %1284 = vrot.lane.b32.xlu0 %v792, 64
      %v1285 = vpop.permute.xlu0 %1284
      %1286 = vrot.lane.b32.xlu0 %v793, 64
      %v1287 = vpop.permute.xlu0 %1286
      %1288 = vrot.lane.b32.xlu0 %v794, 64
      %v1289 = vpop.permute.xlu0 %1288
      %1290 = vrot.lane.b32.xlu0 %v795, 64
      %v1291 = vpop.permute.xlu0 %1290
      %v1308 = vsel %vm628, %v651, %v813
      %v1309 = vsel %vm628, %v652, %v815
      %v1310 = vsel %vm628, %v653, %v817
      %v1311 = vsel %vm628, %v654, %v819
      %v1312 = vsel %vm628, %v655, %v821
      %v1313 = vsel %vm628, %v656, %v823
      %v1314 = vsel %vm628, %v657, %v825
      %v1315 = vsel %vm628, %v658, %v827
      %v1316 = vsel %vm628, %v659, %v829
      %v1317 = vsel %vm628, %v660, %v831
      %v1318 = vsel %vm628, %v661, %v833
      %v1319 = vsel %vm628, %v662, %v835
      %v1320 = vsel %vm628, %v663, %v837
      %v1321 = vsel %vm628, %v664, %v839
      %v1322 = vsel %vm628, %v665, %v841
      %v1323 = vsel %vm628, %v666, %v843
      %vm1324 = vcmask 130048
      %v1325 = vsel %vm1324, %v1308, %v877
      %v1326 = vsel %vm1324, %v1309, %v879
      %v1327 = vsel %vm1324, %v1310, %v881
      %v1328 = vsel %vm1324, %v1311, %v883
      %v1329 = vsel %vm1324, %v1312, %v885
      %v1330 = vsel %vm1324, %v1313, %v887
      %v1331 = vsel %vm1324, %v1314, %v889
      %v1332 = vsel %vm1324, %v1315, %v891
      %v1333 = vsel %vm1324, %v1316, %v893
      %v1334 = vsel %vm1324, %v1317, %v895
      %v1335 = vsel %vm1324, %v1318, %v897
      %v1336 = vsel %vm1324, %v1319, %v899
      %v1337 = vsel %vm1324, %v1320, %v901
      %v1338 = vsel %vm1324, %v1321, %v903
      %v1339 = vsel %vm1324, %v1322, %v905
      %v1340 = vsel %vm1324, %v1323, %v907
      %vm1341 = vcmask 195584
      %v1342 = vsel %vm1341, %v1325, %v941
      %v1343 = vsel %vm1341, %v1326, %v943
      %v1344 = vsel %vm1341, %v1327, %v945
      %v1345 = vsel %vm1341, %v1328, %v947
      %v1346 = vsel %vm1341, %v1329, %v949
      %v1347 = vsel %vm1341, %v1330, %v951
      %v1348 = vsel %vm1341, %v1331, %v953
      %v1349 = vsel %vm1341, %v1332, %v955
      %v1350 = vsel %vm1341, %v1333, %v957
      %v1351 = vsel %vm1341, %v1334, %v959
      %v1352 = vsel %vm1341, %v1335, %v961
      %v1353 = vsel %vm1341, %v1336, %v963
      %v1354 = vsel %vm1341, %v1337, %v965
      %v1355 = vsel %vm1341, %v1338, %v967
      %v1356 = vsel %vm1341, %v1339, %v969
      %v1357 = vsel %vm1341, %v1340, %v971
      %vm1358 = vcmask 261120
      %v1359 = vsel %vm1358, %v1342, %v1005
      %v1360 = vsel %vm1358, %v1343, %v1007
      %v1361 = vsel %vm1358, %v1344, %v1009
      %v1362 = vsel %vm1358, %v1345, %v1011
      %v1363 = vsel %vm1358, %v1346, %v1013
      %v1364 = vsel %vm1358, %v1347, %v1015
      %v1365 = vsel %vm1358, %v1348, %v1017
      %v1366 = vsel %vm1358, %v1349, %v1019
      %v1367 = vsel %vm1358, %v1350, %v1021
      %v1368 = vsel %vm1358, %v1351, %v1023
      %v1369 = vsel %vm1358, %v1352, %v1025
      %v1370 = vsel %vm1358, %v1353, %v1027
      %v1371 = vsel %vm1358, %v1354, %v1029
      %v1372 = vsel %vm1358, %v1355, %v1031
      %v1373 = vsel %vm1358, %v1356, %v1033
      %v1374 = vsel %vm1358, %v1357, %v1035
      %vm1375 = vcmask 326656
      %v1376 = vsel %vm1375, %v1359, %v1069
      %v1377 = vsel %vm1375, %v1360, %v1071
      %v1378 = vsel %vm1375, %v1361, %v1073
      %v1379 = vsel %vm1375, %v1362, %v1075
      %v1380 = vsel %vm1375, %v1363, %v1077
      %v1381 = vsel %vm1375, %v1364, %v1079
      %v1382 = vsel %vm1375, %v1365, %v1081
      %v1383 = vsel %vm1375, %v1366, %v1083
      %v1384 = vsel %vm1375, %v1367, %v1085
      %v1385 = vsel %vm1375, %v1368, %v1087
      %v1386 = vsel %vm1375, %v1369, %v1089
      %v1387 = vsel %vm1375, %v1370, %v1091
      %v1388 = vsel %vm1375, %v1371, %v1093
      %v1389 = vsel %vm1375, %v1372, %v1095
      %v1390 = vsel %vm1375, %v1373, %v1097
      %v1391 = vsel %vm1375, %v1374, %v1099
      %vm1392 = vcmask 392192
      %v1393 = vsel %vm1392, %v1376, %v1133
      %v1394 = vsel %vm1392, %v1377, %v1135
      %v1395 = vsel %vm1392, %v1378, %v1137
      %v1396 = vsel %vm1392, %v1379, %v1139
      %v1397 = vsel %vm1392, %v1380, %v1141
      %v1398 = vsel %vm1392, %v1381, %v1143
      %v1399 = vsel %vm1392, %v1382, %v1145
      %v1400 = vsel %vm1392, %v1383, %v1147
      %v1401 = vsel %vm1392, %v1384, %v1149
      %v1402 = vsel %vm1392, %v1385, %v1151
      %v1403 = vsel %vm1392, %v1386, %v1153
      %v1404 = vsel %vm1392, %v1387, %v1155
      %v1405 = vsel %vm1392, %v1388, %v1157
      %v1406 = vsel %vm1392, %v1389, %v1159
      %v1407 = vsel %vm1392, %v1390, %v1161
      %v1408 = vsel %vm1392, %v1391, %v1163
      %vm1409 = vcmask 457728
      %v1410 = vsel %vm1409, %v1393, %v1197
      %v1411 = vsel %vm1409, %v1394, %v1199
      %v1412 = vsel %vm1409, %v1395, %v1201
      %v1413 = vsel %vm1409, %v1396, %v1203
      %v1414 = vsel %vm1409, %v1397, %v1205
      %v1415 = vsel %vm1409, %v1398, %v1207
      %v1416 = vsel %vm1409, %v1399, %v1209
      %v1417 = vsel %vm1409, %v1400, %v1211
      %v1418 = vsel %vm1409, %v1401, %v1213
      %v1419 = vsel %vm1409, %v1402, %v1215
      %v1420 = vsel %vm1409, %v1403, %v1217
      %v1421 = vsel %vm1409, %v1404, %v1219
      %v1422 = vsel %vm1409, %v1405, %v1221
      %v1423 = vsel %vm1409, %v1406, %v1223
      %v1424 = vsel %vm1409, %v1407, %v1225
      %v1425 = vsel %vm1409, %v1408, %v1227
      %vm1426 = vcmask 523264
      %v1427 = vsel %vm1426, %v1410, %v1261
      %v1428 = vsel %vm1426, %v1411, %v1263
      %v1429 = vsel %vm1426, %v1412, %v1265
      %v1430 = vsel %vm1426, %v1413, %v1267
      %v1431 = vsel %vm1426, %v1414, %v1269
      %v1432 = vsel %vm1426, %v1415, %v1271
      %v1433 = vsel %vm1426, %v1416, %v1273
      %v1434 = vsel %vm1426, %v1417, %v1275
      %v1435 = vsel %vm1426, %v1418, %v1277
      %v1436 = vsel %vm1426, %v1419, %v1279
      %v1437 = vsel %vm1426, %v1420, %v1281
      %v1438 = vsel %vm1426, %v1421, %v1283
      %v1439 = vsel %vm1426, %v1422, %v1285
      %v1440 = vsel %vm1426, %v1423, %v1287
      %v1441 = vsel %vm1426, %v1424, %v1289
      %v1442 = vsel %vm1426, %v1425, %v1291
      %v1443 = vld [vmem:[%s4] sm:$0xff]
      %v1444 = vld [vmem:[%s4 + $0x8] sm:$0xff]
      %v1445 = vld [vmem:[%s4 + $0x10] sm:$0xff]
      %v1446 = vld [vmem:[%s4 + $0x18] sm:$0xff]
      %v1447 = vld [vmem:[%s4 + $0x20] sm:$0xff]
      %v1448 = vld [vmem:[%s4 + $0x28] sm:$0xff]
      %v1449 = vld [vmem:[%s4 + $0x30] sm:$0xff]
      %v1450 = vld [vmem:[%s4 + $0x38] sm:$0xff]
      %v1451 = vld [vmem:[%s4 + $0x40] sm:$0xff]
      %v1452 = vld [vmem:[%s5] sm:$0x1]
      %v1454 = vperm.slane %v1452, 0
      %vm1456 = vcmask 588800
      %v1458 = vsel %vm1456, %v1427, 0
      %v1461 = vsel %vm1456, %v1428, 0
      %v1464 = vsel %vm1456, %v1429, 0
      %v1467 = vsel %vm1456, %v1430, 0
      %v1470 = vsel %vm1456, %v1431, 0
      %v1473 = vsel %vm1456, %v1432, 0
      %v1476 = vsel %vm1456, %v1433, 0
      %v1479 = vsel %vm1456, %v1434, 0
      %v1482 = vsel %vm1456, %v1435, 0
      %v1485 = vsel %vm1456, %v1436, 0
      %v1488 = vsel %vm1456, %v1437, 0
      %v1491 = vsel %vm1456, %v1438, 0
      %v1494 = vsel %vm1456, %v1439, 0
      %v1497 = vsel %vm1456, %v1440, 0
      %v1500 = vsel %vm1456, %v1441, 0
      %v1503 = vsel %vm1456, %v1442, 0
      %1505 = vmatpush.msra.mxu0 0.0
      %1506 = vmatpush.msra.mxu0 0.0
      %1507 = vmatpush.msra.mxu0 0.0
      %1508 = vmatpush.msra.mxu0 0.0
      %1509 = vmatpush.msra.mxu0 0.0
      %1510 = vmatpush.msra.mxu0 0.0
      %1511 = vmatpush.msra.mxu0 0.0
      %1512 = vmatpush.msra.mxu0 %v1451
      %1513 = vmatpush.msra.mxu0 %v1450
      %1514 = vmatpush.msra.mxu0 %v1449
      %1515 = vmatpush.msra.mxu0 %v1448
      %1516 = vmatpush.msra.mxu0 %v1447
      %1517 = vmatpush.msra.mxu0 %v1446
      %1518 = vmatpush.msra.mxu0 %v1445
      %1519 = vmatpush.msra.mxu0 %v1444
      %1520 = vmatpush.msra.mxu0 %v1443
      %1521 = vmatmul.f32.gmra.mxu0 %v1458
      %v1522 = vpop.f32.mrf.mxu0
      %v1523 = vadd.f32 %v1454, %v1522
      %1524 = vmatmul.f32.gmra.mxu0 %v1461
      %v1525 = vpop.f32.mrf.mxu0
      %v1526 = vadd.f32 %v1454, %v1525
      %1527 = vmatmul.f32.gmra.mxu0 %v1464
      %v1528 = vpop.f32.mrf.mxu0
      %v1529 = vadd.f32 %v1454, %v1528
      %1530 = vmatmul.f32.gmra.mxu0 %v1467
      %v1531 = vpop.f32.mrf.mxu0
      %v1532 = vadd.f32 %v1454, %v1531
      %1533 = vmatmul.f32.gmra.mxu0 %v1470
      %v1534 = vpop.f32.mrf.mxu0
      %v1535 = vadd.f32 %v1454, %v1534
      %1536 = vmatmul.f32.gmra.mxu0 %v1473
      %v1537 = vpop.f32.mrf.mxu0
      %v1538 = vadd.f32 %v1454, %v1537
      %1539 = vmatmul.f32.gmra.mxu0 %v1476
      %v1540 = vpop.f32.mrf.mxu0
      %v1541 = vadd.f32 %v1454, %v1540
      %1542 = vmatmul.f32.gmra.mxu0 %v1479
      %v1543 = vpop.f32.mrf.mxu0
      %v1544 = vadd.f32 %v1454, %v1543
      %1545 = vmatmul.f32.gmra.mxu0 %v1482
      %v1546 = vpop.f32.mrf.mxu0
      %v1547 = vadd.f32 %v1454, %v1546
      %1548 = vmatmul.f32.gmra.mxu0 %v1485
      %v1549 = vpop.f32.mrf.mxu0
      %v1550 = vadd.f32 %v1454, %v1549
      %1551 = vmatmul.f32.gmra.mxu0 %v1488
      %v1552 = vpop.f32.mrf.mxu0
      %v1553 = vadd.f32 %v1454, %v1552
      %1554 = vmatmul.f32.gmra.mxu0 %v1491
      %v1555 = vpop.f32.mrf.mxu0
      %v1556 = vadd.f32 %v1454, %v1555
      %1557 = vmatmul.f32.gmra.mxu0 %v1494
      %v1558 = vpop.f32.mrf.mxu0
      %v1559 = vadd.f32 %v1454, %v1558
      %1560 = vmatmul.f32.gmra.mxu0 %v1497
      %v1561 = vpop.f32.mrf.mxu0
      %v1562 = vadd.f32 %v1454, %v1561
      %1563 = vmatmul.f32.gmra.mxu0 %v1500
      %v1564 = vpop.f32.mrf.mxu0
      %v1565 = vadd.f32 %v1454, %v1564
      %1566 = vmatmul.f32.gmra.mxu0 %v1503
      %v1567 = vpop.f32.mrf.mxu0
      %v1568 = vadd.f32 %v1454, %v1567
      %1569 = vdwg.mxu0
      %1570 = vst.msk [vmem:[%s495] sm:$0xff] %vm628, %v1523
      %1571 = vst.msk [vmem:[%s495 + $0x8] sm:$0xff] %vm628, %v1526
      %1572 = vst.msk [vmem:[%s495 + $0x10] sm:$0xff] %vm628, %v1529
      %1573 = vst.msk [vmem:[%s495 + $0x18] sm:$0xff] %vm628, %v1532
      %1574 = vst.msk [vmem:[%s495 + $0x20] sm:$0xff] %vm628, %v1535
      %1575 = vst.msk [vmem:[%s495 + $0x28] sm:$0xff] %vm628, %v1538
      %1576 = vst.msk [vmem:[%s495 + $0x30] sm:$0xff] %vm628, %v1541
      %1577 = vst.msk [vmem:[%s495 + $0x38] sm:$0xff] %vm628, %v1544
      %1578 = vst.msk [vmem:[%s495 + $0x40] sm:$0xff] %vm628, %v1547
      %1579 = vst.msk [vmem:[%s495 + $0x48] sm:$0xff] %vm628, %v1550
      %1580 = vst.msk [vmem:[%s495 + $0x50] sm:$0xff] %vm628, %v1553
      %1581 = vst.msk [vmem:[%s495 + $0x58] sm:$0xff] %vm628, %v1556
      %1582 = vst.msk [vmem:[%s495 + $0x60] sm:$0xff] %vm628, %v1559
      %1583 = vst.msk [vmem:[%s495 + $0x68] sm:$0xff] %vm628, %v1562
      %1584 = vst.msk [vmem:[%s495 + $0x70] sm:$0xff] %vm628, %v1565
      %1585 = vst.msk [vmem:[%s495 + $0x78] sm:$0xff] %vm628, %v1568
      %v1586 = vsel %vm628, %v1523, 0.0
      %v1587 = vsel %vm628, %v1526, 0.0
      %v1588 = vadd.f32 %v1586, %v1587
      %v1589 = vsel %vm628, %v1529, 0.0
      %v1590 = vadd.f32 %v1588, %v1589
      %v1591 = vsel %vm628, %v1532, 0.0
      %v1592 = vadd.f32 %v1590, %v1591
      %v1593 = vsel %vm628, %v1535, 0.0
      %v1594 = vadd.f32 %v1592, %v1593
      %v1595 = vsel %vm628, %v1538, 0.0
      %v1596 = vadd.f32 %v1594, %v1595
      %v1597 = vsel %vm628, %v1541, 0.0
      %v1598 = vadd.f32 %v1596, %v1597
      %v1599 = vsel %vm628, %v1544, 0.0
      %v1600 = vadd.f32 %v1598, %v1599
      %v1601 = vsel %vm628, %v1547, 0.0
      %v1602 = vadd.f32 %v1600, %v1601
      %v1603 = vsel %vm628, %v1550, 0.0
      %v1604 = vadd.f32 %v1602, %v1603
      %v1605 = vsel %vm628, %v1553, 0.0
      %v1606 = vadd.f32 %v1604, %v1605
      %v1607 = vsel %vm628, %v1556, 0.0
      %v1608 = vadd.f32 %v1606, %v1607
      %v1609 = vsel %vm628, %v1559, 0.0
      %v1610 = vadd.f32 %v1608, %v1609
      %v1611 = vsel %vm628, %v1562, 0.0
      %v1612 = vadd.f32 %v1610, %v1611
      %v1613 = vsel %vm628, %v1565, 0.0
      %v1614 = vadd.f32 %v1612, %v1613
      %v1615 = vsel %vm628, %v1568, 0.0
      %v1616 = vadd.f32 %v1614, %v1615
      %v1617 = vrot.slane %v1616, 4
      %v1618 = vadd.f32 %v1616, %v1617
      %v1619 = vrot.slane %v1618, 2
      %v1620 = vadd.f32 %v1618, %v1619
      %v1621 = vrot.slane %v1620, 1
      %v1622 = vadd.f32 %v1620, %v1621
      %1623 = vst.msk [vmem:[%s501] sm:$0x1] %vm607, %v1622
      %v1624 = vmul.f32 %v1523, %v1523
      %v1625 = vmul.f32 %v1526, %v1526
      %v1626 = vmul.f32 %v1529, %v1529
      %v1627 = vmul.f32 %v1532, %v1532
      %v1628 = vmul.f32 %v1535, %v1535
      %v1629 = vmul.f32 %v1538, %v1538
      %v1630 = vmul.f32 %v1541, %v1541
      %v1631 = vmul.f32 %v1544, %v1544
      %v1632 = vmul.f32 %v1547, %v1547
      %v1633 = vmul.f32 %v1550, %v1550
      %v1634 = vmul.f32 %v1553, %v1553
      %v1635 = vmul.f32 %v1556, %v1556
      %v1636 = vmul.f32 %v1559, %v1559
      %v1637 = vmul.f32 %v1562, %v1562
      %v1638 = vmul.f32 %v1565, %v1565
      %v1639 = vmul.f32 %v1568, %v1568
      %v1640 = vsel %vm628, %v1624, 0.0
      %v1641 = vsel %vm628, %v1625, 0.0
      %v1642 = vadd.f32 %v1640, %v1641
      %v1643 = vsel %vm628, %v1626, 0.0
      %v1644 = vadd.f32 %v1642, %v1643
      %v1645 = vsel %vm628, %v1627, 0.0
      %v1646 = vadd.f32 %v1644, %v1645
      %v1647 = vsel %vm628, %v1628, 0.0
      %v1648 = vadd.f32 %v1646, %v1647
      %v1649 = vsel %vm628, %v1629, 0.0
      %v1650 = vadd.f32 %v1648, %v1649
      %v1651 = vsel %vm628, %v1630, 0.0
      %v1652 = vadd.f32 %v1650, %v1651
      %v1653 = vsel %vm628, %v1631, 0.0
      %v1654 = vadd.f32 %v1652, %v1653
      %v1655 = vsel %vm628, %v1632, 0.0
      %v1656 = vadd.f32 %v1654, %v1655
      %v1657 = vsel %vm628, %v1633, 0.0
      %v1658 = vadd.f32 %v1656, %v1657
      %v1659 = vsel %vm628, %v1634, 0.0
      %v1660 = vadd.f32 %v1658, %v1659
      %v1661 = vsel %vm628, %v1635, 0.0
      %v1662 = vadd.f32 %v1660, %v1661
      %v1663 = vsel %vm628, %v1636, 0.0
      %v1664 = vadd.f32 %v1662, %v1663
      %v1665 = vsel %vm628, %v1637, 0.0
      %v1666 = vadd.f32 %v1664, %v1665
      %v1667 = vsel %vm628, %v1638, 0.0
      %v1668 = vadd.f32 %v1666, %v1667
      %v1669 = vsel %vm628, %v1639, 0.0
      %v1670 = vadd.f32 %v1668, %v1669
      %v1671 = vrot.slane %v1670, 4
      %v1672 = vadd.f32 %v1670, %v1671
      %v1673 = vrot.slane %v1672, 2
      %v1674 = vadd.f32 %v1672, %v1673
      %v1675 = vrot.slane %v1674, 1
      %v1676 = vadd.f32 %v1674, %v1675
      %1677 = vst.msk [vmem:[%s508] sm:$0x1] %vm607, %v1676
      %s1678 = smul.u32 8, %s25
      %p1679 = scmp.lt.s32.totalorder %s24, 1
      %s1680 = scalar_select %p1679, %s24, 1
      %p1681 = scmp.lt.s32.totalorder %s1678, 15
      %s1682 = scalar_select %p1681, %s1678, 15
      %s1683 = smul.addr %s1682, 2
      %s1684 = smul.addr %s1680, 32
      %s1685 = sadd.s32 %s1683, %s1684
      %s1686 = smul.addr %s1685, 8
      %s1687 = scalar_lea.vmem %s6, %s1686
      %s1688 = smul.u32 %s24, 2
      %s1689 = sadd.s32 %s1688, %s25
      %p1690 = scmp.lt.s32.totalorder %s1689, 3
      %s1691 = scalar_select %p1690, %s1689, 3
      %s1692 = scalar_lea.vmem %s7, %s1691
      %s1693 = smul.u32 %s24, 2
      %s1694 = sadd.s32 %s1693, %s25
      %p1695 = scmp.lt.s32.totalorder %s1694, 3
      %s1696 = scalar_select %p1695, %s1694, 3
      %s1697 = scalar_lea.vmem %s8, %s1696
      // Predicated region
      $region45: #{double_conv.4} parent=43 // pred_check
        %p1698 = pneg %p215
      $region46: #{double_conv.4} parent=43 // pred_check_branch
        %1700 = sbr.rel (%p1698) target = $region48
      $region47: #{double_conv.4} parent=43 // pred_region
        %s1701 = smul.u32 8, %s25
      $region48: #{double_conv.4} parent=43 // pred_fallthru
        _
      // Predicated region
      $region49: #{double_conv.4} parent=43 // pred_check
        %p1702 = pneg %p245
      $region50: #{double_conv.4} parent=43 // pred_check_branch
        %1704 = sbr.rel (%p1702) target = $region52
      $region51: #{double_conv.4} parent=43 // pred_region
        %s1705 = smul.u32 %s24, 2
        %s1706 = sadd.s32 %s1705, %s25
      $region52: #{double_conv.4} parent=43 // pred_fallthru
        _
      // Predicated region
      $region53: #{double_conv.4} parent=43 // pred_check
        %p1707 = pneg %p275
      $region54: #{double_conv.4} parent=43 // pred_check_branch
        %1709 = sbr.rel (%p1707) target = $region56
      $region55: #{double_conv.4} parent=43 // pred_region
        %s1710 = smul.u32 %s24, 2
        %s1711 = sadd.s32 %s1710, %s25
      $region56: #{double_conv.4} parent=43 // pred_fallthru
        _
    $region44: #{double_conv.4} parent=5 // pred_fallthru
      _
    %p1712 = scmp.le.s32.totalorder 2, %s15
    // Predicated region
    $region57: #{double_conv.4} parent=5 // pred_check
      %p1713 = pneg %p1712
    $region58: #{double_conv.4} parent=5 // pred_check_branch
      %1715 = sbr.rel (%p1713) target = $region60
    $region59: #{double_conv.4} parent=5 // pred_region
      %s1716 = ssub.s32 %s15, 2
      // Predicated region
      $region61: #{double_conv.4} parent=59 // pred_check
        %p1717 = pneg %p221
      $region62: #{double_conv.4} parent=59 // pred_check_branch
        %1719 = sbr.rel (%p1717) target = $region64
      $region63: #{double_conv.4} parent=59 // pred_region
        %s1720 = smul.u32 8, %s27
        %p1721 = scmp.lt.s32.totalorder %s26, 1
        %s1722 = scalar_select %p1721, %s26, 1
        %p1723 = scmp.lt.s32.totalorder %s1720, 15
        %s1724 = scalar_select %p1723, %s1720, 15
        %s1725 = smul.addr %s1724, 2
        %s1726 = smul.addr %s1722, 32
        %s1727 = sadd.s32 %s1725, %s1726
        %s1728 = smul.addr %s1727, 8
        %s1729 = scalar_lea.vmem %s6, %s1728
      $region64: #{double_conv.4} parent=59 // pred_fallthru
        _
      // Predicated region
      $region65: #{double_conv.4} parent=59 // pred_check
        %p1730 = pneg %p251
      $region66: #{double_conv.4} parent=59 // pred_check_branch
        %1732 = sbr.rel (%p1730) target = $region68
      $region67: #{double_conv.4} parent=59 // pred_region
        %s1733 = smul.u32 %s26, 2
        %s1734 = sadd.s32 %s1733, %s27
        %p1735 = scmp.lt.s32.totalorder %s1734, 3
        %s1736 = scalar_select %p1735, %s1734, 3
        %s1737 = scalar_lea.vmem %s7, %s1736
      $region68: #{double_conv.4} parent=59 // pred_fallthru
        _
      // Predicated region
      $region69: #{double_conv.4} parent=59 // pred_check
        %p1738 = pneg %p281
      $region70: #{double_conv.4} parent=59 // pred_check_branch
        %1740 = sbr.rel (%p1738) target = $region72
      $region71: #{double_conv.4} parent=59 // pred_region
        %s1741 = smul.u32 %s26, 2
        %s1742 = sadd.s32 %s1741, %s27
        %p1743 = scmp.lt.s32.totalorder %s1742, 3
        %s1744 = scalar_select %p1743, %s1742, 3
        %s1745 = scalar_lea.vmem %s8, %s1744
      $region72: #{double_conv.4} parent=59 // pred_fallthru
        _
    $region60: #{double_conv.4} parent=5 // pred_fallthru
      _
  $region6: #{double_conv.4} parent=0 // loop_footer
    %s19 = sadd.s32 1, %s15
  $region7: #{double_conv.4} parent=0 // loop_footer_branch
    %14 = sbr.rel target = $region3
  $region8: #{double_conv.4} parent=0 // loop_exit
    _

</llo_original>
